<compile_context>
chip_gen: v7x
topology: tpu7x:2x2x1
jax: 0.10.0
libtpu: 0.0.40
codegen_flags: <defaults>
</compile_context>

<pallas_src>
import functools

import jax
import jax.numpy as jnp
import numpy as np
from jax.experimental import pallas as pl
from jax.experimental.pallas import tpu as pltpu


def _round_up(x, m):
    return ((x + m - 1) // m) * m


# ----------------------------- Pallas kernel ------------------------------- #
def rpn_kernel(x_ref, wconv_ref, bconv_ref, wcat_ref, bcat_ref,
               prob_ref, delta_ref, *, A, L, tap_offsets):
    """One grid step == one batch item (channel-major, spatial flattened).

    x_ref    : (1, Cin, Lp)   bf16  zero-padded feature map, Lp=(H+3)*Wp
    wconv_ref: (9, Cmid, Cin) bf16  3x3 conv weights, one (Cmid,Cin) per tap
    bconv_ref: (Cmid, 1)      f32
    wcat_ref : (Crows, Cmid)  bf16  rows = [reg(4A) | pad | cls-diff(A) | pad]
    bcat_ref : (Crows, 1)     f32
    prob_ref : (1, 2A, L)     f32   rpn_cls_prob   (L = H*Wp, cropped later)
    delta_ref: (1, 4A, L)     f32   rpn_bbox_pred
    """
    x = x_ref[0]                                     # (Cin, Lp) resident tile

    # --- 3x3 conv: 9 accumulated K=Cin matmuls on lane-shifted slices -------
    acc = None
    for t, off in enumerate(tap_offsets):            # static unroll (9 taps)
        xs = x[:, off:off + L]                       # (Cin, L) shifted tap
        part = jnp.dot(wconv_ref[t], xs, preferred_element_type=jnp.float32)
        acc = part if acc is None else acc + part
    mid = jnp.maximum(acc + bconv_ref[...], 0.0)     # bias + ReLU   (Cmid, L)

    # --- fused [reg | cls-logit-diff] 1x1 conv: one (Crows, Cmid) matmul ----
    out = jnp.dot(wcat_ref[...], mid.astype(wcat_ref.dtype),
                  preferred_element_type=jnp.float32) + bcat_ref[...]

    reg_rows = 4 * A
    delta_ref[0] = out[:reg_rows, :]                 # prefix slice, lane-dense

    diff_row0 = _round_up(reg_rows, 8)               # 8-sublane aligned start
    d = out[diff_row0:diff_row0 + A, :]              # cls logit diff   (A, L)

    # paired 2-way softmax == sigmoid(diff); stable form, exact reciprocal
    e = jnp.exp(-jnp.abs(d))                         # EUP exp, argument <= 0
    p_big = 1.0 / (1.0 + e)                          # sigmoid(|d|)
    p0 = jnp.where(d >= 0.0, p_big, 1.0 - p_big)     # P(channel a)
    prob_ref[0, 0:A, :] = p0
    prob_ref[0, A:2 * A, :] = 1.0 - p0               # P(channel a+A)


# ------------------------------- wrapper ------------------------------------ #
def rpn_forward(base_feat_nchw, im_shape, gt_boxes, params):
    """Mirrors RegionProposalNetwork.forward (inference path), NCHW in/out."""
    del im_shape, gt_boxes          # consumed only by the untranslated layers
    wconv, bconv = params["wconv"], params["bconv"]
    wcls, bcls = params["wcls"], params["bcls"]
    wreg, breg = params["wreg"], params["breg"]

    N, Cin, H, W = base_feat_nchw.shape
    Cmid = wconv.shape[0]
    A = wcls.shape[0] // 2          # num_anchors

    # Padded width: at least W+2 (conv halo); round up (<=8 extra cols) if that
    # makes H*Wp a multiple of 128 -> lane-dense, unmasked output stores.
    Wp = W + 2
    for cand in range(W + 2, W + 2 + 9):
        if (H * cand) % 128 == 0:
            Wp = cand
            break
    L = H * Wp                      # per-image flattened output length
    Hp = H + 3                      # 1 top + 2 bottom pad rows: every tap slice
    Lp = Hp * Wp                    # [off, off+L) stays inside the block

    # Zero-pad NCHW and flatten the spatial dims (free reshape, no transpose).
    xp = jnp.pad(base_feat_nchw.astype(jnp.bfloat16),
                 ((0, 0), (0, 0), (1, 2), (1, Wp - W - 1)))
    xflat = xp.reshape(N, Cin, Lp)
    # In the flattened layout, conv tap (dy, dx) is the slice starting at:
    tap_offsets = tuple(dy * Wp + dx for dy in range(3) for dx in range(3))

    # 3x3 conv weights OIHW -> (9, Cmid, Cin), tap-major leading axis.
    wconv_t = jnp.transpose(wconv, (2, 3, 0, 1)).reshape(9, Cmid, Cin)
    wconv_t = wconv_t.astype(jnp.bfloat16)
    bconv_c = bconv.reshape(Cmid, 1).astype(jnp.float32)

    # Fused 1x1 rows: [reg (4A) | pad to 8 | cls logit-diff (A) | pad to 8].
    # The diff rows turn the paired 2-way softmax into a sigmoid of one row.
    reg_rows = 4 * A
    diff_row0 = _round_up(reg_rows, 8)
    crows = _round_up(diff_row0 + A, 8)
    wcat = jnp.zeros((crows, Cmid), jnp.float32)
    wcat = wcat.at[:reg_rows].set(wreg)
    wcat = wcat.at[diff_row0:diff_row0 + A].set(wcls[:A] - wcls[A:])
    wcat = wcat.astype(jnp.bfloat16)
    bcat = jnp.zeros((crows, 1), jnp.float32)
    bcat = bcat.at[:reg_rows, 0].set(breg)
    bcat = bcat.at[diff_row0:diff_row0 + A, 0].set(bcls[:A] - bcls[A:])

    kernel = functools.partial(rpn_kernel, A=A, L=L, tap_offsets=tap_offsets)

    # VMEM budget: double-buffered feature/output blocks + single-buffered
    # weights + in-kernel temporaries, with headroom; never below the 32 MiB
    # scoped default, capped at a v7x-safe 64 MiB.
    need = (2 * Cin * Lp * 2                        # input block x2 (bf16)
            + 2 * 6 * A * L * 4                     # output blocks x2 (f32)
            + (9 * Cmid * Cin + crows * Cmid) * 2   # weights (bf16)
            + (Cmid + crows) * 4                    # biases
            + (Cmid + crows + 4 * A) * L * 4)       # kernel temporaries (f32)
    vmem_limit = int(min(max(4 * need, 32 << 20), 64 << 20))

    # TODO(synk): at production sizes (Cin~512, H*W~2400) add a halo'd H-tile
    # grid axis (marked "parallel") so per-step blocks stay ~4-8 MB and both
    # v7x TensorCores split a single image.
    def run(weight_pm):
        def wspec(shape):
            ndim = len(shape)
            idx = lambda n: (0,) * ndim
            if weight_pm is None:
                return pl.BlockSpec(shape, idx)
            return pl.BlockSpec(shape, idx, pipeline_mode=weight_pm)

        grid_spec = pltpu.PrefetchScalarGridSpec(
            num_scalar_prefetch=0,
            grid=(N,),
            in_specs=[
                pl.BlockSpec((1, Cin, Lp), lambda n: (n, 0, 0)),
                wspec((9, Cmid, Cin)),
                wspec((Cmid, 1)),
                wspec((crows, Cmid)),
                wspec((crows, 1)),
            ],
            out_specs=[
                pl.BlockSpec((1, 2 * A, L), lambda n: (n, 0, 0)),
                pl.BlockSpec((1, 4 * A, L), lambda n: (n, 0, 0)),
            ],
        )
        return pl.pallas_call(
            kernel,
            out_shape=(
                jax.ShapeDtypeStruct((N, 2 * A, L), jnp.float32),
                jax.ShapeDtypeStruct((N, 4 * A, L), jnp.float32),
            ),
            grid_spec=grid_spec,
            compiler_params=pltpu.CompilerParams(
                dimension_semantics=("parallel",),
                vmem_limit_bytes=vmem_limit),
        )(xflat, wconv_t, bconv_c, wcat, bcat)

    # Grid-invariant weights: request single-buffering (index_map is constant);
    # fall back to default double-buffering if pipeline_mode is unsupported.
    buffered = getattr(pl, "Buffered", None)
    try:
        prob_flat, delta_flat = run(buffered(1) if buffered is not None else None)
    except Exception:
        prob_flat, delta_flat = run(None)

    # (N, C, H*Wp) -> NCHW; dropping the Wp-W garbage columns is a cheap slice.
    rpn_cls_prob = prob_flat.reshape(N, 2 * A, H, Wp)[..., :W]
    rpn_bbox_pred = delta_flat.reshape(N, 4 * A, H, Wp)[..., :W]

    # TODO(synk): proposal_layer (anchor decode + clip + NMS) and
    # anchor_target_layer / training losses are undefined external modules;
    # rois are not produced here — the proposal layer's inputs are returned.
    rpn_loss_cls = jnp.float32(0.0)   # inference path: losses are 0
    rpn_loss_reg = jnp.float32(0.0)
    return rpn_cls_prob, rpn_bbox_pred, rpn_loss_cls, rpn_loss_reg


# --------------------------- pure-JAX reference ----------------------------- #
def rpn_reference(x_nchw, wconv, bconv, wcls, bcls, wreg, breg):
    mid = jax.lax.conv_general_dilated(
        x_nchw, wconv, window_strides=(1, 1), padding=((1, 1), (1, 1)),
        dimension_numbers=("NCHW", "OIHW", "NCHW"))
    mid = jnp.maximum(mid + bconv[None, :, None, None], 0.0)
    scores = jnp.einsum("nchw,oc->nohw", mid, wcls) + bcls[None, :, None, None]
    deltas = jnp.einsum("nchw,oc->nohw", mid, wreg) + breg[None, :, None, None]
    N, C, H, W = scores.shape
    sr = scores.reshape(N, 2, (C * H) // 2, W)             # RPN.reshape(x, 2)
    prob = jax.nn.softmax(sr, axis=1).reshape(N, C, H, W)  # softmax(dim=1)
    return prob, deltas


# ---------------------------------- main ------------------------------------ #
if __name__ == "__main__":
    # small shapes consistent with the module's forward
    N, Cin, Cmid, H, W = 2, 16, 32, 16, 16
    A = 3 * 3              # len(anchor_ratios) * len(anchor_scales) = 9
    CLS_OUT, REG_OUT = 2 * A, 4 * A

    # deterministic inputs
    key = jax.random.PRNGKey(0)
    kx, kgt = jax.random.split(key, 2)
    base_feat = jax.random.normal(kx, (N, Cin, H, W), jnp.float32)
    im_shape = jnp.array([[H * 16.0, W * 16.0, 1.0]] * N, jnp.float32)
    gt_boxes = jax.random.uniform(kgt, (N, 5, 5), jnp.float32)

    # deterministic parameters (shapes from __init__; synthetic init)
    pkey = jax.random.PRNGKey(42)
    k1, k2, k3, k4, k5, k6 = jax.random.split(pkey, 6)
    params = {
        "wconv": 0.05 * jax.random.normal(k1, (Cmid, Cin, 3, 3), jnp.float32),
        "bconv": 0.05 * jax.random.normal(k2, (Cmid,), jnp.float32),
        "wcls": 0.05 * jax.random.normal(k3, (CLS_OUT, Cmid), jnp.float32),
        "bcls": 0.05 * jax.random.normal(k4, (CLS_OUT,), jnp.float32),
        "wreg": 0.05 * jax.random.normal(k5, (REG_OUT, Cmid), jnp.float32),
        "breg": 0.05 * jax.random.normal(k6, (REG_OUT,), jnp.float32),
    }

    prob, deltas, loss_cls, loss_reg = jax.block_until_ready(
        rpn_forward(base_feat, im_shape, gt_boxes, params))

    prob_ref, deltas_ref = rpn_reference(
        base_feat, params["wconv"], params["bconv"], params["wcls"],
        params["bcls"], params["wreg"], params["breg"])

    np.testing.assert_allclose(np.asarray(prob), np.asarray(prob_ref),
                               rtol=3e-2, atol=3e-2)
    np.testing.assert_allclose(np.asarray(deltas), np.asarray(deltas_ref),
                               rtol=3e-2, atol=3e-2)
    assert prob.shape == (N, CLS_OUT, H, W)
    assert deltas.shape == (N, REG_OUT, H, W)
    print("KERNEL_OK")
</pallas_src>

<mosaic_0001>
module attributes {stable_mosaic.version = 11 : i64} {
  func.func @rpn_kernel(%arg0: i32, %arg1: memref<1x16x456xbf16, #tpu.memory_space<vmem>>, %arg2: memref<9x32x16xbf16, #tpu.memory_space<vmem>>, %arg3: memref<32x1xf32, #tpu.memory_space<vmem>>, %arg4: memref<56x32xbf16, #tpu.memory_space<vmem>>, %arg5: memref<56x1xf32, #tpu.memory_space<vmem>>, %arg6: memref<1x18x384xf32, #tpu.memory_space<vmem>>, %arg7: memref<1x36x384xf32, #tpu.memory_space<vmem>>) attributes {dimension_semantics = [#tpu.dimension_semantics<parallel>], iteration_bounds = array<i64: 2>, scalar_prefetch = 0 : i64, scratch_operands = 0 : i64, tpu.core_type = #tpu.core_type<tc>, window_params = [{transform_indices = @transform_0, window_bounds = array<i64: 1, 16, 456>}, {pipeline_mode = #tpu.pipeline_mode<synchronous>, transform_indices = @transform_1, window_bounds = array<i64: 9, 32, 16>}, {pipeline_mode = #tpu.pipeline_mode<synchronous>, transform_indices = @transform_2, window_bounds = array<i64: 32, 1>}, {pipeline_mode = #tpu.pipeline_mode<synchronous>, transform_indices = @transform_3, window_bounds = array<i64: 56, 32>}, {pipeline_mode = #tpu.pipeline_mode<synchronous>, transform_indices = @transform_4, window_bounds = array<i64: 56, 1>}, {transform_indices = @transform_5, window_bounds = array<i64: 1, 18, 384>}, {transform_indices = @transform_6, window_bounds = array<i64: 1, 36, 384>}]} {
    %c0 = arith.constant 0 : index
    %c0_0 = arith.constant 0 : index
    %c0_1 = arith.constant 0 : index
    %0 = vector.load %arg1[%c0, %c0_0, %c0_1] : memref<1x16x456xbf16, #tpu.memory_space<vmem>>, vector<1x16x456xbf16>
    %1 = vector.shape_cast %0 : vector<1x16x456xbf16> to vector<16x456xbf16>
    %2 = vector.extract_strided_slice %1 {offsets = [0, 0], sizes = [16, 384], strides = [1, 1]} : vector<16x456xbf16> to vector<16x384xbf16>
    %c0_2 = arith.constant 0 : index
    %c0_3 = arith.constant 0 : index
    %c0_4 = arith.constant 0 : index
    %3 = vector.load %arg2[%c0_2, %c0_3, %c0_4] : memref<9x32x16xbf16, #tpu.memory_space<vmem>>, vector<1x32x16xbf16>
    %4 = vector.shape_cast %3 : vector<1x32x16xbf16> to vector<32x16xbf16>
    %cst = arith.constant dense<0.000000e+00> : vector<32x384xf32>
    %5 = tpu.matmul %4, %2, %cst {dimension_numbers = #tpu.dot_dimension_numbers<[1], [0], [0], [1], [0, 0, 1, 1], [], []>} : vector<32x16xbf16>, vector<16x384xbf16>, vector<32x384xf32> -> vector<32x384xf32>
    %6 = vector.extract_strided_slice %1 {offsets = [0, 1], sizes = [16, 384], strides = [1, 1]} : vector<16x456xbf16> to vector<16x384xbf16>
    %c1 = arith.constant 1 : index
    %c0_5 = arith.constant 0 : index
    %c0_6 = arith.constant 0 : index
    %7 = vector.load %arg2[%c1, %c0_5, %c0_6] : memref<9x32x16xbf16, #tpu.memory_space<vmem>>, vector<1x32x16xbf16>
    %8 = vector.shape_cast %7 : vector<1x32x16xbf16> to vector<32x16xbf16>
    %cst_7 = arith.constant dense<0.000000e+00> : vector<32x384xf32>
    %9 = tpu.matmul %8, %6, %cst_7 {dimension_numbers = #tpu.dot_dimension_numbers<[1], [0], [0], [1], [0, 0, 1, 1], [], []>} : vector<32x16xbf16>, vector<16x384xbf16>, vector<32x384xf32> -> vector<32x384xf32>
    %10 = arith.addf %5, %9 : vector<32x384xf32>
    %11 = vector.extract_strided_slice %1 {offsets = [0, 2], sizes = [16, 384], strides = [1, 1]} : vector<16x456xbf16> to vector<16x384xbf16>
    %c2 = arith.constant 2 : index
    %c0_8 = arith.constant 0 : index
    %c0_9 = arith.constant 0 : index
    %12 = vector.load %arg2[%c2, %c0_8, %c0_9] : memref<9x32x16xbf16, #tpu.memory_space<vmem>>, vector<1x32x16xbf16>
    %13 = vector.shape_cast %12 : vector<1x32x16xbf16> to vector<32x16xbf16>
    %cst_10 = arith.constant dense<0.000000e+00> : vector<32x384xf32>
    %14 = tpu.matmul %13, %11, %cst_10 {dimension_numbers = #tpu.dot_dimension_numbers<[1], [0], [0], [1], [0, 0, 1, 1], [], []>} : vector<32x16xbf16>, vector<16x384xbf16>, vector<32x384xf32> -> vector<32x384xf32>
    %15 = arith.addf %10, %14 : vector<32x384xf32>
    %16 = vector.extract_strided_slice %1 {offsets = [0, 24], sizes = [16, 384], strides = [1, 1]} : vector<16x456xbf16> to vector<16x384xbf16>
    %c3 = arith.constant 3 : index
    %c0_11 = arith.constant 0 : index
    %c0_12 = arith.constant 0 : index
    %17 = vector.load %arg2[%c3, %c0_11, %c0_12] : memref<9x32x16xbf16, #tpu.memory_space<vmem>>, vector<1x32x16xbf16>
    %18 = vector.shape_cast %17 : vector<1x32x16xbf16> to vector<32x16xbf16>
    %cst_13 = arith.constant dense<0.000000e+00> : vector<32x384xf32>
    %19 = tpu.matmul %18, %16, %cst_13 {dimension_numbers = #tpu.dot_dimension_numbers<[1], [0], [0], [1], [0, 0, 1, 1], [], []>} : vector<32x16xbf16>, vector<16x384xbf16>, vector<32x384xf32> -> vector<32x384xf32>
    %20 = arith.addf %15, %19 : vector<32x384xf32>
    %21 = vector.extract_strided_slice %1 {offsets = [0, 25], sizes = [16, 384], strides = [1, 1]} : vector<16x456xbf16> to vector<16x384xbf16>
    %c4 = arith.constant 4 : index
    %c0_14 = arith.constant 0 : index
    %c0_15 = arith.constant 0 : index
    %22 = vector.load %arg2[%c4, %c0_14, %c0_15] : memref<9x32x16xbf16, #tpu.memory_space<vmem>>, vector<1x32x16xbf16>
    %23 = vector.shape_cast %22 : vector<1x32x16xbf16> to vector<32x16xbf16>
    %cst_16 = arith.constant dense<0.000000e+00> : vector<32x384xf32>
    %24 = tpu.matmul %23, %21, %cst_16 {dimension_numbers = #tpu.dot_dimension_numbers<[1], [0], [0], [1], [0, 0, 1, 1], [], []>} : vector<32x16xbf16>, vector<16x384xbf16>, vector<32x384xf32> -> vector<32x384xf32>
    %25 = arith.addf %20, %24 : vector<32x384xf32>
    %26 = vector.extract_strided_slice %1 {offsets = [0, 26], sizes = [16, 384], strides = [1, 1]} : vector<16x456xbf16> to vector<16x384xbf16>
    %c5 = arith.constant 5 : index
    %c0_17 = arith.constant 0 : index
    %c0_18 = arith.constant 0 : index
    %27 = vector.load %arg2[%c5, %c0_17, %c0_18] : memref<9x32x16xbf16, #tpu.memory_space<vmem>>, vector<1x32x16xbf16>
    %28 = vector.shape_cast %27 : vector<1x32x16xbf16> to vector<32x16xbf16>
    %cst_19 = arith.constant dense<0.000000e+00> : vector<32x384xf32>
    %29 = tpu.matmul %28, %26, %cst_19 {dimension_numbers = #tpu.dot_dimension_numbers<[1], [0], [0], [1], [0, 0, 1, 1], [], []>} : vector<32x16xbf16>, vector<16x384xbf16>, vector<32x384xf32> -> vector<32x384xf32>
    %30 = arith.addf %25, %29 : vector<32x384xf32>
    %31 = vector.extract_strided_slice %1 {offsets = [0, 48], sizes = [16, 384], strides = [1, 1]} : vector<16x456xbf16> to vector<16x384xbf16>
    %c6 = arith.constant 6 : index
    %c0_20 = arith.constant 0 : index
    %c0_21 = arith.constant 0 : index
    %32 = vector.load %arg2[%c6, %c0_20, %c0_21] : memref<9x32x16xbf16, #tpu.memory_space<vmem>>, vector<1x32x16xbf16>
    %33 = vector.shape_cast %32 : vector<1x32x16xbf16> to vector<32x16xbf16>
    %cst_22 = arith.constant dense<0.000000e+00> : vector<32x384xf32>
    %34 = tpu.matmul %33, %31, %cst_22 {dimension_numbers = #tpu.dot_dimension_numbers<[1], [0], [0], [1], [0, 0, 1, 1], [], []>} : vector<32x16xbf16>, vector<16x384xbf16>, vector<32x384xf32> -> vector<32x384xf32>
    %35 = arith.addf %30, %34 : vector<32x384xf32>
    %36 = vector.extract_strided_slice %1 {offsets = [0, 49], sizes = [16, 384], strides = [1, 1]} : vector<16x456xbf16> to vector<16x384xbf16>
    %c7 = arith.constant 7 : index
    %c0_23 = arith.constant 0 : index
    %c0_24 = arith.constant 0 : index
    %37 = vector.load %arg2[%c7, %c0_23, %c0_24] : memref<9x32x16xbf16, #tpu.memory_space<vmem>>, vector<1x32x16xbf16>
    %38 = vector.shape_cast %37 : vector<1x32x16xbf16> to vector<32x16xbf16>
    %cst_25 = arith.constant dense<0.000000e+00> : vector<32x384xf32>
    %39 = tpu.matmul %38, %36, %cst_25 {dimension_numbers = #tpu.dot_dimension_numbers<[1], [0], [0], [1], [0, 0, 1, 1], [], []>} : vector<32x16xbf16>, vector<16x384xbf16>, vector<32x384xf32> -> vector<32x384xf32>
    %40 = arith.addf %35, %39 : vector<32x384xf32>
    %41 = vector.extract_strided_slice %1 {offsets = [0, 50], sizes = [16, 384], strides = [1, 1]} : vector<16x456xbf16> to vector<16x384xbf16>
    %c8 = arith.constant 8 : index
    %c0_26 = arith.constant 0 : index
    %c0_27 = arith.constant 0 : index
    %42 = vector.load %arg2[%c8, %c0_26, %c0_27] : memref<9x32x16xbf16, #tpu.memory_space<vmem>>, vector<1x32x16xbf16>
    %43 = vector.shape_cast %42 : vector<1x32x16xbf16> to vector<32x16xbf16>
    %cst_28 = arith.constant dense<0.000000e+00> : vector<32x384xf32>
    %44 = tpu.matmul %43, %41, %cst_28 {dimension_numbers = #tpu.dot_dimension_numbers<[1], [0], [0], [1], [0, 0, 1, 1], [], []>} : vector<32x16xbf16>, vector<16x384xbf16>, vector<32x384xf32> -> vector<32x384xf32>
    %45 = arith.addf %40, %44 : vector<32x384xf32>
    %c0_29 = arith.constant 0 : index
    %c0_30 = arith.constant 0 : index
    %46 = vector.load %arg3[%c0_29, %c0_30] : memref<32x1xf32, #tpu.memory_space<vmem>>, vector<32x1xf32>
    %47 = vector.broadcast %46 : vector<32x1xf32> to vector<32x384xf32>
    %48 = arith.addf %45, %47 : vector<32x384xf32>
    %cst_31 = arith.constant 0.000000e+00 : f32
    %49 = vector.broadcast %cst_31 : f32 to vector<32x384xf32>
    %50 = arith.maximumf %48, %49 : vector<32x384xf32>
    %c0_32 = arith.constant 0 : index
    %c0_33 = arith.constant 0 : index
    %51 = vector.load %arg4[%c0_32, %c0_33] : memref<56x32xbf16, #tpu.memory_space<vmem>>, vector<56x32xbf16>
    %52 = arith.truncf %50 : vector<32x384xf32> to vector<32x384xbf16>
    %cst_34 = arith.constant dense<0.000000e+00> : vector<56x384xf32>
    %53 = tpu.matmul %51, %52, %cst_34 {dimension_numbers = #tpu.dot_dimension_numbers<[1], [0], [0], [1], [0, 0, 1, 1], [], []>} : vector<56x32xbf16>, vector<32x384xbf16>, vector<56x384xf32> -> vector<56x384xf32>
    %c0_35 = arith.constant 0 : index
    %c0_36 = arith.constant 0 : index
    %54 = vector.load %arg5[%c0_35, %c0_36] : memref<56x1xf32, #tpu.memory_space<vmem>>, vector<56x1xf32>
    %55 = vector.broadcast %54 : vector<56x1xf32> to vector<56x384xf32>
    %56 = arith.addf %53, %55 : vector<56x384xf32>
    %57 = vector.extract_strided_slice %56 {offsets = [0, 0], sizes = [36, 384], strides = [1, 1]} : vector<56x384xf32> to vector<36x384xf32>
    %c0_37 = arith.constant 0 : index
    %c0_38 = arith.constant 0 : index
    %c0_39 = arith.constant 0 : index
    %58 = vector.load %arg7[%c0_37, %c0_38, %c0_39] : memref<1x36x384xf32, #tpu.memory_space<vmem>>, vector<1x36x384xf32>
    %59 = vector.shape_cast %58 : vector<1x36x384xf32> to vector<36x384xf32>
    %60 = vector.shape_cast %57 : vector<36x384xf32> to vector<1x36x384xf32>
    tpu.vector_store %arg7[%c0_37, %c0_38, %c0_39], %60 {strides = array<i32>} : memref<1x36x384xf32, #tpu.memory_space<vmem>>, vector<1x36x384xf32>,
    %61 = vector.extract_strided_slice %56 {offsets = [40, 0], sizes = [9, 384], strides = [1, 1]} : vector<56x384xf32> to vector<9x384xf32>
    %62 = math.absf %61 : vector<9x384xf32>
    %cst_40 = arith.constant 0.000000e+00 : f32
    %63 = vector.broadcast %cst_40 : f32 to vector<9x384xf32>
    %64 = arith.subf %63, %62 : vector<9x384xf32>
    %65 = math.exp %64 : vector<9x384xf32>
    %cst_41 = arith.constant 1.000000e+00 : f32
    %66 = vector.broadcast %cst_41 : f32 to vector<9x384xf32>
    %67 = arith.addf %66, %65 : vector<9x384xf32>
    %cst_42 = arith.constant 1.000000e+00 : f32
    %68 = vector.broadcast %cst_42 : f32 to vector<9x384xf32>
    %69 = arith.divf %68, %67 : vector<9x384xf32>
    %cst_43 = arith.constant 0.000000e+00 : f32
    %70 = vector.broadcast %cst_43 : f32 to vector<9x384xf32>
    %71 = arith.cmpf oge, %61, %70 : vector<9x384xf32>
    %cst_44 = arith.constant 1.000000e+00 : f32
    %72 = vector.broadcast %cst_44 : f32 to vector<9x384xf32>
    %73 = arith.subf %72, %69 : vector<9x384xf32>
    %74 = arith.select %71, %69, %73 : vector<9x384xi1>, vector<9x384xf32>
    %c0_45 = arith.constant 0 : index
    %c0_46 = arith.constant 0 : index
    %c0_47 = arith.constant 0 : index
    %75 = vector.load %arg6[%c0_45, %c0_46, %c0_47] : memref<1x18x384xf32, #tpu.memory_space<vmem>>, vector<1x9x384xf32>
    %76 = vector.shape_cast %75 : vector<1x9x384xf32> to vector<9x384xf32>
    %77 = vector.shape_cast %74 : vector<9x384xf32> to vector<1x9x384xf32>
    tpu.vector_store %arg6[%c0_45, %c0_46, %c0_47], %77 {strides = array<i32>} : memref<1x18x384xf32, #tpu.memory_space<vmem>>, vector<1x9x384xf32>,
    %cst_48 = arith.constant 1.000000e+00 : f32
    %78 = vector.broadcast %cst_48 : f32 to vector<9x384xf32>
    %79 = arith.subf %78, %74 : vector<9x384xf32>
    %c0_49 = arith.constant 0 : index
    %c9 = arith.constant 9 : index
    %c0_50 = arith.constant 0 : index
    %80 = vector.load %arg6[%c0_49, %c9, %c0_50] : memref<1x18x384xf32, #tpu.memory_space<vmem>>, vector<1x9x384xf32>
    %81 = vector.shape_cast %80 : vector<1x9x384xf32> to vector<9x384xf32>
    %82 = vector.shape_cast %79 : vector<9x384xf32> to vector<1x9x384xf32>
    tpu.vector_store %arg6[%c0_49, %c9, %c0_50], %82 {strides = array<i32>} : memref<1x18x384xf32, #tpu.memory_space<vmem>>, vector<1x9x384xf32>,
    return
  }
  func.func @transform_0(%arg0: i32) -> (i32, i32, i32) {
    %c0_i32 = arith.constant 0 : i32
    %c0_i32_0 = arith.constant 0 : i32
    %c0_i32_1 = arith.constant 0 : i32
    return %arg0, %c0_i32, %c0_i32_0 : i32, i32, i32
  }
  func.func @transform_1(%arg0: i32) -> (i32, i32, i32) {
    %c0_i32 = arith.constant 0 : i32
    %c0_i32_0 = arith.constant 0 : i32
    %c0_i32_1 = arith.constant 0 : i32
    %c0_i32_2 = arith.constant 0 : i32
    return %c0_i32, %c0_i32_0, %c0_i32_1 : i32, i32, i32
  }
  func.func @transform_2(%arg0: i32) -> (i32, i32) {
    %c0_i32 = arith.constant 0 : i32
    %c0_i32_0 = arith.constant 0 : i32
    %c0_i32_1 = arith.constant 0 : i32
    return %c0_i32, %c0_i32_0 : i32, i32
  }
  func.func @transform_3(%arg0: i32) -> (i32, i32) {
    %c0_i32 = arith.constant 0 : i32
    %c0_i32_0 = arith.constant 0 : i32
    %c0_i32_1 = arith.constant 0 : i32
    return %c0_i32, %c0_i32_0 : i32, i32
  }
  func.func @transform_4(%arg0: i32) -> (i32, i32) {
    %c0_i32 = arith.constant 0 : i32
    %c0_i32_0 = arith.constant 0 : i32
    %c0_i32_1 = arith.constant 0 : i32
    return %c0_i32, %c0_i32_0 : i32, i32
  }
  func.func @transform_5(%arg0: i32) -> (i32, i32, i32) {
    %c0_i32 = arith.constant 0 : i32
    %c0_i32_0 = arith.constant 0 : i32
    %c0_i32_1 = arith.constant 0 : i32
    return %arg0, %c0_i32, %c0_i32_0 : i32, i32, i32
  }
  func.func @transform_6(%arg0: i32) -> (i32, i32, i32) {
    %c0_i32 = arith.constant 0 : i32
    %c0_i32_0 = arith.constant 0 : i32
    %c0_i32_1 = arith.constant 0 : i32
    return %arg0, %c0_i32, %c0_i32_0 : i32, i32, i32
  }
}

module attributes {stable_mosaic.version = 11 : i64} {
  func.func @rpn_kernel(%arg0: i32, %arg1: memref<1x16x456xbf16, #tpu.memory_space<vmem>>, %arg2: memref<9x32x16xbf16, #tpu.memory_space<vmem>>, %arg3: memref<32x1xf32, #tpu.memory_space<vmem>>, %arg4: memref<56x32xbf16, #tpu.memory_space<vmem>>, %arg5: memref<56x1xf32, #tpu.memory_space<vmem>>, %arg6: memref<1x18x384xf32, #tpu.memory_space<vmem>>, %arg7: memref<1x36x384xf32, #tpu.memory_space<vmem>>) attributes {dimension_semantics = [#tpu.dimension_semantics<parallel>], iteration_bounds = array<i64: 2>, scalar_prefetch = 0 : i64, scratch_operands = 0 : i64, tpu.core_type = #tpu.core_type<tc>, window_params = [{transform_indices = @transform_0, window_bounds = array<i64: 1, 16, 456>}, {pipeline_mode = #tpu.pipeline_mode<synchronous>, transform_indices = @transform_1, window_bounds = array<i64: 9, 32, 16>}, {pipeline_mode = #tpu.pipeline_mode<synchronous>, transform_indices = @transform_2, window_bounds = array<i64: 32, 1>}, {pipeline_mode = #tpu.pipeline_mode<synchronous>, transform_indices = @transform_3, window_bounds = array<i64: 56, 32>}, {pipeline_mode = #tpu.pipeline_mode<synchronous>, transform_indices = @transform_4, window_bounds = array<i64: 56, 1>}, {transform_indices = @transform_5, window_bounds = array<i64: 1, 18, 384>}, {transform_indices = @transform_6, window_bounds = array<i64: 1, 36, 384>}]} {
    %c0 = arith.constant 0 : index
    %c0_0 = arith.constant 0 : index
    %c0_1 = arith.constant 0 : index
    %0 = vector.load %arg1[%c0, %c0_0, %c0_1] : memref<1x16x456xbf16, #tpu.memory_space<vmem>>, vector<1x16x456xbf16>
    %1 = vector.shape_cast %0 : vector<1x16x456xbf16> to vector<16x456xbf16>
    %2 = vector.extract_strided_slice %1 {offsets = [0, 0], sizes = [16, 384], strides = [1, 1]} : vector<16x456xbf16> to vector<16x384xbf16>
    %c0_2 = arith.constant 0 : index
    %c0_3 = arith.constant 0 : index
    %c0_4 = arith.constant 0 : index
    %3 = vector.load %arg2[%c0_2, %c0_3, %c0_4] : memref<9x32x16xbf16, #tpu.memory_space<vmem>>, vector<1x32x16xbf16>
    %4 = vector.shape_cast %3 : vector<1x32x16xbf16> to vector<32x16xbf16>
    %cst = arith.constant dense<0.000000e+00> : vector<32x384xf32>
    %5 = tpu.matmul %4, %2, %cst {dimension_numbers = #tpu.dot_dimension_numbers<[1], [0], [0], [1], [0, 0, 1, 1], [], []>} : vector<32x16xbf16>, vector<16x384xbf16>, vector<32x384xf32> -> vector<32x384xf32>
    %6 = vector.extract_strided_slice %1 {offsets = [0, 1], sizes = [16, 384], strides = [1, 1]} : vector<16x456xbf16> to vector<16x384xbf16>
    %c1 = arith.constant 1 : index
    %c0_5 = arith.constant 0 : index
    %c0_6 = arith.constant 0 : index
    %7 = vector.load %arg2[%c1, %c0_5, %c0_6] : memref<9x32x16xbf16, #tpu.memory_space<vmem>>, vector<1x32x16xbf16>
    %8 = vector.shape_cast %7 : vector<1x32x16xbf16> to vector<32x16xbf16>
    %cst_7 = arith.constant dense<0.000000e+00> : vector<32x384xf32>
    %9 = tpu.matmul %8, %6, %cst_7 {dimension_numbers = #tpu.dot_dimension_numbers<[1], [0], [0], [1], [0, 0, 1, 1], [], []>} : vector<32x16xbf16>, vector<16x384xbf16>, vector<32x384xf32> -> vector<32x384xf32>
    %10 = arith.addf %5, %9 : vector<32x384xf32>
    %11 = vector.extract_strided_slice %1 {offsets = [0, 2], sizes = [16, 384], strides = [1, 1]} : vector<16x456xbf16> to vector<16x384xbf16>
    %c2 = arith.constant 2 : index
    %c0_8 = arith.constant 0 : index
    %c0_9 = arith.constant 0 : index
    %12 = vector.load %arg2[%c2, %c0_8, %c0_9] : memref<9x32x16xbf16, #tpu.memory_space<vmem>>, vector<1x32x16xbf16>
    %13 = vector.shape_cast %12 : vector<1x32x16xbf16> to vector<32x16xbf16>
    %cst_10 = arith.constant dense<0.000000e+00> : vector<32x384xf32>
    %14 = tpu.matmul %13, %11, %cst_10 {dimension_numbers = #tpu.dot_dimension_numbers<[1], [0], [0], [1], [0, 0, 1, 1], [], []>} : vector<32x16xbf16>, vector<16x384xbf16>, vector<32x384xf32> -> vector<32x384xf32>
    %15 = arith.addf %10, %14 : vector<32x384xf32>
    %16 = vector.extract_strided_slice %1 {offsets = [0, 24], sizes = [16, 384], strides = [1, 1]} : vector<16x456xbf16> to vector<16x384xbf16>
    %c3 = arith.constant 3 : index
    %c0_11 = arith.constant 0 : index
    %c0_12 = arith.constant 0 : index
    %17 = vector.load %arg2[%c3, %c0_11, %c0_12] : memref<9x32x16xbf16, #tpu.memory_space<vmem>>, vector<1x32x16xbf16>
    %18 = vector.shape_cast %17 : vector<1x32x16xbf16> to vector<32x16xbf16>
    %cst_13 = arith.constant dense<0.000000e+00> : vector<32x384xf32>
    %19 = tpu.matmul %18, %16, %cst_13 {dimension_numbers = #tpu.dot_dimension_numbers<[1], [0], [0], [1], [0, 0, 1, 1], [], []>} : vector<32x16xbf16>, vector<16x384xbf16>, vector<32x384xf32> -> vector<32x384xf32>
    %20 = arith.addf %15, %19 : vector<32x384xf32>
    %21 = vector.extract_strided_slice %1 {offsets = [0, 25], sizes = [16, 384], strides = [1, 1]} : vector<16x456xbf16> to vector<16x384xbf16>
    %c4 = arith.constant 4 : index
    %c0_14 = arith.constant 0 : index
    %c0_15 = arith.constant 0 : index
    %22 = vector.load %arg2[%c4, %c0_14, %c0_15] : memref<9x32x16xbf16, #tpu.memory_space<vmem>>, vector<1x32x16xbf16>
    %23 = vector.shape_cast %22 : vector<1x32x16xbf16> to vector<32x16xbf16>
    %cst_16 = arith.constant dense<0.000000e+00> : vector<32x384xf32>
    %24 = tpu.matmul %23, %21, %cst_16 {dimension_numbers = #tpu.dot_dimension_numbers<[1], [0], [0], [1], [0, 0, 1, 1], [], []>} : vector<32x16xbf16>, vector<16x384xbf16>, vector<32x384xf32> -> vector<32x384xf32>
    %25 = arith.addf %20, %24 : vector<32x384xf32>
    %26 = vector.extract_strided_slice %1 {offsets = [0, 26], sizes = [16, 384], strides = [1, 1]} : vector<16x456xbf16> to vector<16x384xbf16>
    %c5 = arith.constant 5 : index
    %c0_17 = arith.constant 0 : index
    %c0_18 = arith.constant 0 : index
    %27 = vector.load %arg2[%c5, %c0_17, %c0_18] : memref<9x32x16xbf16, #tpu.memory_space<vmem>>, vector<1x32x16xbf16>
    %28 = vector.shape_cast %27 : vector<1x32x16xbf16> to vector<32x16xbf16>
    %cst_19 = arith.constant dense<0.000000e+00> : vector<32x384xf32>
    %29 = tpu.matmul %28, %26, %cst_19 {dimension_numbers = #tpu.dot_dimension_numbers<[1], [0], [0], [1], [0, 0, 1, 1], [], []>} : vector<32x16xbf16>, vector<16x384xbf16>, vector<32x384xf32> -> vector<32x384xf32>
    %30 = arith.addf %25, %29 : vector<32x384xf32>
    %31 = vector.extract_strided_slice %1 {offsets = [0, 48], sizes = [16, 384], strides = [1, 1]} : vector<16x456xbf16> to vector<16x384xbf16>
    %c6 = arith.constant 6 : index
    %c0_20 = arith.constant 0 : index
    %c0_21 = arith.constant 0 : index
    %32 = vector.load %arg2[%c6, %c0_20, %c0_21] : memref<9x32x16xbf16, #tpu.memory_space<vmem>>, vector<1x32x16xbf16>
    %33 = vector.shape_cast %32 : vector<1x32x16xbf16> to vector<32x16xbf16>
    %cst_22 = arith.constant dense<0.000000e+00> : vector<32x384xf32>
    %34 = tpu.matmul %33, %31, %cst_22 {dimension_numbers = #tpu.dot_dimension_numbers<[1], [0], [0], [1], [0, 0, 1, 1], [], []>} : vector<32x16xbf16>, vector<16x384xbf16>, vector<32x384xf32> -> vector<32x384xf32>
    %35 = arith.addf %30, %34 : vector<32x384xf32>
    %36 = vector.extract_strided_slice %1 {offsets = [0, 49], sizes = [16, 384], strides = [1, 1]} : vector<16x456xbf16> to vector<16x384xbf16>
    %c7 = arith.constant 7 : index
    %c0_23 = arith.constant 0 : index
    %c0_24 = arith.constant 0 : index
    %37 = vector.load %arg2[%c7, %c0_23, %c0_24] : memref<9x32x16xbf16, #tpu.memory_space<vmem>>, vector<1x32x16xbf16>
    %38 = vector.shape_cast %37 : vector<1x32x16xbf16> to vector<32x16xbf16>
    %cst_25 = arith.constant dense<0.000000e+00> : vector<32x384xf32>
    %39 = tpu.matmul %38, %36, %cst_25 {dimension_numbers = #tpu.dot_dimension_numbers<[1], [0], [0], [1], [0, 0, 1, 1], [], []>} : vector<32x16xbf16>, vector<16x384xbf16>, vector<32x384xf32> -> vector<32x384xf32>
    %40 = arith.addf %35, %39 : vector<32x384xf32>
    %41 = vector.extract_strided_slice %1 {offsets = [0, 50], sizes = [16, 384], strides = [1, 1]} : vector<16x456xbf16> to vector<16x384xbf16>
    %c8 = arith.constant 8 : index
    %c0_26 = arith.constant 0 : index
    %c0_27 = arith.constant 0 : index
    %42 = vector.load %arg2[%c8, %c0_26, %c0_27] : memref<9x32x16xbf16, #tpu.memory_space<vmem>>, vector<1x32x16xbf16>
    %43 = vector.shape_cast %42 : vector<1x32x16xbf16> to vector<32x16xbf16>
    %cst_28 = arith.constant dense<0.000000e+00> : vector<32x384xf32>
    %44 = tpu.matmul %43, %41, %cst_28 {dimension_numbers = #tpu.dot_dimension_numbers<[1], [0], [0], [1], [0, 0, 1, 1], [], []>} : vector<32x16xbf16>, vector<16x384xbf16>, vector<32x384xf32> -> vector<32x384xf32>
    %45 = arith.addf %40, %44 : vector<32x384xf32>
    %c0_29 = arith.constant 0 : index
    %c0_30 = arith.constant 0 : index
    %46 = vector.load %arg3[%c0_29, %c0_30] : memref<32x1xf32, #tpu.memory_space<vmem>>, vector<32x1xf32>
    %47 = vector.broadcast %46 : vector<32x1xf32> to vector<32x384xf32>
    %48 = arith.addf %45, %47 : vector<32x384xf32>
    %cst_31 = arith.constant 0.000000e+00 : f32
    %49 = vector.broadcast %cst_31 : f32 to vector<32x384xf32>
    %50 = arith.maximumf %48, %49 : vector<32x384xf32>
    %c0_32 = arith.constant 0 : index
    %c0_33 = arith.constant 0 : index
    %51 = vector.load %arg4[%c0_32, %c0_33] : memref<56x32xbf16, #tpu.memory_space<vmem>>, vector<56x32xbf16>
    %52 = arith.truncf %50 : vector<32x384xf32> to vector<32x384xbf16>
    %cst_34 = arith.constant dense<0.000000e+00> : vector<56x384xf32>
    %53 = tpu.matmul %51, %52, %cst_34 {dimension_numbers = #tpu.dot_dimension_numbers<[1], [0], [0], [1], [0, 0, 1, 1], [], []>} : vector<56x32xbf16>, vector<32x384xbf16>, vector<56x384xf32> -> vector<56x384xf32>
    %c0_35 = arith.constant 0 : index
    %c0_36 = arith.constant 0 : index
    %54 = vector.load %arg5[%c0_35, %c0_36] : memref<56x1xf32, #tpu.memory_space<vmem>>, vector<56x1xf32>
    %55 = vector.broadcast %54 : vector<56x1xf32> to vector<56x384xf32>
    %56 = arith.addf %53, %55 : vector<56x384xf32>
    %57 = vector.extract_strided_slice %56 {offsets = [0, 0], sizes = [36, 384], strides = [1, 1]} : vector<56x384xf32> to vector<36x384xf32>
    %c0_37 = arith.constant 0 : index
    %c0_38 = arith.constant 0 : index
    %c0_39 = arith.constant 0 : index
    %58 = vector.load %arg7[%c0_37, %c0_38, %c0_39] : memref<1x36x384xf32, #tpu.memory_space<vmem>>, vector<1x36x384xf32>
    %59 = vector.shape_cast %58 : vector<1x36x384xf32> to vector<36x384xf32>
    %60 = vector.shape_cast %57 : vector<36x384xf32> to vector<1x36x384xf32>
    tpu.vector_store %arg7[%c0_37, %c0_38, %c0_39], %60 {strides = array<i32>} : memref<1x36x384xf32, #tpu.memory_space<vmem>>, vector<1x36x384xf32>,
    %61 = vector.extract_strided_slice %56 {offsets = [40, 0], sizes = [9, 384], strides = [1, 1]} : vector<56x384xf32> to vector<9x384xf32>
    %62 = math.absf %61 : vector<9x384xf32>
    %cst_40 = arith.constant 0.000000e+00 : f32
    %63 = vector.broadcast %cst_40 : f32 to vector<9x384xf32>
    %64 = arith.subf %63, %62 : vector<9x384xf32>
    %65 = math.exp %64 : vector<9x384xf32>
    %cst_41 = arith.constant 1.000000e+00 : f32
    %66 = vector.broadcast %cst_41 : f32 to vector<9x384xf32>
    %67 = arith.addf %66, %65 : vector<9x384xf32>
    %cst_42 = arith.constant 1.000000e+00 : f32
    %68 = vector.broadcast %cst_42 : f32 to vector<9x384xf32>
    %69 = arith.divf %68, %67 : vector<9x384xf32>
    %cst_43 = arith.constant 0.000000e+00 : f32
    %70 = vector.broadcast %cst_43 : f32 to vector<9x384xf32>
    %71 = arith.cmpf oge, %61, %70 : vector<9x384xf32>
    %cst_44 = arith.constant 1.000000e+00 : f32
    %72 = vector.broadcast %cst_44 : f32 to vector<9x384xf32>
    %73 = arith.subf %72, %69 : vector<9x384xf32>
    %74 = arith.select %71, %69, %73 : vector<9x384xi1>, vector<9x384xf32>
    %c0_45 = arith.constant 0 : index
    %c0_46 = arith.constant 0 : index
    %c0_47 = arith.constant 0 : index
    %75 = vector.load %arg6[%c0_45, %c0_46, %c0_47] : memref<1x18x384xf32, #tpu.memory_space<vmem>>, vector<1x9x384xf32>
    %76 = vector.shape_cast %75 : vector<1x9x384xf32> to vector<9x384xf32>
    %77 = vector.shape_cast %74 : vector<9x384xf32> to vector<1x9x384xf32>
    tpu.vector_store %arg6[%c0_45, %c0_46, %c0_47], %77 {strides = array<i32>} : memref<1x18x384xf32, #tpu.memory_space<vmem>>, vector<1x9x384xf32>,
    %cst_48 = arith.constant 1.000000e+00 : f32
    %78 = vector.broadcast %cst_48 : f32 to vector<9x384xf32>
    %79 = arith.subf %78, %74 : vector<9x384xf32>
    %c0_49 = arith.constant 0 : index
    %c9 = arith.constant 9 : index
    %c0_50 = arith.constant 0 : index
    %80 = vector.load %arg6[%c0_49, %c9, %c0_50] : memref<1x18x384xf32, #tpu.memory_space<vmem>>, vector<1x9x384xf32>
    %81 = vector.shape_cast %80 : vector<1x9x384xf32> to vector<9x384xf32>
    %82 = vector.shape_cast %79 : vector<9x384xf32> to vector<1x9x384xf32>
    tpu.vector_store %arg6[%c0_49, %c9, %c0_50], %82 {strides = array<i32>} : memref<1x18x384xf32, #tpu.memory_space<vmem>>, vector<1x9x384xf32>,
    return
  }
  func.func @transform_0(%arg0: i32) -> (i32, i32, i32) {
    %c0_i32 = arith.constant 0 : i32
    %c0_i32_0 = arith.constant 0 : i32
    %c0_i32_1 = arith.constant 0 : i32
    return %arg0, %c0_i32, %c0_i32_0 : i32, i32, i32
  }
  func.func @transform_1(%arg0: i32) -> (i32, i32, i32) {
    %c0_i32 = arith.constant 0 : i32
    %c0_i32_0 = arith.constant 0 : i32
    %c0_i32_1 = arith.constant 0 : i32
    %c0_i32_2 = arith.constant 0 : i32
    return %c0_i32, %c0_i32_0, %c0_i32_1 : i32, i32, i32
  }
  func.func @transform_2(%arg0: i32) -> (i32, i32) {
    %c0_i32 = arith.constant 0 : i32
    %c0_i32_0 = arith.constant 0 : i32
    %c0_i32_1 = arith.constant 0 : i32
    return %c0_i32, %c0_i32_0 : i32, i32
  }
  func.func @transform_3(%arg0: i32) -> (i32, i32) {
    %c0_i32 = arith.constant 0 : i32
    %c0_i32_0 = arith.constant 0 : i32
    %c0_i32_1 = arith.constant 0 : i32
    return %c0_i32, %c0_i32_0 : i32, i32
  }
  func.func @transform_4(%arg0: i32) -> (i32, i32) {
    %c0_i32 = arith.constant 0 : i32
    %c0_i32_0 = arith.constant 0 : i32
    %c0_i32_1 = arith.constant 0 : i32
    return %c0_i32, %c0_i32_0 : i32, i32
  }
  func.func @transform_5(%arg0: i32) -> (i32, i32, i32) {
    %c0_i32 = arith.constant 0 : i32
    %c0_i32_0 = arith.constant 0 : i32
    %c0_i32_1 = arith.constant 0 : i32
    return %arg0, %c0_i32, %c0_i32_0 : i32, i32, i32
  }
  func.func @transform_6(%arg0: i32) -> (i32, i32, i32) {
    %c0_i32 = arith.constant 0 : i32
    %c0_i32_0 = arith.constant 0 : i32
    %c0_i32_1 = arith.constant 0 : i32
    return %arg0, %c0_i32, %c0_i32_0 : i32, i32, i32
  }
}

</mosaic_0001>

<llo_original>
// kernel: tpu_custom_call.1
$region0: #{tpu_custom_call.1}
  #allocation0 [shape = 'u32[]', space=smem, size = 0x4, offset = 0x4, fixed_abs, tag = 'smem constant byte address 0x4 - core index']
  #allocation1 [shape = 'u32[144,128]{1,0:T(1,128)}', space=vmem, size = 0x12000, scoped, tag = 'internal scratch']
  %s0 = inlined_call_operand.vmem [shape: bf16[2,16,456], index: 0, kind: input, shape index: {}]
  %s1 = inlined_call_operand.vmem [shape: bf16[9,32,16], index: 1, kind: input, shape index: {}]
  %s2 = inlined_call_operand.vmem [shape: f32[32,1], index: 2, kind: input, shape index: {}]
  %s3 = inlined_call_operand.vmem [shape: bf16[56,32], index: 3, kind: input, shape index: {}]
  %s4 = inlined_call_operand.vmem [shape: f32[56,1], index: 4, kind: input, shape index: {}]
  %s5 = inlined_call_operand.vmem [shape: f32[2,18,384], index: 5, kind: output, shape index: {0}]
  %s6 = inlined_call_operand.vmem [shape: f32[2,36,384], index: 6, kind: output, shape index: {1}]
  %7 = xla_tuple %s5, %s6
  %s8 = sld [smem:[#allocation0]]
  $region61: #{tpu_custom_call.1} parent=0
    _
  %s10 = ssub.s32 1, %s8
  %s11 = scalar_select 0, %s10, %s8
  loop: start=0, step=1, limit=4
  $region2: #{tpu_custom_call.1} parent=0 // loop_pre_header
    _
  $region3: #{tpu_custom_call.1} parent=0 // loop_header
    %s13 = sphi 0, %s17
    %p14 = scmp.ge.s32.totalorder %s13, 4
    %s23 = sphi 0, %s25
    %s26 = sphi 0, %s23
    %s27 = sphi 0, %s26
    %s43 = sphi 0, %s27
    %s47 = sphi 0, %s47
    %s49 = sphi 0, %s47
    %s50 = sphi 0, %s49
    %s64 = sphi 0, %s50
    %s68 = sphi 0, %s68
    %s70 = sphi 0, %s68
    %s71 = sphi 0, %s70
    %s85 = sphi 0, %s71
    %s89 = sphi 0, %s89
    %s91 = sphi 0, %s89
    %s92 = sphi 0, %s91
    %s106 = sphi 0, %s92
    %s110 = sphi 0, %s110
    %s112 = sphi 0, %s110
    %s113 = sphi 0, %s112
    %s127 = sphi 0, %s113
    %s133 = sphi 0, %s135
    %s136 = sphi 0, %s133
    %s137 = sphi 0, %s136
    %s153 = sphi 0, %s137
    %s159 = sphi 0, %s161
    %s162 = sphi 0, %s159
    %s163 = sphi 0, %s162
    %s179 = sphi 0, %s163
  $region4: #{tpu_custom_call.1} parent=0 // loop_header_branch
    %16 = sbr.rel (%p14) target = $region8
  $region5: #{tpu_custom_call.1} parent=0 // loop_body
    %s18 = ssub.s32 %s13, 1
    %s19 = ssub.s32 %s13, 2
    %s20 = sadd.s32 %s13, 1
    %s21 = ssub.s32 %s13, %s20
    %p22 = scmp.eq.s32.totalorder %s21, 0
    %s24 = sadd.s32 %s23, 1
    %s25 = scalar_select %p22, %s23, %s24
    %p28 = pneg %p22
    %p29 = scmp.eq.s32.totalorder %s13, 1
    %p30 = por %p28, %p29
    %p31 = scmp.ne.s32.totalorder %s23, %s26
    %p32 = scmp.eq.s32.totalorder %s13, 0
    %p33 = por %p31, %p32
    %p34 = scmp.ne.s32.totalorder %s23, %s26
    %p35 = scmp.eq.s32.totalorder %s18, 1
    %p36 = por %p34, %p35
    %p37 = scmp.ne.s32.totalorder %s26, %s27
    %p38 = scmp.eq.s32.totalorder %s18, 0
    %p39 = por %p37, %p38
    %p40 = scmp.ne.s32.totalorder %s26, %s27
    %p41 = scmp.eq.s32.totalorder %s19, 1
    %p42 = por %p40, %p41
    %p44 = scmp.ne.s32.totalorder %s27, %s43
    %p45 = scmp.eq.s32.totalorder %s19, 0
    %p46 = por %p44, %p45
    %s48 = sadd.s32 %s47, 1
    %p51 = scmp.eq.s32.totalorder %s13, 1
    %p52 = scmp.ne.s32.totalorder %s47, %s49
    %p53 = scmp.eq.s32.totalorder %s13, 0
    %p54 = por %p52, %p53
    %p55 = scmp.ne.s32.totalorder %s47, %s49
    %p56 = scmp.eq.s32.totalorder %s18, 1
    %p57 = por %p55, %p56
    %p58 = scmp.ne.s32.totalorder %s49, %s50
    %p59 = scmp.eq.s32.totalorder %s18, 0
    %p60 = por %p58, %p59
    %p61 = scmp.ne.s32.totalorder %s49, %s50
    %p62 = scmp.eq.s32.totalorder %s19, 1
    %p63 = por %p61, %p62
    %p65 = scmp.ne.s32.totalorder %s50, %s64
    %p66 = scmp.eq.s32.totalorder %s19, 0
    %p67 = por %p65, %p66
    %s69 = sadd.s32 %s68, 1
    %p72 = scmp.eq.s32.totalorder %s13, 1
    %p73 = scmp.ne.s32.totalorder %s68, %s70
    %p74 = scmp.eq.s32.totalorder %s13, 0
    %p75 = por %p73, %p74
    %p76 = scmp.ne.s32.totalorder %s68, %s70
    %p77 = scmp.eq.s32.totalorder %s18, 1
    %p78 = por %p76, %p77
    %p79 = scmp.ne.s32.totalorder %s70, %s71
    %p80 = scmp.eq.s32.totalorder %s18, 0
    %p81 = por %p79, %p80
    %p82 = scmp.ne.s32.totalorder %s70, %s71
    %p83 = scmp.eq.s32.totalorder %s19, 1
    %p84 = por %p82, %p83
    %p86 = scmp.ne.s32.totalorder %s71, %s85
    %p87 = scmp.eq.s32.totalorder %s19, 0
    %p88 = por %p86, %p87
    %s90 = sadd.s32 %s89, 1
    %p93 = scmp.eq.s32.totalorder %s13, 1
    %p94 = scmp.ne.s32.totalorder %s89, %s91
    %p95 = scmp.eq.s32.totalorder %s13, 0
    %p96 = por %p94, %p95
    %p97 = scmp.ne.s32.totalorder %s89, %s91
    %p98 = scmp.eq.s32.totalorder %s18, 1
    %p99 = por %p97, %p98
    %p100 = scmp.ne.s32.totalorder %s91, %s92
    %p101 = scmp.eq.s32.totalorder %s18, 0
    %p102 = por %p100, %p101
    %p103 = scmp.ne.s32.totalorder %s91, %s92
    %p104 = scmp.eq.s32.totalorder %s19, 1
    %p105 = por %p103, %p104
    %p107 = scmp.ne.s32.totalorder %s92, %s106
    %p108 = scmp.eq.s32.totalorder %s19, 0
    %p109 = por %p107, %p108
    %s111 = sadd.s32 %s110, 1
    %p114 = scmp.eq.s32.totalorder %s13, 1
    %p115 = scmp.ne.s32.totalorder %s110, %s112
    %p116 = scmp.eq.s32.totalorder %s13, 0
    %p117 = por %p115, %p116
    %p118 = scmp.ne.s32.totalorder %s110, %s112
    %p119 = scmp.eq.s32.totalorder %s18, 1
    %p120 = por %p118, %p119
    %p121 = scmp.ne.s32.totalorder %s112, %s113
    %p122 = scmp.eq.s32.totalorder %s18, 0
    %p123 = por %p121, %p122
    %p124 = scmp.ne.s32.totalorder %s112, %s113
    %p125 = scmp.eq.s32.totalorder %s19, 1
    %p126 = por %p124, %p125
    %p128 = scmp.ne.s32.totalorder %s113, %s127
    %p129 = scmp.eq.s32.totalorder %s19, 0
    %p130 = por %p128, %p129
    %s131 = ssub.s32 %s13, %s20
    %p132 = scmp.eq.s32.totalorder %s131, 0
    %s134 = sadd.s32 %s133, 1
    %s135 = scalar_select %p132, %s133, %s134
    %p138 = pneg %p132
    %p139 = scmp.eq.s32.totalorder %s13, 1
    %p140 = por %p138, %p139
    %p141 = scmp.ne.s32.totalorder %s133, %s136
    %p142 = scmp.eq.s32.totalorder %s13, 0
    %p143 = por %p141, %p142
    %p144 = scmp.ne.s32.totalorder %s133, %s136
    %p145 = scmp.eq.s32.totalorder %s18, 1
    %p146 = por %p144, %p145
    %p147 = scmp.ne.s32.totalorder %s136, %s137
    %p148 = scmp.eq.s32.totalorder %s18, 0
    %p149 = por %p147, %p148
    %p150 = scmp.ne.s32.totalorder %s136, %s137
    %p151 = scmp.eq.s32.totalorder %s19, 1
    %p152 = por %p150, %p151
    %p154 = scmp.ne.s32.totalorder %s137, %s153
    %p155 = scmp.eq.s32.totalorder %s19, 0
    %p156 = por %p154, %p155
    %s157 = ssub.s32 %s13, %s20
    %p158 = scmp.eq.s32.totalorder %s157, 0
    %s160 = sadd.s32 %s159, 1
    %s161 = scalar_select %p158, %s159, %s160
    %p164 = pneg %p158
    %p165 = scmp.eq.s32.totalorder %s13, 1
    %p166 = por %p164, %p165
    %p167 = scmp.ne.s32.totalorder %s159, %s162
    %p168 = scmp.eq.s32.totalorder %s13, 0
    %p169 = por %p167, %p168
    %p170 = scmp.ne.s32.totalorder %s159, %s162
    %p171 = scmp.eq.s32.totalorder %s18, 1
    %p172 = por %p170, %p171
    %p173 = scmp.ne.s32.totalorder %s162, %s163
    %p174 = scmp.eq.s32.totalorder %s18, 0
    %p175 = por %p173, %p174
    %p176 = scmp.ne.s32.totalorder %s162, %s163
    %p177 = scmp.eq.s32.totalorder %s19, 1
    %p178 = por %p176, %p177
    %p180 = scmp.ne.s32.totalorder %s163, %s179
    %p181 = scmp.eq.s32.totalorder %s19, 0
    %p182 = por %p180, %p181
    %p183 = scmp.le.s32.totalorder 1, %s13
    %p184 = scmp.lt.s32.totalorder %s13, 3
    %p185 = pnand %p183, %p184
    %p186 = pneg %p185
    // Predicated region
    $region9: #{tpu_custom_call.1} parent=5 // pred_check
      _
    $region10: #{tpu_custom_call.1} parent=5 // pred_check_branch
      %188 = sbr.rel (%p185) target = $region12
    $region11: #{tpu_custom_call.1} parent=5 // pred_region
      %s189 = ssub.s32 %s13, 1
      // Predicated region
      $region13: #{tpu_custom_call.1} parent=11 // pred_check
        %p190 = pneg %p60
      $region14: #{tpu_custom_call.1} parent=11 // pred_check_branch
        %192 = sbr.rel (%p190) target = $region16
      $region15: #{tpu_custom_call.1} parent=11 // pred_region
        _
      $region16: #{tpu_custom_call.1} parent=11 // pred_fallthru
        _
      // Predicated region
      $region17: #{tpu_custom_call.1} parent=11 // pred_check
        %p193 = pneg %p81
      $region18: #{tpu_custom_call.1} parent=11 // pred_check_branch
        %195 = sbr.rel (%p193) target = $region20
      $region19: #{tpu_custom_call.1} parent=11 // pred_region
        _
      $region20: #{tpu_custom_call.1} parent=11 // pred_fallthru
        _
      // Predicated region
      $region21: #{tpu_custom_call.1} parent=11 // pred_check
        %p196 = pneg %p102
      $region22: #{tpu_custom_call.1} parent=11 // pred_check_branch
        %198 = sbr.rel (%p196) target = $region24
      $region23: #{tpu_custom_call.1} parent=11 // pred_region
        _
      $region24: #{tpu_custom_call.1} parent=11 // pred_fallthru
        _
      // Predicated region
      $region25: #{tpu_custom_call.1} parent=11 // pred_check
        %p199 = pneg %p123
      $region26: #{tpu_custom_call.1} parent=11 // pred_check_branch
        %201 = sbr.rel (%p199) target = $region28
      $region27: #{tpu_custom_call.1} parent=11 // pred_region
        _
      $region28: #{tpu_custom_call.1} parent=11 // pred_fallthru
        _
    $region12: #{tpu_custom_call.1} parent=5 // pred_fallthru
      _
    %p202 = scmp.lt.s32.totalorder %s13, 2
    // Predicated region
    $region29: #{tpu_custom_call.1} parent=5 // pred_check
      %p203 = pneg %p202
    $region30: #{tpu_custom_call.1} parent=5 // pred_check_branch
      %205 = sbr.rel (%p203) target = $region32
    $region31: #{tpu_custom_call.1} parent=5 // pred_region
      // Predicated region
      $region33: #{tpu_custom_call.1} parent=31 // pred_check
        %p206 = pneg %p33
      $region34: #{tpu_custom_call.1} parent=31 // pred_check_branch
        %208 = sbr.rel (%p206) target = $region36
      $region35: #{tpu_custom_call.1} parent=31 // pred_region
        %p209 = scmp.lt.s32.totalorder %s13, 1
        %s210 = scalar_select %p209, %s13, 1
        %s211 = smul.addr %s210, 8
        %s212 = smul.addr %s211, 4
        %s213 = scalar_lea.vmem %s0, %s212
      $region36: #{tpu_custom_call.1} parent=31 // pred_fallthru
        _
    $region32: #{tpu_custom_call.1} parent=5 // pred_fallthru
      _
    %p214 = scmp.le.s32.totalorder 1, %s13
    %p215 = scmp.lt.s32.totalorder %s13, 3
    %p216 = pnand %p214, %p215
    %p217 = pneg %p216
    // Predicated region
    $region37: #{tpu_custom_call.1} parent=5 // pred_check
      _
    $region38: #{tpu_custom_call.1} parent=5 // pred_check_branch
      %219 = sbr.rel (%p216) target = $region40
    $region39: #{tpu_custom_call.1} parent=5 // pred_region
      %s220 = ssub.s32 %s13, 1
      %p221 = scmp.lt.s32.totalorder %s18, 1
      %s222 = scalar_select %p221, %s18, 1
      %s223 = smul.addr %s222, 8
      %s224 = smul.addr %s223, 4
      %s225 = scalar_lea.vmem %s0, %s224
      %p226 = pneg %p39
      %p227 = pneg %p36
      %p228 = pneg %p60
      %p229 = pneg %p57
      %p230 = pneg %p81
      %p231 = pneg %p78
      %p232 = pneg %p102
      %p233 = pneg %p99
      %p234 = pneg %p123
      %p235 = pneg %p120
      %p236 = pneg %p149
      %p237 = pneg %p146
      %p238 = scmp.lt.s32.totalorder %s18, 1
      %s239 = scalar_select %p238, %s18, 1
      %s240 = smul.addr %s239, 9
      %s241 = smul.addr %s240, 8
      %s242 = scalar_lea.vmem %s5, %s241
      %p243 = pneg %p175
      %p244 = pneg %p172
      %p245 = scmp.lt.s32.totalorder %s18, 1
      %s246 = scalar_select %p245, %s18, 1
      %s247 = smul.addr %s246, 15
      %s248 = smul.addr %s247, 8
      %s249 = scalar_lea.vmem %s6, %s248
      %p250 = scmp.lt.s32.totalorder %s18, 1
      %s251 = scalar_select %p250, %s18, 1
      %s252 = smul.addr %s251, 8
      %s253 = smul.addr %s252, 4
      %s254 = scalar_lea.vmem %s0, %s253
      %p255 = scmp.lt.s32.totalorder %s18, 1
      %s256 = scalar_select %p255, %s18, 1
      %s257 = smul.addr %s256, 9
      %s258 = smul.addr %s257, 8
      %s259 = scalar_lea.vmem %s5, %s258
      %p260 = scmp.lt.s32.totalorder %s18, 1
      %s261 = scalar_select %p260, %s18, 1
      %s262 = smul.addr %s261, 15
      %s263 = smul.addr %s262, 8
      %s264 = scalar_lea.vmem %s6, %s263
      %v266 = vld [vmem:[%s254] sm:$0xff]
      %v267 = vld [vmem:[%s254 + $0x8] sm:$0xff]
      %v268 = vld [vmem:[%s254 + $0x10] sm:$0xff]
      %v269 = vld [vmem:[%s254 + $0x18] sm:$0xff]
      %v270 = vld [vmem:[%s1] sm:$0xf]
      %v271 = vld [vmem:[%s1 + $0x4] sm:$0xf]
      %v272 = vld [vmem:[%s1 + $0x8] sm:$0xf]
      %v273 = vld [vmem:[%s1 + $0xc] sm:$0xf]
      %s274 = scalar_lea.vmem %s1, 16
      %v275 = vld [vmem:[%s274] sm:$0xf]
      %v276 = vld [vmem:[%s274 + $0x4] sm:$0xf]
      %v277 = vld [vmem:[%s274 + $0x8] sm:$0xf]
      %v278 = vld [vmem:[%s274 + $0xc] sm:$0xf]
      %v283 = vunpack.c.l.b16 %v275
      %v284 = vunpack.c.l.b16 %v276
      %v285 = vunpack.c.l.b16 %v277
      %v286 = vunpack.c.l.b16 %v278
      %v287 = vpack.c.b16 %v284, %v283
      %v288 = vpack.c.b16 %v286, %v285
      %v293 = vunpack.c.l.b16 %v266
      %v294 = vunpack.c.h.b16 %v266
      %v295 = vunpack.c.l.b16 %v267
      %v296 = vunpack.c.h.b16 %v267
      %v297 = vunpack.c.l.b16 %v268
      %v298 = vunpack.c.h.b16 %v268
      %v299 = vunpack.c.l.b16 %v269
      %v300 = vunpack.c.h.b16 %v269
      %v301 = vpack.c.b16 %v297, %v293
      %v302 = vpack.c.b16 %v298, %v294
      %v303 = vpack.c.b16 %v299, %v295
      %v304 = vpack.c.b16 %v300, %v296
      %305 = vrot.lane.b32.xlu0 %v301, 127
      %v306 = vpop.permute.xlu0 %305
      %307 = vrot.lane.b32.xlu0 %v302, 127
      %v308 = vpop.permute.xlu0 %307
      %309 = vrot.lane.b32.xlu0 %v303, 127
      %v310 = vpop.permute.xlu0 %309
      %311 = vrot.lane.b32.xlu0 %v304, 127
      %v312 = vpop.permute.xlu0 %311
      %vm313 = vcmask 1039360
      %v314 = vsel %vm313, %v306, %v308
      %v315 = vsel %vm313, %v308, %v310
      %v316 = vsel %vm313, %v310, %v312
      %vm320 = vcmask 130048
      %v322 = vsel %vm320, %v287, 0
      %v325 = vsel %vm320, %v288, 0
      %327 = vmatprep.subr.bf16.mxu0 %v315
      %328 = vmatpush1.bf16.msra.mxu0 %v314
      %329 = vmatprep.subr.bf16.mxu0 0
      %330 = vmatpush1.bf16.msra.mxu0 0
      %331 = vmatprep.subr.bf16.mxu0 0
      %332 = vmatpush1.bf16.msra.mxu0 0
      %333 = vmatprep.subr.bf16.mxu0 0
      %334 = vmatpush1.bf16.msra.mxu0 0
      %335 = vmatprep.subr.bf16.mxu0 0
      %336 = vmatpush1.bf16.msra.mxu0 0
      %337 = vmatprep.subr.bf16.mxu0 0
      %338 = vmatpush1.bf16.msra.mxu0 0
      %339 = vmatprep.subr.bf16.mxu0 0
      %340 = vmatpush1.bf16.msra.mxu0 0
      %341 = vmatprep.subr.bf16.mxu0 0
      %342 = vmatpush1.bf16.msra.mxu0 0
      %343 = vmatprep.subr.bf16.mxu0 0
      %344 = vmatpush1.bf16.msra.mxu0 0
      %345 = vmatprep.subr.bf16.mxu0 0
      %346 = vmatpush1.bf16.msra.mxu0 0
      %347 = vmatprep.subr.bf16.mxu0 0
      %348 = vmatpush1.bf16.msra.mxu0 0
      %349 = vmatprep.subr.bf16.mxu0 0
      %350 = vmatpush1.bf16.msra.mxu0 0
      %351 = vmatprep.subr.bf16.mxu0 0
      %352 = vmatpush1.bf16.msra.mxu0 0
      %353 = vmatprep.subr.bf16.mxu0 0
      %354 = vmatpush1.bf16.msra.mxu0 0
      %355 = vmatprep.subr.bf16.mxu0 0
      %356 = vmatpush1.bf16.msra.mxu0 0
      %357 = vmatprep.subr.bf16.mxu0 0
      %358 = vmatpush1.bf16.msra.mxu0 0
      %359 = vmatprep.mubr.bf16.mxu0 0
      %360 = vmatmul.mubr.bf16.gmra.mrb[0].mxu0 %v322
      %v361 = vpop.f32.mrb[0].mxu0
      %v362 = vadd.f32 0.0, %v361
      %v363 = vpop.f32.mrb[0].mxu0
      %v364 = vadd.f32 0.0, %v363
      %v365 = vpop.f32.mrb[0].mxu0
      %v366 = vadd.f32 0.0, %v365
      %v367 = vpop.f32.mrb[0].mxu0
      %v368 = vadd.f32 0.0, %v367
      %369 = vmatprep.mubr.bf16.mxu0 0
      %370 = vmatmul.mubr.bf16.gmra.mrb[0].mxu0 %v325
      %v371 = vpop.f32.mrb[0].mxu0
      %v372 = vadd.f32 0.0, %v371
      %v373 = vpop.f32.mrb[0].mxu0
      %v374 = vadd.f32 0.0, %v373
      %v375 = vpop.f32.mrb[0].mxu0
      %v376 = vadd.f32 0.0, %v375
      %v377 = vpop.f32.mrb[0].mxu0
      %v378 = vadd.f32 0.0, %v377
      %379 = vdwg.mxu0
      %380 = vmatprep.subr.bf16.mxu0 0
      %381 = vmatpush1.bf16.msra.mxu0 %v316
      %382 = vmatprep.subr.bf16.mxu0 0
      %383 = vmatpush1.bf16.msra.mxu0 0
      %384 = vmatprep.subr.bf16.mxu0 0
      %385 = vmatpush1.bf16.msra.mxu0 0
      %386 = vmatprep.subr.bf16.mxu0 0
      %387 = vmatpush1.bf16.msra.mxu0 0
      %388 = vmatprep.subr.bf16.mxu0 0
      %389 = vmatpush1.bf16.msra.mxu0 0
      %390 = vmatprep.subr.bf16.mxu0 0
      %391 = vmatpush1.bf16.msra.mxu0 0
      %392 = vmatprep.subr.bf16.mxu0 0
      %393 = vmatpush1.bf16.msra.mxu0 0
      %394 = vmatprep.subr.bf16.mxu0 0
      %395 = vmatpush1.bf16.msra.mxu0 0
      %396 = vmatprep.subr.bf16.mxu0 0
      %397 = vmatpush1.bf16.msra.mxu0 0
      %398 = vmatprep.subr.bf16.mxu0 0
      %399 = vmatpush1.bf16.msra.mxu0 0
      %400 = vmatprep.subr.bf16.mxu0 0
      %401 = vmatpush1.bf16.msra.mxu0 0
      %402 = vmatprep.subr.bf16.mxu0 0
      %403 = vmatpush1.bf16.msra.mxu0 0
      %404 = vmatprep.subr.bf16.mxu0 0
      %405 = vmatpush1.bf16.msra.mxu0 0
      %406 = vmatprep.subr.bf16.mxu0 0
      %407 = vmatpush1.bf16.msra.mxu0 0
      %408 = vmatprep.subr.bf16.mxu0 0
      %409 = vmatpush1.bf16.msra.mxu0 0
      %410 = vmatprep.subr.bf16.mxu0 0
      %411 = vmatpush1.bf16.msra.mxu0 0
      %412 = vmatprep.mubr.bf16.mxu0 0
      %413 = vmatmul.mubr.bf16.gmra.mrb[0].mxu0 %v322
      %v414 = vpop.f32.mrb[0].mxu0
      %v415 = vadd.f32 0.0, %v414
      %v416 = vpop.f32.mrb[0].mxu0
      %v417 = vpop.f32.mrb[0].mxu0
      %v418 = vadd.f32 0.0, %v417
      %v419 = vpop.f32.mrb[0].mxu0
      %420 = vmatprep.mubr.bf16.mxu0 0
      %421 = vmatmul.mubr.bf16.gmra.mrb[0].mxu0 %v325
      %v422 = vpop.f32.mrb[0].mxu0
      %v423 = vadd.f32 0.0, %v422
      %v424 = vpop.f32.mrb[0].mxu0
      %v425 = vpop.f32.mrb[0].mxu0
      %v426 = vadd.f32 0.0, %v425
      %v427 = vpop.f32.mrb[0].mxu0
      %428 = vdwg.mxu0
      %v433 = vunpack.c.l.b16 %v270
      %v434 = vunpack.c.l.b16 %v271
      %v435 = vunpack.c.l.b16 %v272
      %v436 = vunpack.c.l.b16 %v273
      %v437 = vpack.c.b16 %v434, %v433
      %v438 = vpack.c.b16 %v436, %v435
      %v443 = vsel %vm320, %v437, 0
      %v446 = vsel %vm320, %v438, 0
      %448 = vmatprep.subr.bf16.mxu0 %v302
      %449 = vmatpush1.bf16.msra.mxu0 %v301
      %450 = vmatprep.subr.bf16.mxu0 0
      %451 = vmatpush1.bf16.msra.mxu0 0
      %452 = vmatprep.subr.bf16.mxu0 0
      %453 = vmatpush1.bf16.msra.mxu0 0
      %454 = vmatprep.subr.bf16.mxu0 0
      %455 = vmatpush1.bf16.msra.mxu0 0
      %456 = vmatprep.subr.bf16.mxu0 0
      %457 = vmatpush1.bf16.msra.mxu0 0
      %458 = vmatprep.subr.bf16.mxu0 0
      %459 = vmatpush1.bf16.msra.mxu0 0
      %460 = vmatprep.subr.bf16.mxu0 0
      %461 = vmatpush1.bf16.msra.mxu0 0
      %462 = vmatprep.subr.bf16.mxu0 0
      %463 = vmatpush1.bf16.msra.mxu0 0
      %464 = vmatprep.subr.bf16.mxu0 0
      %465 = vmatpush1.bf16.msra.mxu0 0
      %466 = vmatprep.subr.bf16.mxu0 0
      %467 = vmatpush1.bf16.msra.mxu0 0
      %468 = vmatprep.subr.bf16.mxu0 0
      %469 = vmatpush1.bf16.msra.mxu0 0
      %470 = vmatprep.subr.bf16.mxu0 0
      %471 = vmatpush1.bf16.msra.mxu0 0
      %472 = vmatprep.subr.bf16.mxu0 0
      %473 = vmatpush1.bf16.msra.mxu0 0
      %474 = vmatprep.subr.bf16.mxu0 0
      %475 = vmatpush1.bf16.msra.mxu0 0
      %476 = vmatprep.subr.bf16.mxu0 0
      %477 = vmatpush1.bf16.msra.mxu0 0
      %478 = vmatprep.subr.bf16.mxu0 0
      %479 = vmatpush1.bf16.msra.mxu0 0
      %480 = vmatprep.mubr.bf16.mxu0 0
      %481 = vmatmul.mubr.bf16.gmra.mrb[0].mxu0 %v443
      %v482 = vpop.f32.mrb[0].mxu0
      %v483 = vadd.f32 %v362, %v482
      %v484 = vpop.f32.mrb[0].mxu0
      %v485 = vadd.f32 %v364, %v484
      %v486 = vpop.f32.mrb[0].mxu0
      %v487 = vadd.f32 %v366, %v486
      %v488 = vpop.f32.mrb[0].mxu0
      %v489 = vadd.f32 %v368, %v488
      %490 = vmatprep.mubr.bf16.mxu0 0
      %491 = vmatmul.mubr.bf16.gmra.mrb[0].mxu0 %v446
      %v492 = vpop.f32.mrb[0].mxu0
      %v493 = vadd.f32 %v372, %v492
      %v494 = vpop.f32.mrb[0].mxu0
      %v495 = vadd.f32 %v374, %v494
      %v496 = vpop.f32.mrb[0].mxu0
      %v497 = vadd.f32 %v376, %v496
      %v498 = vpop.f32.mrb[0].mxu0
      %v499 = vadd.f32 %v378, %v498
      %500 = vdwg.mxu0
      %501 = vmatprep.subr.bf16.mxu0 0
      %502 = vmatpush1.bf16.msra.mxu0 %v303
      %503 = vmatprep.subr.bf16.mxu0 0
      %504 = vmatpush1.bf16.msra.mxu0 0
      %505 = vmatprep.subr.bf16.mxu0 0
      %506 = vmatpush1.bf16.msra.mxu0 0
      %507 = vmatprep.subr.bf16.mxu0 0
      %508 = vmatpush1.bf16.msra.mxu0 0
      %509 = vmatprep.subr.bf16.mxu0 0
      %510 = vmatpush1.bf16.msra.mxu0 0
      %511 = vmatprep.subr.bf16.mxu0 0
      %512 = vmatpush1.bf16.msra.mxu0 0
      %513 = vmatprep.subr.bf16.mxu0 0
      %514 = vmatpush1.bf16.msra.mxu0 0
      %515 = vmatprep.subr.bf16.mxu0 0
      %516 = vmatpush1.bf16.msra.mxu0 0
      %517 = vmatprep.subr.bf16.mxu0 0
      %518 = vmatpush1.bf16.msra.mxu0 0
      %519 = vmatprep.subr.bf16.mxu0 0
      %520 = vmatpush1.bf16.msra.mxu0 0
      %521 = vmatprep.subr.bf16.mxu0 0
      %522 = vmatpush1.bf16.msra.mxu0 0
      %523 = vmatprep.subr.bf16.mxu0 0
      %524 = vmatpush1.bf16.msra.mxu0 0
      %525 = vmatprep.subr.bf16.mxu0 0
      %526 = vmatpush1.bf16.msra.mxu0 0
      %527 = vmatprep.subr.bf16.mxu0 0
      %528 = vmatpush1.bf16.msra.mxu0 0
      %529 = vmatprep.subr.bf16.mxu0 0
      %530 = vmatpush1.bf16.msra.mxu0 0
      %531 = vmatprep.subr.bf16.mxu0 0
      %532 = vmatpush1.bf16.msra.mxu0 0
      %533 = vmatprep.mubr.bf16.mxu0 0
      %534 = vmatmul.mubr.bf16.gmra.mrb[0].mxu0 %v443
      %v535 = vpop.f32.mrb[0].mxu0
      %v536 = vadd.f32 %v415, %v535
      %v537 = vpop.f32.mrb[0].mxu0
      %v538 = vpop.f32.mrb[0].mxu0
      %v539 = vadd.f32 %v418, %v538
      %v540 = vpop.f32.mrb[0].mxu0
      %541 = vmatprep.mubr.bf16.mxu0 0
      %542 = vmatmul.mubr.bf16.gmra.mrb[0].mxu0 %v446
      %v543 = vpop.f32.mrb[0].mxu0
      %v544 = vadd.f32 %v423, %v543
      %v545 = vpop.f32.mrb[0].mxu0
      %v546 = vpop.f32.mrb[0].mxu0
      %v547 = vadd.f32 %v426, %v546
      %v548 = vpop.f32.mrb[0].mxu0
      %549 = vdwg.mxu0
      %s550 = scalar_lea.vmem %s1, 32
      %v551 = vld [vmem:[%s550] sm:$0xf]
      %v552 = vld [vmem:[%s550 + $0x4] sm:$0xf]
      %v553 = vld [vmem:[%s550 + $0x8] sm:$0xf]
      %v554 = vld [vmem:[%s550 + $0xc] sm:$0xf]
      %v559 = vunpack.c.l.b16 %v551
      %v560 = vunpack.c.l.b16 %v552
      %v561 = vunpack.c.l.b16 %v553
      %v562 = vunpack.c.l.b16 %v554
      %v563 = vpack.c.b16 %v560, %v559
      %v564 = vpack.c.b16 %v562, %v561
      %565 = vrot.lane.b32.xlu0 %v301, 126
      %v566 = vpop.permute.xlu0 %565
      %567 = vrot.lane.b32.xlu0 %v302, 126
      %v568 = vpop.permute.xlu0 %567
      %569 = vrot.lane.b32.xlu0 %v303, 126
      %v570 = vpop.permute.xlu0 %569
      %571 = vrot.lane.b32.xlu0 %v304, 126
      %v572 = vpop.permute.xlu0 %571
      %vm573 = vcmask 1031168
      %v574 = vsel %vm573, %v566, %v568
      %v575 = vsel %vm573, %v568, %v570
      %v576 = vsel %vm573, %v570, %v572
      %v581 = vsel %vm320, %v563, 0
      %v584 = vsel %vm320, %v564, 0
      %586 = vmatprep.subr.bf16.mxu0 %v575
      %587 = vmatpush1.bf16.msra.mxu0 %v574
      %588 = vmatprep.subr.bf16.mxu0 0
      %589 = vmatpush1.bf16.msra.mxu0 0
      %590 = vmatprep.subr.bf16.mxu0 0
      %591 = vmatpush1.bf16.msra.mxu0 0
      %592 = vmatprep.subr.bf16.mxu0 0
      %593 = vmatpush1.bf16.msra.mxu0 0
      %594 = vmatprep.subr.bf16.mxu0 0
      %595 = vmatpush1.bf16.msra.mxu0 0
      %596 = vmatprep.subr.bf16.mxu0 0
      %597 = vmatpush1.bf16.msra.mxu0 0
      %598 = vmatprep.subr.bf16.mxu0 0
      %599 = vmatpush1.bf16.msra.mxu0 0
      %600 = vmatprep.subr.bf16.mxu0 0
      %601 = vmatpush1.bf16.msra.mxu0 0
      %602 = vmatprep.subr.bf16.mxu0 0
      %603 = vmatpush1.bf16.msra.mxu0 0
      %604 = vmatprep.subr.bf16.mxu0 0
      %605 = vmatpush1.bf16.msra.mxu0 0
      %606 = vmatprep.subr.bf16.mxu0 0
      %607 = vmatpush1.bf16.msra.mxu0 0
      %608 = vmatprep.subr.bf16.mxu0 0
      %609 = vmatpush1.bf16.msra.mxu0 0
      %610 = vmatprep.subr.bf16.mxu0 0
      %611 = vmatpush1.bf16.msra.mxu0 0
      %612 = vmatprep.subr.bf16.mxu0 0
      %613 = vmatpush1.bf16.msra.mxu0 0
      %614 = vmatprep.subr.bf16.mxu0 0
      %615 = vmatpush1.bf16.msra.mxu0 0
      %616 = vmatprep.subr.bf16.mxu0 0
      %617 = vmatpush1.bf16.msra.mxu0 0
      %618 = vmatprep.mubr.bf16.mxu0 0
      %619 = vmatmul.mubr.bf16.gmra.mrb[0].mxu0 %v581
      %v620 = vpop.f32.mrb[0].mxu0
      %v621 = vadd.f32 0.0, %v620
      %v622 = vpop.f32.mrb[0].mxu0
      %v623 = vadd.f32 0.0, %v622
      %v624 = vpop.f32.mrb[0].mxu0
      %v625 = vadd.f32 0.0, %v624
      %v626 = vpop.f32.mrb[0].mxu0
      %v627 = vadd.f32 0.0, %v626
      %628 = vmatprep.mubr.bf16.mxu0 0
      %629 = vmatmul.mubr.bf16.gmra.mrb[0].mxu0 %v584
      %v630 = vpop.f32.mrb[0].mxu0
      %v631 = vadd.f32 0.0, %v630
      %v632 = vpop.f32.mrb[0].mxu0
      %v633 = vadd.f32 0.0, %v632
      %v634 = vpop.f32.mrb[0].mxu0
      %v635 = vadd.f32 0.0, %v634
      %v636 = vpop.f32.mrb[0].mxu0
      %v637 = vadd.f32 0.0, %v636
      %638 = vdwg.mxu0
      %639 = vmatprep.subr.bf16.mxu0 0
      %640 = vmatpush1.bf16.msra.mxu0 %v576
      %641 = vmatprep.subr.bf16.mxu0 0
      %642 = vmatpush1.bf16.msra.mxu0 0
      %643 = vmatprep.subr.bf16.mxu0 0
      %644 = vmatpush1.bf16.msra.mxu0 0
      %645 = vmatprep.subr.bf16.mxu0 0
      %646 = vmatpush1.bf16.msra.mxu0 0
      %647 = vmatprep.subr.bf16.mxu0 0
      %648 = vmatpush1.bf16.msra.mxu0 0
      %649 = vmatprep.subr.bf16.mxu0 0
      %650 = vmatpush1.bf16.msra.mxu0 0
      %651 = vmatprep.subr.bf16.mxu0 0
      %652 = vmatpush1.bf16.msra.mxu0 0
      %653 = vmatprep.subr.bf16.mxu0 0
      %654 = vmatpush1.bf16.msra.mxu0 0
      %655 = vmatprep.subr.bf16.mxu0 0
      %656 = vmatpush1.bf16.msra.mxu0 0
      %657 = vmatprep.subr.bf16.mxu0 0
      %658 = vmatpush1.bf16.msra.mxu0 0
      %659 = vmatprep.subr.bf16.mxu0 0
      %660 = vmatpush1.bf16.msra.mxu0 0
      %661 = vmatprep.subr.bf16.mxu0 0
      %662 = vmatpush1.bf16.msra.mxu0 0
      %663 = vmatprep.subr.bf16.mxu0 0
      %664 = vmatpush1.bf16.msra.mxu0 0
      %665 = vmatprep.subr.bf16.mxu0 0
      %666 = vmatpush1.bf16.msra.mxu0 0
      %667 = vmatprep.subr.bf16.mxu0 0
      %668 = vmatpush1.bf16.msra.mxu0 0
      %669 = vmatprep.subr.bf16.mxu0 0
      %670 = vmatpush1.bf16.msra.mxu0 0
      %671 = vmatprep.mubr.bf16.mxu0 0
      %672 = vmatmul.mubr.bf16.gmra.mrb[0].mxu0 %v581
      %v673 = vpop.f32.mrb[0].mxu0
      %v674 = vadd.f32 0.0, %v673
      %v675 = vpop.f32.mrb[0].mxu0
      %v676 = vpop.f32.mrb[0].mxu0
      %v677 = vadd.f32 0.0, %v676
      %v678 = vpop.f32.mrb[0].mxu0
      %679 = vmatprep.mubr.bf16.mxu0 0
      %680 = vmatmul.mubr.bf16.gmra.mrb[0].mxu0 %v584
      %v681 = vpop.f32.mrb[0].mxu0
      %v682 = vadd.f32 0.0, %v681
      %v683 = vpop.f32.mrb[0].mxu0
      %v684 = vpop.f32.mrb[0].mxu0
      %v685 = vadd.f32 0.0, %v684
      %v686 = vpop.f32.mrb[0].mxu0
      %687 = vdwg.mxu0
      %v688 = vadd.f32 %v483, %v621
      %v689 = vadd.f32 %v485, %v623
      %v690 = vadd.f32 %v536, %v674
      %v691 = vadd.f32 %v487, %v625
      %v692 = vadd.f32 %v489, %v627
      %v693 = vadd.f32 %v539, %v677
      %v694 = vadd.f32 %v493, %v631
      %v695 = vadd.f32 %v495, %v633
      %v696 = vadd.f32 %v544, %v682
      %v697 = vadd.f32 %v497, %v635
      %v698 = vadd.f32 %v499, %v637
      %v699 = vadd.f32 %v547, %v685
      %s700 = scalar_lea.vmem %s1, 48
      %v701 = vld [vmem:[%s700] sm:$0xf]
      %v702 = vld [vmem:[%s700 + $0x4] sm:$0xf]
      %v703 = vld [vmem:[%s700 + $0x8] sm:$0xf]
      %v704 = vld [vmem:[%s700 + $0xc] sm:$0xf]
      %v709 = vunpack.c.l.b16 %v701
      %v710 = vunpack.c.l.b16 %v702
      %v711 = vunpack.c.l.b16 %v703
      %v712 = vunpack.c.l.b16 %v704
      %v713 = vpack.c.b16 %v710, %v709
      %v714 = vpack.c.b16 %v712, %v711
      %715 = vrot.lane.b32.xlu0 %v301, 104
      %v716 = vpop.permute.xlu0 %715
      %717 = vrot.lane.b32.xlu0 %v302, 104
      %v718 = vpop.permute.xlu0 %717
      %719 = vrot.lane.b32.xlu0 %v303, 104
      %v720 = vpop.permute.xlu0 %719
      %721 = vrot.lane.b32.xlu0 %v304, 104
      %v722 = vpop.permute.xlu0 %721
      %vm723 = vcmask 850944
      %v724 = vsel %vm723, %v716, %v718
      %v725 = vsel %vm723, %v718, %v720
      %v726 = vsel %vm723, %v720, %v722
      %v731 = vsel %vm320, %v713, 0
      %v734 = vsel %vm320, %v714, 0
      %736 = vmatprep.subr.bf16.mxu0 %v725
      %737 = vmatpush1.bf16.msra.mxu0 %v724
      %738 = vmatprep.subr.bf16.mxu0 0
      %739 = vmatpush1.bf16.msra.mxu0 0
      %740 = vmatprep.subr.bf16.mxu0 0
      %741 = vmatpush1.bf16.msra.mxu0 0
      %742 = vmatprep.subr.bf16.mxu0 0
      %743 = vmatpush1.bf16.msra.mxu0 0
      %744 = vmatprep.subr.bf16.mxu0 0
      %745 = vmatpush1.bf16.msra.mxu0 0
      %746 = vmatprep.subr.bf16.mxu0 0
      %747 = vmatpush1.bf16.msra.mxu0 0
      %748 = vmatprep.subr.bf16.mxu0 0
      %749 = vmatpush1.bf16.msra.mxu0 0
      %750 = vmatprep.subr.bf16.mxu0 0
      %751 = vmatpush1.bf16.msra.mxu0 0
      %752 = vmatprep.subr.bf16.mxu0 0
      %753 = vmatpush1.bf16.msra.mxu0 0
      %754 = vmatprep.subr.bf16.mxu0 0
      %755 = vmatpush1.bf16.msra.mxu0 0
      %756 = vmatprep.subr.bf16.mxu0 0
      %757 = vmatpush1.bf16.msra.mxu0 0
      %758 = vmatprep.subr.bf16.mxu0 0
      %759 = vmatpush1.bf16.msra.mxu0 0
      %760 = vmatprep.subr.bf16.mxu0 0
      %761 = vmatpush1.bf16.msra.mxu0 0
      %762 = vmatprep.subr.bf16.mxu0 0
      %763 = vmatpush1.bf16.msra.mxu0 0
      %764 = vmatprep.subr.bf16.mxu0 0
      %765 = vmatpush1.bf16.msra.mxu0 0
      %766 = vmatprep.subr.bf16.mxu0 0
      %767 = vmatpush1.bf16.msra.mxu0 0
      %768 = vmatprep.mubr.bf16.mxu0 0
      %769 = vmatmul.mubr.bf16.gmra.mrb[0].mxu0 %v731
      %v770 = vpop.f32.mrb[0].mxu0
      %v771 = vadd.f32 0.0, %v770
      %v772 = vpop.f32.mrb[0].mxu0
      %v773 = vadd.f32 0.0, %v772
      %v774 = vpop.f32.mrb[0].mxu0
      %v775 = vadd.f32 0.0, %v774
      %v776 = vpop.f32.mrb[0].mxu0
      %v777 = vadd.f32 0.0, %v776
      %778 = vmatprep.mubr.bf16.mxu0 0
      %779 = vmatmul.mubr.bf16.gmra.mrb[0].mxu0 %v734
      %v780 = vpop.f32.mrb[0].mxu0
      %v781 = vadd.f32 0.0, %v780
      %v782 = vpop.f32.mrb[0].mxu0
      %v783 = vadd.f32 0.0, %v782
      %v784 = vpop.f32.mrb[0].mxu0
      %v785 = vadd.f32 0.0, %v784
      %v786 = vpop.f32.mrb[0].mxu0
      %v787 = vadd.f32 0.0, %v786
      %788 = vdwg.mxu0
      %789 = vmatprep.subr.bf16.mxu0 0
      %790 = vmatpush1.bf16.msra.mxu0 %v726
      %791 = vmatprep.subr.bf16.mxu0 0
      %792 = vmatpush1.bf16.msra.mxu0 0
      %793 = vmatprep.subr.bf16.mxu0 0
      %794 = vmatpush1.bf16.msra.mxu0 0
      %795 = vmatprep.subr.bf16.mxu0 0
      %796 = vmatpush1.bf16.msra.mxu0 0
      %797 = vmatprep.subr.bf16.mxu0 0
      %798 = vmatpush1.bf16.msra.mxu0 0
      %799 = vmatprep.subr.bf16.mxu0 0
      %800 = vmatpush1.bf16.msra.mxu0 0
      %801 = vmatprep.subr.bf16.mxu0 0
      %802 = vmatpush1.bf16.msra.mxu0 0
      %803 = vmatprep.subr.bf16.mxu0 0
      %804 = vmatpush1.bf16.msra.mxu0 0
      %805 = vmatprep.subr.bf16.mxu0 0
      %806 = vmatpush1.bf16.msra.mxu0 0
      %807 = vmatprep.subr.bf16.mxu0 0
      %808 = vmatpush1.bf16.msra.mxu0 0
      %809 = vmatprep.subr.bf16.mxu0 0
      %810 = vmatpush1.bf16.msra.mxu0 0
      %811 = vmatprep.subr.bf16.mxu0 0
      %812 = vmatpush1.bf16.msra.mxu0 0
      %813 = vmatprep.subr.bf16.mxu0 0
      %814 = vmatpush1.bf16.msra.mxu0 0
      %815 = vmatprep.subr.bf16.mxu0 0
      %816 = vmatpush1.bf16.msra.mxu0 0
      %817 = vmatprep.subr.bf16.mxu0 0
      %818 = vmatpush1.bf16.msra.mxu0 0
      %819 = vmatprep.subr.bf16.mxu0 0
      %820 = vmatpush1.bf16.msra.mxu0 0
      %821 = vmatprep.mubr.bf16.mxu0 0
      %822 = vmatmul.mubr.bf16.gmra.mrb[0].mxu0 %v731
      %v823 = vpop.f32.mrb[0].mxu0
      %v824 = vadd.f32 0.0, %v823
      %v825 = vpop.f32.mrb[0].mxu0
      %v826 = vpop.f32.mrb[0].mxu0
      %v827 = vadd.f32 0.0, %v826
      %v828 = vpop.f32.mrb[0].mxu0
      %829 = vmatprep.mubr.bf16.mxu0 0
      %830 = vmatmul.mubr.bf16.gmra.mrb[0].mxu0 %v734
      %v831 = vpop.f32.mrb[0].mxu0
      %v832 = vadd.f32 0.0, %v831
      %v833 = vpop.f32.mrb[0].mxu0
      %v834 = vpop.f32.mrb[0].mxu0
      %v835 = vadd.f32 0.0, %v834
      %v836 = vpop.f32.mrb[0].mxu0
      %837 = vdwg.mxu0
      %v838 = vadd.f32 %v688, %v771
      %v839 = vadd.f32 %v689, %v773
      %v840 = vadd.f32 %v690, %v824
      %v841 = vadd.f32 %v691, %v775
      %v842 = vadd.f32 %v692, %v777
      %v843 = vadd.f32 %v693, %v827
      %v844 = vadd.f32 %v694, %v781
      %v845 = vadd.f32 %v695, %v783
      %v846 = vadd.f32 %v696, %v832
      %v847 = vadd.f32 %v697, %v785
      %v848 = vadd.f32 %v698, %v787
      %v849 = vadd.f32 %v699, %v835
      %s850 = scalar_lea.vmem %s1, 64
      %v851 = vld [vmem:[%s850] sm:$0xf]
      %v852 = vld [vmem:[%s850 + $0x4] sm:$0xf]
      %v853 = vld [vmem:[%s850 + $0x8] sm:$0xf]
      %v854 = vld [vmem:[%s850 + $0xc] sm:$0xf]
      %v859 = vunpack.c.l.b16 %v851
      %v860 = vunpack.c.l.b16 %v852
      %v861 = vunpack.c.l.b16 %v853
      %v862 = vunpack.c.l.b16 %v854
      %v863 = vpack.c.b16 %v860, %v859
      %v864 = vpack.c.b16 %v862, %v861
      %865 = vrot.lane.b32.xlu0 %v301, 103
      %v866 = vpop.permute.xlu0 %865
      %867 = vrot.lane.b32.xlu0 %v302, 103
      %v868 = vpop.permute.xlu0 %867
      %869 = vrot.lane.b32.xlu0 %v303, 103
      %v870 = vpop.permute.xlu0 %869
      %871 = vrot.lane.b32.xlu0 %v304, 103
      %v872 = vpop.permute.xlu0 %871
      %vm873 = vcmask 842752
      %v874 = vsel %vm873, %v866, %v868
      %v875 = vsel %vm873, %v868, %v870
      %v876 = vsel %vm873, %v870, %v872
      %v881 = vsel %vm320, %v863, 0
      %v884 = vsel %vm320, %v864, 0
      %886 = vmatprep.subr.bf16.mxu0 %v875
      %887 = vmatpush1.bf16.msra.mxu0 %v874
      %888 = vmatprep.subr.bf16.mxu0 0
      %889 = vmatpush1.bf16.msra.mxu0 0
      %890 = vmatprep.subr.bf16.mxu0 0
      %891 = vmatpush1.bf16.msra.mxu0 0
      %892 = vmatprep.subr.bf16.mxu0 0
      %893 = vmatpush1.bf16.msra.mxu0 0
      %894 = vmatprep.subr.bf16.mxu0 0
      %895 = vmatpush1.bf16.msra.mxu0 0
      %896 = vmatprep.subr.bf16.mxu0 0
      %897 = vmatpush1.bf16.msra.mxu0 0
      %898 = vmatprep.subr.bf16.mxu0 0
      %899 = vmatpush1.bf16.msra.mxu0 0
      %900 = vmatprep.subr.bf16.mxu0 0
      %901 = vmatpush1.bf16.msra.mxu0 0
      %902 = vmatprep.subr.bf16.mxu0 0
      %903 = vmatpush1.bf16.msra.mxu0 0
      %904 = vmatprep.subr.bf16.mxu0 0
      %905 = vmatpush1.bf16.msra.mxu0 0
      %906 = vmatprep.subr.bf16.mxu0 0
      %907 = vmatpush1.bf16.msra.mxu0 0
      %908 = vmatprep.subr.bf16.mxu0 0
      %909 = vmatpush1.bf16.msra.mxu0 0
      %910 = vmatprep.subr.bf16.mxu0 0
      %911 = vmatpush1.bf16.msra.mxu0 0
      %912 = vmatprep.subr.bf16.mxu0 0
      %913 = vmatpush1.bf16.msra.mxu0 0
      %914 = vmatprep.subr.bf16.mxu0 0
      %915 = vmatpush1.bf16.msra.mxu0 0
      %916 = vmatprep.subr.bf16.mxu0 0
      %917 = vmatpush1.bf16.msra.mxu0 0
      %918 = vmatprep.mubr.bf16.mxu0 0
      %919 = vmatmul.mubr.bf16.gmra.mrb[0].mxu0 %v881
      %v920 = vpop.f32.mrb[0].mxu0
      %v921 = vadd.f32 0.0, %v920
      %v922 = vpop.f32.mrb[0].mxu0
      %v923 = vadd.f32 0.0, %v922
      %v924 = vpop.f32.mrb[0].mxu0
      %v925 = vadd.f32 0.0, %v924
      %v926 = vpop.f32.mrb[0].mxu0
      %v927 = vadd.f32 0.0, %v926
      %928 = vmatprep.mubr.bf16.mxu0 0
      %929 = vmatmul.mubr.bf16.gmra.mrb[0].mxu0 %v884
      %v930 = vpop.f32.mrb[0].mxu0
      %v931 = vadd.f32 0.0, %v930
      %v932 = vpop.f32.mrb[0].mxu0
      %v933 = vadd.f32 0.0, %v932
      %v934 = vpop.f32.mrb[0].mxu0
      %v935 = vadd.f32 0.0, %v934
      %v936 = vpop.f32.mrb[0].mxu0
      %v937 = vadd.f32 0.0, %v936
      %938 = vdwg.mxu0
      %939 = vmatprep.subr.bf16.mxu0 0
      %940 = vmatpush1.bf16.msra.mxu0 %v876
      %941 = vmatprep.subr.bf16.mxu0 0
      %942 = vmatpush1.bf16.msra.mxu0 0
      %943 = vmatprep.subr.bf16.mxu0 0
      %944 = vmatpush1.bf16.msra.mxu0 0
      %945 = vmatprep.subr.bf16.mxu0 0
      %946 = vmatpush1.bf16.msra.mxu0 0
      %947 = vmatprep.subr.bf16.mxu0 0
      %948 = vmatpush1.bf16.msra.mxu0 0
      %949 = vmatprep.subr.bf16.mxu0 0
      %950 = vmatpush1.bf16.msra.mxu0 0
      %951 = vmatprep.subr.bf16.mxu0 0
      %952 = vmatpush1.bf16.msra.mxu0 0
      %953 = vmatprep.subr.bf16.mxu0 0
      %954 = vmatpush1.bf16.msra.mxu0 0
      %955 = vmatprep.subr.bf16.mxu0 0
      %956 = vmatpush1.bf16.msra.mxu0 0
      %957 = vmatprep.subr.bf16.mxu0 0
      %958 = vmatpush1.bf16.msra.mxu0 0
      %959 = vmatprep.subr.bf16.mxu0 0
      %960 = vmatpush1.bf16.msra.mxu0 0
      %961 = vmatprep.subr.bf16.mxu0 0
      %962 = vmatpush1.bf16.msra.mxu0 0
      %963 = vmatprep.subr.bf16.mxu0 0
      %964 = vmatpush1.bf16.msra.mxu0 0
      %965 = vmatprep.subr.bf16.mxu0 0
      %966 = vmatpush1.bf16.msra.mxu0 0
      %967 = vmatprep.subr.bf16.mxu0 0
      %968 = vmatpush1.bf16.msra.mxu0 0
      %969 = vmatprep.subr.bf16.mxu0 0
      %970 = vmatpush1.bf16.msra.mxu0 0
      %971 = vmatprep.mubr.bf16.mxu0 0
      %972 = vmatmul.mubr.bf16.gmra.mrb[0].mxu0 %v881
      %v973 = vpop.f32.mrb[0].mxu0
      %v974 = vadd.f32 0.0, %v973
      %v975 = vpop.f32.mrb[0].mxu0
      %v976 = vpop.f32.mrb[0].mxu0
      %v977 = vadd.f32 0.0, %v976
      %v978 = vpop.f32.mrb[0].mxu0
      %979 = vmatprep.mubr.bf16.mxu0 0
      %980 = vmatmul.mubr.bf16.gmra.mrb[0].mxu0 %v884
      %v981 = vpop.f32.mrb[0].mxu0
      %v982 = vadd.f32 0.0, %v981
      %v983 = vpop.f32.mrb[0].mxu0
      %v984 = vpop.f32.mrb[0].mxu0
      %v985 = vadd.f32 0.0, %v984
      %v986 = vpop.f32.mrb[0].mxu0
      %987 = vdwg.mxu0
      %v988 = vadd.f32 %v838, %v921
      %v989 = vadd.f32 %v839, %v923
      %v990 = vadd.f32 %v840, %v974
      %v991 = vadd.f32 %v841, %v925
      %v992 = vadd.f32 %v842, %v927
      %v993 = vadd.f32 %v843, %v977
      %v994 = vadd.f32 %v844, %v931
      %v995 = vadd.f32 %v845, %v933
      %v996 = vadd.f32 %v846, %v982
      %v997 = vadd.f32 %v847, %v935
      %v998 = vadd.f32 %v848, %v937
      %v999 = vadd.f32 %v849, %v985
      %s1000 = scalar_lea.vmem %s1, 80
      %v1001 = vld [vmem:[%s1000] sm:$0xf]
      %v1002 = vld [vmem:[%s1000 + $0x4] sm:$0xf]
      %v1003 = vld [vmem:[%s1000 + $0x8] sm:$0xf]
      %v1004 = vld [vmem:[%s1000 + $0xc] sm:$0xf]
      %v1009 = vunpack.c.l.b16 %v1001
      %v1010 = vunpack.c.l.b16 %v1002
      %v1011 = vunpack.c.l.b16 %v1003
      %v1012 = vunpack.c.l.b16 %v1004
      %v1013 = vpack.c.b16 %v1010, %v1009
      %v1014 = vpack.c.b16 %v1012, %v1011
      %1015 = vrot.lane.b32.xlu0 %v301, 102
      %v1016 = vpop.permute.xlu0 %1015
      %1017 = vrot.lane.b32.xlu0 %v302, 102
      %v1018 = vpop.permute.xlu0 %1017
      %1019 = vrot.lane.b32.xlu0 %v303, 102
      %v1020 = vpop.permute.xlu0 %1019
      %1021 = vrot.lane.b32.xlu0 %v304, 102
      %v1022 = vpop.permute.xlu0 %1021
      %vm1023 = vcmask 834560
      %v1024 = vsel %vm1023, %v1016, %v1018
      %v1025 = vsel %vm1023, %v1018, %v1020
      %v1026 = vsel %vm1023, %v1020, %v1022
      %v1031 = vsel %vm320, %v1013, 0
      %v1034 = vsel %vm320, %v1014, 0
      %1036 = vmatprep.subr.bf16.mxu0 %v1025
      %1037 = vmatpush1.bf16.msra.mxu0 %v1024
      %1038 = vmatprep.subr.bf16.mxu0 0
      %1039 = vmatpush1.bf16.msra.mxu0 0
      %1040 = vmatprep.subr.bf16.mxu0 0
      %1041 = vmatpush1.bf16.msra.mxu0 0
      %1042 = vmatprep.subr.bf16.mxu0 0
      %1043 = vmatpush1.bf16.msra.mxu0 0
      %1044 = vmatprep.subr.bf16.mxu0 0
      %1045 = vmatpush1.bf16.msra.mxu0 0
      %1046 = vmatprep.subr.bf16.mxu0 0
      %1047 = vmatpush1.bf16.msra.mxu0 0
      %1048 = vmatprep.subr.bf16.mxu0 0
      %1049 = vmatpush1.bf16.msra.mxu0 0
      %1050 = vmatprep.subr.bf16.mxu0 0
      %1051 = vmatpush1.bf16.msra.mxu0 0
      %1052 = vmatprep.subr.bf16.mxu0 0
      %1053 = vmatpush1.bf16.msra.mxu0 0
      %1054 = vmatprep.subr.bf16.mxu0 0
      %1055 = vmatpush1.bf16.msra.mxu0 0
      %1056 = vmatprep.subr.bf16.mxu0 0
      %1057 = vmatpush1.bf16.msra.mxu0 0
      %1058 = vmatprep.subr.bf16.mxu0 0
      %1059 = vmatpush1.bf16.msra.mxu0 0
      %1060 = vmatprep.subr.bf16.mxu0 0
      %1061 = vmatpush1.bf16.msra.mxu0 0
      %1062 = vmatprep.subr.bf16.mxu0 0
      %1063 = vmatpush1.bf16.msra.mxu0 0
      %1064 = vmatprep.subr.bf16.mxu0 0
      %1065 = vmatpush1.bf16.msra.mxu0 0
      %1066 = vmatprep.subr.bf16.mxu0 0
      %1067 = vmatpush1.bf16.msra.mxu0 0
      %1068 = vmatprep.mubr.bf16.mxu0 0
      %1069 = vmatmul.mubr.bf16.gmra.mrb[0].mxu0 %v1031
      %v1070 = vpop.f32.mrb[0].mxu0
      %v1071 = vadd.f32 0.0, %v1070
      %v1072 = vpop.f32.mrb[0].mxu0
      %v1073 = vadd.f32 0.0, %v1072
      %v1074 = vpop.f32.mrb[0].mxu0
      %v1075 = vadd.f32 0.0, %v1074
      %v1076 = vpop.f32.mrb[0].mxu0
      %v1077 = vadd.f32 0.0, %v1076
      %1078 = vmatprep.mubr.bf16.mxu0 0
      %1079 = vmatmul.mubr.bf16.gmra.mrb[0].mxu0 %v1034
      %v1080 = vpop.f32.mrb[0].mxu0
      %v1081 = vadd.f32 0.0, %v1080
      %v1082 = vpop.f32.mrb[0].mxu0
      %v1083 = vadd.f32 0.0, %v1082
      %v1084 = vpop.f32.mrb[0].mxu0
      %v1085 = vadd.f32 0.0, %v1084
      %v1086 = vpop.f32.mrb[0].mxu0
      %v1087 = vadd.f32 0.0, %v1086
      %1088 = vdwg.mxu0
      %1089 = vmatprep.subr.bf16.mxu0 0
      %1090 = vmatpush1.bf16.msra.mxu0 %v1026
      %1091 = vmatprep.subr.bf16.mxu0 0
      %1092 = vmatpush1.bf16.msra.mxu0 0
      %1093 = vmatprep.subr.bf16.mxu0 0
      %1094 = vmatpush1.bf16.msra.mxu0 0
      %1095 = vmatprep.subr.bf16.mxu0 0
      %1096 = vmatpush1.bf16.msra.mxu0 0
      %1097 = vmatprep.subr.bf16.mxu0 0
      %1098 = vmatpush1.bf16.msra.mxu0 0
      %1099 = vmatprep.subr.bf16.mxu0 0
      %1100 = vmatpush1.bf16.msra.mxu0 0
      %1101 = vmatprep.subr.bf16.mxu0 0
      %1102 = vmatpush1.bf16.msra.mxu0 0
      %1103 = vmatprep.subr.bf16.mxu0 0
      %1104 = vmatpush1.bf16.msra.mxu0 0
      %1105 = vmatprep.subr.bf16.mxu0 0
      %1106 = vmatpush1.bf16.msra.mxu0 0
      %1107 = vmatprep.subr.bf16.mxu0 0
      %1108 = vmatpush1.bf16.msra.mxu0 0
      %1109 = vmatprep.subr.bf16.mxu0 0
      %1110 = vmatpush1.bf16.msra.mxu0 0
      %1111 = vmatprep.subr.bf16.mxu0 0
      %1112 = vmatpush1.bf16.msra.mxu0 0
      %1113 = vmatprep.subr.bf16.mxu0 0
      %1114 = vmatpush1.bf16.msra.mxu0 0
      %1115 = vmatprep.subr.bf16.mxu0 0
      %1116 = vmatpush1.bf16.msra.mxu0 0
      %1117 = vmatprep.subr.bf16.mxu0 0
      %1118 = vmatpush1.bf16.msra.mxu0 0
      %1119 = vmatprep.subr.bf16.mxu0 0
      %1120 = vmatpush1.bf16.msra.mxu0 0
      %1121 = vmatprep.mubr.bf16.mxu0 0
      %1122 = vmatmul.mubr.bf16.gmra.mrb[0].mxu0 %v1031
      %v1123 = vpop.f32.mrb[0].mxu0
      %v1124 = vadd.f32 0.0, %v1123
      %v1125 = vpop.f32.mrb[0].mxu0
      %v1126 = vpop.f32.mrb[0].mxu0
      %v1127 = vadd.f32 0.0, %v1126
      %v1128 = vpop.f32.mrb[0].mxu0
      %1129 = vmatprep.mubr.bf16.mxu0 0
      %1130 = vmatmul.mubr.bf16.gmra.mrb[0].mxu0 %v1034
      %v1131 = vpop.f32.mrb[0].mxu0
      %v1132 = vadd.f32 0.0, %v1131
      %v1133 = vpop.f32.mrb[0].mxu0
      %v1134 = vpop.f32.mrb[0].mxu0
      %v1135 = vadd.f32 0.0, %v1134
      %v1136 = vpop.f32.mrb[0].mxu0
      %1137 = vdwg.mxu0
      %v1138 = vadd.f32 %v988, %v1071
      %v1139 = vadd.f32 %v989, %v1073
      %v1140 = vadd.f32 %v990, %v1124
      %v1141 = vadd.f32 %v991, %v1075
      %v1142 = vadd.f32 %v992, %v1077
      %v1143 = vadd.f32 %v993, %v1127
      %v1144 = vadd.f32 %v994, %v1081
      %v1145 = vadd.f32 %v995, %v1083
      %v1146 = vadd.f32 %v996, %v1132
      %v1147 = vadd.f32 %v997, %v1085
      %v1148 = vadd.f32 %v998, %v1087
      %v1149 = vadd.f32 %v999, %v1135
      %s1150 = scalar_lea.vmem %s1, 96
      %v1151 = vld [vmem:[%s1150] sm:$0xf]
      %v1152 = vld [vmem:[%s1150 + $0x4] sm:$0xf]
      %v1153 = vld [vmem:[%s1150 + $0x8] sm:$0xf]
      %v1154 = vld [vmem:[%s1150 + $0xc] sm:$0xf]
      %v1159 = vunpack.c.l.b16 %v1151
      %v1160 = vunpack.c.l.b16 %v1152
      %v1161 = vunpack.c.l.b16 %v1153
      %v1162 = vunpack.c.l.b16 %v1154
      %v1163 = vpack.c.b16 %v1160, %v1159
      %v1164 = vpack.c.b16 %v1162, %v1161
      %1165 = vrot.lane.b32.xlu0 %v301, 80
      %v1166 = vpop.permute.xlu0 %1165
      %1167 = vrot.lane.b32.xlu0 %v302, 80
      %v1168 = vpop.permute.xlu0 %1167
      %1169 = vrot.lane.b32.xlu0 %v303, 80
      %v1170 = vpop.permute.xlu0 %1169
      %1171 = vrot.lane.b32.xlu0 %v304, 80
      %v1172 = vpop.permute.xlu0 %1171
      %vm1173 = vcmask 654336
      %v1174 = vsel %vm1173, %v1166, %v1168
      %v1175 = vsel %vm1173, %v1168, %v1170
      %v1176 = vsel %vm1173, %v1170, %v1172
      %v1181 = vsel %vm320, %v1163, 0
      %v1184 = vsel %vm320, %v1164, 0
      %1186 = vmatprep.subr.bf16.mxu0 %v1175
      %1187 = vmatpush1.bf16.msra.mxu0 %v1174
      %1188 = vmatprep.subr.bf16.mxu0 0
      %1189 = vmatpush1.bf16.msra.mxu0 0
      %1190 = vmatprep.subr.bf16.mxu0 0
      %1191 = vmatpush1.bf16.msra.mxu0 0
      %1192 = vmatprep.subr.bf16.mxu0 0
      %1193 = vmatpush1.bf16.msra.mxu0 0
      %1194 = vmatprep.subr.bf16.mxu0 0
      %1195 = vmatpush1.bf16.msra.mxu0 0
      %1196 = vmatprep.subr.bf16.mxu0 0
      %1197 = vmatpush1.bf16.msra.mxu0 0
      %1198 = vmatprep.subr.bf16.mxu0 0
      %1199 = vmatpush1.bf16.msra.mxu0 0
      %1200 = vmatprep.subr.bf16.mxu0 0
      %1201 = vmatpush1.bf16.msra.mxu0 0
      %1202 = vmatprep.subr.bf16.mxu0 0
      %1203 = vmatpush1.bf16.msra.mxu0 0
      %1204 = vmatprep.subr.bf16.mxu0 0
      %1205 = vmatpush1.bf16.msra.mxu0 0
      %1206 = vmatprep.subr.bf16.mxu0 0
      %1207 = vmatpush1.bf16.msra.mxu0 0
      %1208 = vmatprep.subr.bf16.mxu0 0
      %1209 = vmatpush1.bf16.msra.mxu0 0
      %1210 = vmatprep.subr.bf16.mxu0 0
      %1211 = vmatpush1.bf16.msra.mxu0 0
      %1212 = vmatprep.subr.bf16.mxu0 0
      %1213 = vmatpush1.bf16.msra.mxu0 0
      %1214 = vmatprep.subr.bf16.mxu0 0
      %1215 = vmatpush1.bf16.msra.mxu0 0
      %1216 = vmatprep.subr.bf16.mxu0 0
      %1217 = vmatpush1.bf16.msra.mxu0 0
      %1218 = vmatprep.mubr.bf16.mxu0 0
      %1219 = vmatmul.mubr.bf16.gmra.mrb[0].mxu0 %v1181
      %v1220 = vpop.f32.mrb[0].mxu0
      %v1221 = vadd.f32 0.0, %v1220
      %v1222 = vpop.f32.mrb[0].mxu0
      %v1223 = vadd.f32 0.0, %v1222
      %v1224 = vpop.f32.mrb[0].mxu0
      %v1225 = vadd.f32 0.0, %v1224
      %v1226 = vpop.f32.mrb[0].mxu0
      %v1227 = vadd.f32 0.0, %v1226
      %1228 = vmatprep.mubr.bf16.mxu0 0
      %1229 = vmatmul.mubr.bf16.gmra.mrb[0].mxu0 %v1184
      %v1230 = vpop.f32.mrb[0].mxu0
      %v1231 = vadd.f32 0.0, %v1230
      %v1232 = vpop.f32.mrb[0].mxu0
      %v1233 = vadd.f32 0.0, %v1232
      %v1234 = vpop.f32.mrb[0].mxu0
      %v1235 = vadd.f32 0.0, %v1234
      %v1236 = vpop.f32.mrb[0].mxu0
      %v1237 = vadd.f32 0.0, %v1236
      %1238 = vdwg.mxu0
      %1239 = vmatprep.subr.bf16.mxu0 0
      %1240 = vmatpush1.bf16.msra.mxu0 %v1176
      %1241 = vmatprep.subr.bf16.mxu0 0
      %1242 = vmatpush1.bf16.msra.mxu0 0
      %1243 = vmatprep.subr.bf16.mxu0 0
      %1244 = vmatpush1.bf16.msra.mxu0 0
      %1245 = vmatprep.subr.bf16.mxu0 0
      %1246 = vmatpush1.bf16.msra.mxu0 0
      %1247 = vmatprep.subr.bf16.mxu0 0
      %1248 = vmatpush1.bf16.msra.mxu0 0
      %1249 = vmatprep.subr.bf16.mxu0 0
      %1250 = vmatpush1.bf16.msra.mxu0 0
      %1251 = vmatprep.subr.bf16.mxu0 0
      %1252 = vmatpush1.bf16.msra.mxu0 0
      %1253 = vmatprep.subr.bf16.mxu0 0
      %1254 = vmatpush1.bf16.msra.mxu0 0
      %1255 = vmatprep.subr.bf16.mxu0 0
      %1256 = vmatpush1.bf16.msra.mxu0 0
      %1257 = vmatprep.subr.bf16.mxu0 0
      %1258 = vmatpush1.bf16.msra.mxu0 0
      %1259 = vmatprep.subr.bf16.mxu0 0
      %1260 = vmatpush1.bf16.msra.mxu0 0
      %1261 = vmatprep.subr.bf16.mxu0 0
      %1262 = vmatpush1.bf16.msra.mxu0 0
      %1263 = vmatprep.subr.bf16.mxu0 0
      %1264 = vmatpush1.bf16.msra.mxu0 0
      %1265 = vmatprep.subr.bf16.mxu0 0
      %1266 = vmatpush1.bf16.msra.mxu0 0
      %1267 = vmatprep.subr.bf16.mxu0 0
      %1268 = vmatpush1.bf16.msra.mxu0 0
      %1269 = vmatprep.subr.bf16.mxu0 0
      %1270 = vmatpush1.bf16.msra.mxu0 0
      %1271 = vmatprep.mubr.bf16.mxu0 0
      %1272 = vmatmul.mubr.bf16.gmra.mrb[0].mxu0 %v1181
      %v1273 = vpop.f32.mrb[0].mxu0
      %v1274 = vadd.f32 0.0, %v1273
      %v1275 = vpop.f32.mrb[0].mxu0
      %v1276 = vpop.f32.mrb[0].mxu0
      %v1277 = vadd.f32 0.0, %v1276
      %v1278 = vpop.f32.mrb[0].mxu0
      %1279 = vmatprep.mubr.bf16.mxu0 0
      %1280 = vmatmul.mubr.bf16.gmra.mrb[0].mxu0 %v1184
      %v1281 = vpop.f32.mrb[0].mxu0
      %v1282 = vadd.f32 0.0, %v1281
      %v1283 = vpop.f32.mrb[0].mxu0
      %v1284 = vpop.f32.mrb[0].mxu0
      %v1285 = vadd.f32 0.0, %v1284
      %v1286 = vpop.f32.mrb[0].mxu0
      %1287 = vdwg.mxu0
      %v1288 = vadd.f32 %v1138, %v1221
      %v1289 = vadd.f32 %v1139, %v1223
      %v1290 = vadd.f32 %v1140, %v1274
      %v1291 = vadd.f32 %v1141, %v1225
      %v1292 = vadd.f32 %v1142, %v1227
      %v1293 = vadd.f32 %v1143, %v1277
      %v1294 = vadd.f32 %v1144, %v1231
      %v1295 = vadd.f32 %v1145, %v1233
      %v1296 = vadd.f32 %v1146, %v1282
      %v1297 = vadd.f32 %v1147, %v1235
      %v1298 = vadd.f32 %v1148, %v1237
      %v1299 = vadd.f32 %v1149, %v1285
      %s1300 = scalar_lea.vmem %s1, 112
      %v1301 = vld [vmem:[%s1300] sm:$0xf]
      %v1302 = vld [vmem:[%s1300 + $0x4] sm:$0xf]
      %v1303 = vld [vmem:[%s1300 + $0x8] sm:$0xf]
      %v1304 = vld [vmem:[%s1300 + $0xc] sm:$0xf]
      %v1309 = vunpack.c.l.b16 %v1301
      %v1310 = vunpack.c.l.b16 %v1302
      %v1311 = vunpack.c.l.b16 %v1303
      %v1312 = vunpack.c.l.b16 %v1304
      %v1313 = vpack.c.b16 %v1310, %v1309
      %v1314 = vpack.c.b16 %v1312, %v1311
      %1315 = vrot.lane.b32.xlu0 %v301, 79
      %v1316 = vpop.permute.xlu0 %1315
      %1317 = vrot.lane.b32.xlu0 %v302, 79
      %v1318 = vpop.permute.xlu0 %1317
      %1319 = vrot.lane.b32.xlu0 %v303, 79
      %v1320 = vpop.permute.xlu0 %1319
      %1321 = vrot.lane.b32.xlu0 %v304, 79
      %v1322 = vpop.permute.xlu0 %1321
      %vm1323 = vcmask 646144
      %v1324 = vsel %vm1323, %v1316, %v1318
      %v1325 = vsel %vm1323, %v1318, %v1320
      %v1326 = vsel %vm1323, %v1320, %v1322
      %v1331 = vsel %vm320, %v1313, 0
      %v1334 = vsel %vm320, %v1314, 0
      %1336 = vmatprep.subr.bf16.mxu0 %v1325
      %1337 = vmatpush1.bf16.msra.mxu0 %v1324
      %1338 = vmatprep.subr.bf16.mxu0 0
      %1339 = vmatpush1.bf16.msra.mxu0 0
      %1340 = vmatprep.subr.bf16.mxu0 0
      %1341 = vmatpush1.bf16.msra.mxu0 0
      %1342 = vmatprep.subr.bf16.mxu0 0
      %1343 = vmatpush1.bf16.msra.mxu0 0
      %1344 = vmatprep.subr.bf16.mxu0 0
      %1345 = vmatpush1.bf16.msra.mxu0 0
      %1346 = vmatprep.subr.bf16.mxu0 0
      %1347 = vmatpush1.bf16.msra.mxu0 0
      %1348 = vmatprep.subr.bf16.mxu0 0
      %1349 = vmatpush1.bf16.msra.mxu0 0
      %1350 = vmatprep.subr.bf16.mxu0 0
      %1351 = vmatpush1.bf16.msra.mxu0 0
      %1352 = vmatprep.subr.bf16.mxu0 0
      %1353 = vmatpush1.bf16.msra.mxu0 0
      %1354 = vmatprep.subr.bf16.mxu0 0
      %1355 = vmatpush1.bf16.msra.mxu0 0
      %1356 = vmatprep.subr.bf16.mxu0 0
      %1357 = vmatpush1.bf16.msra.mxu0 0
      %1358 = vmatprep.subr.bf16.mxu0 0
      %1359 = vmatpush1.bf16.msra.mxu0 0
      %1360 = vmatprep.subr.bf16.mxu0 0
      %1361 = vmatpush1.bf16.msra.mxu0 0
      %1362 = vmatprep.subr.bf16.mxu0 0
      %1363 = vmatpush1.bf16.msra.mxu0 0
      %1364 = vmatprep.subr.bf16.mxu0 0
      %1365 = vmatpush1.bf16.msra.mxu0 0
      %1366 = vmatprep.subr.bf16.mxu0 0
      %1367 = vmatpush1.bf16.msra.mxu0 0
      %1368 = vmatprep.mubr.bf16.mxu0 0
      %1369 = vmatmul.mubr.bf16.gmra.mrb[0].mxu0 %v1331
      %v1370 = vpop.f32.mrb[0].mxu0
      %v1371 = vadd.f32 0.0, %v1370
      %v1372 = vpop.f32.mrb[0].mxu0
      %v1373 = vadd.f32 0.0, %v1372
      %v1374 = vpop.f32.mrb[0].mxu0
      %v1375 = vadd.f32 0.0, %v1374
      %v1376 = vpop.f32.mrb[0].mxu0
      %v1377 = vadd.f32 0.0, %v1376
      %1378 = vmatprep.mubr.bf16.mxu0 0
      %1379 = vmatmul.mubr.bf16.gmra.mrb[0].mxu0 %v1334
      %v1380 = vpop.f32.mrb[0].mxu0
      %v1381 = vadd.f32 0.0, %v1380
      %v1382 = vpop.f32.mrb[0].mxu0
      %v1383 = vadd.f32 0.0, %v1382
      %v1384 = vpop.f32.mrb[0].mxu0
      %v1385 = vadd.f32 0.0, %v1384
      %v1386 = vpop.f32.mrb[0].mxu0
      %v1387 = vadd.f32 0.0, %v1386
      %1388 = vdwg.mxu0
      %1389 = vmatprep.subr.bf16.mxu0 0
      %1390 = vmatpush1.bf16.msra.mxu0 %v1326
      %1391 = vmatprep.subr.bf16.mxu0 0
      %1392 = vmatpush1.bf16.msra.mxu0 0
      %1393 = vmatprep.subr.bf16.mxu0 0
      %1394 = vmatpush1.bf16.msra.mxu0 0
      %1395 = vmatprep.subr.bf16.mxu0 0
      %1396 = vmatpush1.bf16.msra.mxu0 0
      %1397 = vmatprep.subr.bf16.mxu0 0
      %1398 = vmatpush1.bf16.msra.mxu0 0
      %1399 = vmatprep.subr.bf16.mxu0 0
      %1400 = vmatpush1.bf16.msra.mxu0 0
      %1401 = vmatprep.subr.bf16.mxu0 0
      %1402 = vmatpush1.bf16.msra.mxu0 0
      %1403 = vmatprep.subr.bf16.mxu0 0
      %1404 = vmatpush1.bf16.msra.mxu0 0
      %1405 = vmatprep.subr.bf16.mxu0 0
      %1406 = vmatpush1.bf16.msra.mxu0 0
      %1407 = vmatprep.subr.bf16.mxu0 0
      %1408 = vmatpush1.bf16.msra.mxu0 0
      %1409 = vmatprep.subr.bf16.mxu0 0
      %1410 = vmatpush1.bf16.msra.mxu0 0
      %1411 = vmatprep.subr.bf16.mxu0 0
      %1412 = vmatpush1.bf16.msra.mxu0 0
      %1413 = vmatprep.subr.bf16.mxu0 0
      %1414 = vmatpush1.bf16.msra.mxu0 0
      %1415 = vmatprep.subr.bf16.mxu0 0
      %1416 = vmatpush1.bf16.msra.mxu0 0
      %1417 = vmatprep.subr.bf16.mxu0 0
      %1418 = vmatpush1.bf16.msra.mxu0 0
      %1419 = vmatprep.subr.bf16.mxu0 0
      %1420 = vmatpush1.bf16.msra.mxu0 0
      %1421 = vmatprep.mubr.bf16.mxu0 0
      %1422 = vmatmul.mubr.bf16.gmra.mrb[0].mxu0 %v1331
      %v1423 = vpop.f32.mrb[0].mxu0
      %v1424 = vadd.f32 0.0, %v1423
      %v1425 = vpop.f32.mrb[0].mxu0
      %v1426 = vpop.f32.mrb[0].mxu0
      %v1427 = vadd.f32 0.0, %v1426
      %v1428 = vpop.f32.mrb[0].mxu0
      %1429 = vmatprep.mubr.bf16.mxu0 0
      %1430 = vmatmul.mubr.bf16.gmra.mrb[0].mxu0 %v1334
      %v1431 = vpop.f32.mrb[0].mxu0
      %v1432 = vadd.f32 0.0, %v1431
      %v1433 = vpop.f32.mrb[0].mxu0
      %v1434 = vpop.f32.mrb[0].mxu0
      %v1435 = vadd.f32 0.0, %v1434
      %v1436 = vpop.f32.mrb[0].mxu0
      %1437 = vdwg.mxu0
      %v1438 = vadd.f32 %v1288, %v1371
      %v1439 = vadd.f32 %v1289, %v1373
      %v1440 = vadd.f32 %v1290, %v1424
      %v1441 = vadd.f32 %v1291, %v1375
      %v1442 = vadd.f32 %v1292, %v1377
      %v1443 = vadd.f32 %v1293, %v1427
      %v1444 = vadd.f32 %v1294, %v1381
      %v1445 = vadd.f32 %v1295, %v1383
      %v1446 = vadd.f32 %v1296, %v1432
      %v1447 = vadd.f32 %v1297, %v1385
      %v1448 = vadd.f32 %v1298, %v1387
      %v1449 = vadd.f32 %v1299, %v1435
      %s1450 = scalar_lea.vmem %s1, 128
      %v1451 = vld [vmem:[%s1450] sm:$0xf]
      %v1452 = vld [vmem:[%s1450 + $0x4] sm:$0xf]
      %v1453 = vld [vmem:[%s1450 + $0x8] sm:$0xf]
      %v1454 = vld [vmem:[%s1450 + $0xc] sm:$0xf]
      %v1459 = vunpack.c.l.b16 %v1451
      %v1460 = vunpack.c.l.b16 %v1452
      %v1461 = vunpack.c.l.b16 %v1453
      %v1462 = vunpack.c.l.b16 %v1454
      %v1463 = vpack.c.b16 %v1460, %v1459
      %v1464 = vpack.c.b16 %v1462, %v1461
      %1465 = vrot.lane.b32.xlu0 %v301, 78
      %v1466 = vpop.permute.xlu0 %1465
      %1467 = vrot.lane.b32.xlu0 %v302, 78
      %v1468 = vpop.permute.xlu0 %1467
      %1469 = vrot.lane.b32.xlu0 %v303, 78
      %v1470 = vpop.permute.xlu0 %1469
      %1471 = vrot.lane.b32.xlu0 %v304, 78
      %v1472 = vpop.permute.xlu0 %1471
      %vm1473 = vcmask 637952
      %v1474 = vsel %vm1473, %v1466, %v1468
      %v1475 = vsel %vm1473, %v1468, %v1470
      %v1476 = vsel %vm1473, %v1470, %v1472
      %v1481 = vsel %vm320, %v1463, 0
      %v1484 = vsel %vm320, %v1464, 0
      %1486 = vmatprep.subr.bf16.mxu0 %v1475
      %1487 = vmatpush1.bf16.msra.mxu0 %v1474
      %1488 = vmatprep.subr.bf16.mxu0 0
      %1489 = vmatpush1.bf16.msra.mxu0 0
      %1490 = vmatprep.subr.bf16.mxu0 0
      %1491 = vmatpush1.bf16.msra.mxu0 0
      %1492 = vmatprep.subr.bf16.mxu0 0
      %1493 = vmatpush1.bf16.msra.mxu0 0
      %1494 = vmatprep.subr.bf16.mxu0 0
      %1495 = vmatpush1.bf16.msra.mxu0 0
      %1496 = vmatprep.subr.bf16.mxu0 0
      %1497 = vmatpush1.bf16.msra.mxu0 0
      %1498 = vmatprep.subr.bf16.mxu0 0
      %1499 = vmatpush1.bf16.msra.mxu0 0
      %1500 = vmatprep.subr.bf16.mxu0 0
      %1501 = vmatpush1.bf16.msra.mxu0 0
      %1502 = vmatprep.subr.bf16.mxu0 0
      %1503 = vmatpush1.bf16.msra.mxu0 0
      %1504 = vmatprep.subr.bf16.mxu0 0
      %1505 = vmatpush1.bf16.msra.mxu0 0
      %1506 = vmatprep.subr.bf16.mxu0 0
      %1507 = vmatpush1.bf16.msra.mxu0 0
      %1508 = vmatprep.subr.bf16.mxu0 0
      %1509 = vmatpush1.bf16.msra.mxu0 0
      %1510 = vmatprep.subr.bf16.mxu0 0
      %1511 = vmatpush1.bf16.msra.mxu0 0
      %1512 = vmatprep.subr.bf16.mxu0 0
      %1513 = vmatpush1.bf16.msra.mxu0 0
      %1514 = vmatprep.subr.bf16.mxu0 0
      %1515 = vmatpush1.bf16.msra.mxu0 0
      %1516 = vmatprep.subr.bf16.mxu0 0
      %1517 = vmatpush1.bf16.msra.mxu0 0
      %1518 = vmatprep.mubr.bf16.mxu0 0
      %1519 = vmatmul.mubr.bf16.gmra.mrb[0].mxu0 %v1481
      %v1520 = vpop.f32.mrb[0].mxu0
      %v1521 = vadd.f32 0.0, %v1520
      %v1522 = vpop.f32.mrb[0].mxu0
      %v1523 = vadd.f32 0.0, %v1522
      %v1524 = vpop.f32.mrb[0].mxu0
      %v1525 = vadd.f32 0.0, %v1524
      %v1526 = vpop.f32.mrb[0].mxu0
      %v1527 = vadd.f32 0.0, %v1526
      %1528 = vmatprep.mubr.bf16.mxu0 0
      %1529 = vmatmul.mubr.bf16.gmra.mrb[0].mxu0 %v1484
      %v1530 = vpop.f32.mrb[0].mxu0
      %v1531 = vadd.f32 0.0, %v1530
      %v1532 = vpop.f32.mrb[0].mxu0
      %v1533 = vadd.f32 0.0, %v1532
      %v1534 = vpop.f32.mrb[0].mxu0
      %v1535 = vadd.f32 0.0, %v1534
      %v1536 = vpop.f32.mrb[0].mxu0
      %v1537 = vadd.f32 0.0, %v1536
      %1538 = vdwg.mxu0
      %1539 = vmatprep.subr.bf16.mxu0 0
      %1540 = vmatpush1.bf16.msra.mxu0 %v1476
      %1541 = vmatprep.subr.bf16.mxu0 0
      %1542 = vmatpush1.bf16.msra.mxu0 0
      %1543 = vmatprep.subr.bf16.mxu0 0
      %1544 = vmatpush1.bf16.msra.mxu0 0
      %1545 = vmatprep.subr.bf16.mxu0 0
      %1546 = vmatpush1.bf16.msra.mxu0 0
      %1547 = vmatprep.subr.bf16.mxu0 0
      %1548 = vmatpush1.bf16.msra.mxu0 0
      %1549 = vmatprep.subr.bf16.mxu0 0
      %1550 = vmatpush1.bf16.msra.mxu0 0
      %1551 = vmatprep.subr.bf16.mxu0 0
      %1552 = vmatpush1.bf16.msra.mxu0 0
      %1553 = vmatprep.subr.bf16.mxu0 0
      %1554 = vmatpush1.bf16.msra.mxu0 0
      %1555 = vmatprep.subr.bf16.mxu0 0
      %1556 = vmatpush1.bf16.msra.mxu0 0
      %1557 = vmatprep.subr.bf16.mxu0 0
      %1558 = vmatpush1.bf16.msra.mxu0 0
      %1559 = vmatprep.subr.bf16.mxu0 0
      %1560 = vmatpush1.bf16.msra.mxu0 0
      %1561 = vmatprep.subr.bf16.mxu0 0
      %1562 = vmatpush1.bf16.msra.mxu0 0
      %1563 = vmatprep.subr.bf16.mxu0 0
      %1564 = vmatpush1.bf16.msra.mxu0 0
      %1565 = vmatprep.subr.bf16.mxu0 0
      %1566 = vmatpush1.bf16.msra.mxu0 0
      %1567 = vmatprep.subr.bf16.mxu0 0
      %1568 = vmatpush1.bf16.msra.mxu0 0
      %1569 = vmatprep.subr.bf16.mxu0 0
      %1570 = vmatpush1.bf16.msra.mxu0 0
      %1571 = vmatprep.mubr.bf16.mxu0 0
      %1572 = vmatmul.mubr.bf16.gmra.mrb[0].mxu0 %v1481
      %v1573 = vpop.f32.mrb[0].mxu0
      %v1574 = vadd.f32 0.0, %v1573
      %v1575 = vpop.f32.mrb[0].mxu0
      %v1576 = vpop.f32.mrb[0].mxu0
      %v1577 = vadd.f32 0.0, %v1576
      %v1578 = vpop.f32.mrb[0].mxu0
      %1579 = vmatprep.mubr.bf16.mxu0 0
      %1580 = vmatmul.mubr.bf16.gmra.mrb[0].mxu0 %v1484
      %v1581 = vpop.f32.mrb[0].mxu0
      %v1582 = vadd.f32 0.0, %v1581
      %v1583 = vpop.f32.mrb[0].mxu0
      %v1584 = vpop.f32.mrb[0].mxu0
      %v1585 = vadd.f32 0.0, %v1584
      %v1586 = vpop.f32.mrb[0].mxu0
      %1587 = vdwg.mxu0
      %v1588 = vadd.f32 %v1438, %v1521
      %v1589 = vadd.f32 %v1439, %v1523
      %v1590 = vadd.f32 %v1440, %v1574
      %v1591 = vadd.f32 %v1441, %v1525
      %v1592 = vadd.f32 %v1442, %v1527
      %v1593 = vadd.f32 %v1443, %v1577
      %v1594 = vadd.f32 %v1444, %v1531
      %v1595 = vadd.f32 %v1445, %v1533
      %v1596 = vadd.f32 %v1446, %v1582
      %v1597 = vadd.f32 %v1447, %v1535
      %v1598 = vadd.f32 %v1448, %v1537
      %v1599 = vadd.f32 %v1449, %v1585
      %v1600 = vld [vmem:[%s2] sm:$0xff]
      %v1601 = vld [vmem:[%s2 + $0x8] sm:$0xff]
      %v1602 = vld [vmem:[%s2 + $0x10] sm:$0xff]
      %v1603 = vld [vmem:[%s2 + $0x18] sm:$0xff]
      %1605 = vset.pattern.permute.xlu0 0
      %1606 = vperm.xlu0 %1605, %v1600
      %v1607 = vpop.permute.xlu0 %1606
      %1610 = vset.pattern.permute.xlu0 0
      %1611 = vperm.xlu0 %1610, %v1601
      %v1612 = vpop.permute.xlu0 %1611
      %1615 = vset.pattern.permute.xlu0 0
      %1616 = vperm.xlu0 %1615, %v1602
      %v1617 = vpop.permute.xlu0 %1616
      %1620 = vset.pattern.permute.xlu0 0
      %1621 = vperm.xlu0 %1620, %v1603
      %v1622 = vpop.permute.xlu0 %1621
      %v1624 = vadd.f32 %v1588, %v1607
      %v1625 = vadd.f32 %v1589, %v1607
      %v1626 = vadd.f32 %v1590, %v1607
      %v1627 = vadd.f32 %v1591, %v1612
      %v1628 = vadd.f32 %v1592, %v1612
      %v1629 = vadd.f32 %v1593, %v1612
      %v1630 = vadd.f32 %v1594, %v1617
      %v1631 = vadd.f32 %v1595, %v1617
      %v1632 = vadd.f32 %v1596, %v1617
      %v1633 = vadd.f32 %v1597, %v1622
      %v1634 = vadd.f32 %v1598, %v1622
      %v1635 = vadd.f32 %v1599, %v1622
      %v1636 = vmax.f32 %v1624, 0.0
      %v1637 = vmax.f32 %v1625, 0.0
      %v1638 = vmax.f32 %v1626, 0.0
      %v1639 = vmax.f32 %v1627, 0.0
      %v1640 = vmax.f32 %v1628, 0.0
      %v1641 = vmax.f32 %v1629, 0.0
      %v1642 = vmax.f32 %v1630, 0.0
      %v1643 = vmax.f32 %v1631, 0.0
      %v1644 = vmax.f32 %v1632, 0.0
      %v1645 = vmax.f32 %v1633, 0.0
      %v1646 = vmax.f32 %v1634, 0.0
      %v1647 = vmax.f32 %v1635, 0.0
      %v1648 = vld [vmem:[%s3] sm:$0xf]
      %v1649 = vld [vmem:[%s3 + $0x4] sm:$0xf]
      %v1650 = vld [vmem:[%s3 + $0x8] sm:$0xf]
      %v1651 = vld [vmem:[%s3 + $0xc] sm:$0xf]
      %v1652 = vld [vmem:[%s3 + $0x10] sm:$0xf]
      %v1653 = vld [vmem:[%s3 + $0x14] sm:$0xf]
      %v1654 = vld [vmem:[%s3 + $0x18] sm:$0xf]
      %v1655 = vpack.c.bf16 %v1639, %v1636
      %v1656 = vpack.c.bf16 %v1640, %v1637
      %v1657 = vpack.c.bf16 %v1641, %v1638
      %v1658 = vpack.c.bf16 %v1645, %v1642
      %v1659 = vpack.c.bf16 %v1646, %v1643
      %v1660 = vpack.c.bf16 %v1647, %v1644
      %v1661 = vld [vmem:[%s4] sm:$0xff]
      %v1662 = vld [vmem:[%s4 + $0x8] sm:$0xff]
      %v1663 = vld [vmem:[%s4 + $0x10] sm:$0xff]
      %v1664 = vld [vmem:[%s4 + $0x18] sm:$0xff]
      %v1665 = vld [vmem:[%s4 + $0x20] sm:$0xff]
      %v1666 = vld [vmem:[%s4 + $0x28] sm:$0xff]
      %v1667 = vld [vmem:[%s4 + $0x30] sm:$0xff]
      %1669 = vset.pattern.permute.xlu0 0
      %1670 = vperm.xlu0 %1669, %v1661
      %v1671 = vpop.permute.xlu0 %1670
      %1674 = vset.pattern.permute.xlu0 0
      %1675 = vperm.xlu0 %1674, %v1662
      %v1676 = vpop.permute.xlu0 %1675
      %1679 = vset.pattern.permute.xlu0 0
      %1680 = vperm.xlu0 %1679, %v1663
      %v1681 = vpop.permute.xlu0 %1680
      %1684 = vset.pattern.permute.xlu0 0
      %1685 = vperm.xlu0 %1684, %v1664
      %v1686 = vpop.permute.xlu0 %1685
      %1689 = vset.pattern.permute.xlu0 0
      %1690 = vperm.xlu0 %1689, %v1665
      %v1691 = vpop.permute.xlu0 %1690
      %1694 = vset.pattern.permute.xlu0 0
      %1695 = vperm.xlu0 %1694, %v1666
      %v1696 = vpop.permute.xlu0 %1695
      %1699 = vset.pattern.permute.xlu0 0
      %1700 = vperm.xlu0 %1699, %v1667
      %v1701 = vpop.permute.xlu0 %1700
      %v1710 = vunpack.c.l.b16 %v1648
      %v1711 = vunpack.c.l.b16 %v1649
      %v1712 = vunpack.c.l.b16 %v1650
      %v1713 = vunpack.c.l.b16 %v1651
      %v1714 = vunpack.c.l.b16 %v1652
      %v1715 = vunpack.c.l.b16 %v1653
      %v1716 = vunpack.c.l.b16 %v1654
      %v1717 = vpack.c.b16 %v1711, %v1710
      %v1718 = vpack.c.b16 %v1713, %v1712
      %v1719 = vpack.c.b16 %v1715, %v1714
      %v1720 = vpack.c.b16 %v1716, %v1716
      %vm1721 = vcmask 261120
      %v1723 = vsel %vm1721, %v1717, 0
      %v1726 = vsel %vm1721, %v1718, 0
      %v1729 = vsel %vm1721, %v1719, 0
      %v1732 = vsel %vm1721, %v1720, 0
      %1734 = vmatprep.subr.bf16.mxu0 %v1656
      %1735 = vmatpush1.bf16.msra.mxu0 %v1655
      %1736 = vmatprep.subr.bf16.mxu0 %v1659
      %1737 = vmatpush1.bf16.msra.mxu0 %v1658
      %1738 = vmatprep.subr.bf16.mxu0 0
      %1739 = vmatpush1.bf16.msra.mxu0 0
      %1740 = vmatprep.subr.bf16.mxu0 0
      %1741 = vmatpush1.bf16.msra.mxu0 0
      %1742 = vmatprep.subr.bf16.mxu0 0
      %1743 = vmatpush1.bf16.msra.mxu0 0
      %1744 = vmatprep.subr.bf16.mxu0 0
      %1745 = vmatpush1.bf16.msra.mxu0 0
      %1746 = vmatprep.subr.bf16.mxu0 0
      %1747 = vmatpush1.bf16.msra.mxu0 0
      %1748 = vmatprep.subr.bf16.mxu0 0
      %1749 = vmatpush1.bf16.msra.mxu0 0
      %1750 = vmatprep.subr.bf16.mxu0 0
      %1751 = vmatpush1.bf16.msra.mxu0 0
      %1752 = vmatprep.subr.bf16.mxu0 0
      %1753 = vmatpush1.bf16.msra.mxu0 0
      %1754 = vmatprep.subr.bf16.mxu0 0
      %1755 = vmatpush1.bf16.msra.mxu0 0
      %1756 = vmatprep.subr.bf16.mxu0 0
      %1757 = vmatpush1.bf16.msra.mxu0 0
      %1758 = vmatprep.subr.bf16.mxu0 0
      %1759 = vmatpush1.bf16.msra.mxu0 0
      %1760 = vmatprep.subr.bf16.mxu0 0
      %1761 = vmatpush1.bf16.msra.mxu0 0
      %1762 = vmatprep.subr.bf16.mxu0 0
      %1763 = vmatpush1.bf16.msra.mxu0 0
      %1764 = vmatprep.subr.bf16.mxu0 0
      %1765 = vmatpush1.bf16.msra.mxu0 0
      %1766 = vmatprep.mubr.bf16.mxu0 0
      %1767 = vmatmul.mubr.bf16.gmra.mrb[0].mxu0 %v1723
      %v1768 = vpop.f32.mrb[0].mxu0
      %v1769 = vadd.f32 %v1671, %v1768
      %v1770 = vpop.f32.mrb[0].mxu0
      %v1771 = vadd.f32 %v1671, %v1770
      %v1772 = vpop.f32.mrb[0].mxu0
      %v1773 = vadd.f32 %v1676, %v1772
      %v1774 = vpop.f32.mrb[0].mxu0
      %v1775 = vadd.f32 %v1676, %v1774
      %1776 = vmatprep.mubr.bf16.mxu0 0
      %1777 = vmatmul.mubr.bf16.gmra.mrb[0].mxu0 %v1726
      %v1778 = vpop.f32.mrb[0].mxu0
      %v1779 = vadd.f32 %v1681, %v1778
      %v1780 = vpop.f32.mrb[0].mxu0
      %v1781 = vadd.f32 %v1681, %v1780
      %v1782 = vpop.f32.mrb[0].mxu0
      %v1783 = vadd.f32 %v1686, %v1782
      %v1784 = vpop.f32.mrb[0].mxu0
      %v1785 = vadd.f32 %v1686, %v1784
      %1786 = vmatprep.mubr.bf16.mxu0 0
      %1787 = vmatmul.mubr.bf16.gmra.mrb[0].mxu0 %v1729
      %v1788 = vpop.f32.mrb[0].mxu0
      %v1789 = vadd.f32 %v1691, %v1788
      %v1790 = vpop.f32.mrb[0].mxu0
      %v1791 = vadd.f32 %v1691, %v1790
      %v1792 = vpop.f32.mrb[0].mxu0
      %v1793 = vadd.f32 %v1696, %v1792
      %v1794 = vpop.f32.mrb[0].mxu0
      %v1795 = vadd.f32 %v1696, %v1794
      %1796 = vmatprep.mubr.bf16.mxu0 0
      %1797 = vmatmul.mubr.bf16.gmra.mrb[0].mxu0 %v1732
      %v1798 = vpop.f32.mrb[0].mxu0
      %v1799 = vadd.f32 %v1701, %v1798
      %v1800 = vpop.f32.mrb[0].mxu0
      %v1801 = vadd.f32 %v1701, %v1800
      %v1802 = vpop.f32.mrb[0].mxu0
      %v1803 = vpop.f32.mrb[0].mxu0
      %1804 = vdwg.mxu0
      %1805 = vmatprep.subr.bf16.mxu0 0
      %1806 = vmatpush1.bf16.msra.mxu0 %v1657
      %1807 = vmatprep.subr.bf16.mxu0 0
      %1808 = vmatpush1.bf16.msra.mxu0 %v1660
      %1809 = vmatprep.subr.bf16.mxu0 0
      %1810 = vmatpush1.bf16.msra.mxu0 0
      %1811 = vmatprep.subr.bf16.mxu0 0
      %1812 = vmatpush1.bf16.msra.mxu0 0
      %1813 = vmatprep.subr.bf16.mxu0 0
      %1814 = vmatpush1.bf16.msra.mxu0 0
      %1815 = vmatprep.subr.bf16.mxu0 0
      %1816 = vmatpush1.bf16.msra.mxu0 0
      %1817 = vmatprep.subr.bf16.mxu0 0
      %1818 = vmatpush1.bf16.msra.mxu0 0
      %1819 = vmatprep.subr.bf16.mxu0 0
      %1820 = vmatpush1.bf16.msra.mxu0 0
      %1821 = vmatprep.subr.bf16.mxu0 0
      %1822 = vmatpush1.bf16.msra.mxu0 0
      %1823 = vmatprep.subr.bf16.mxu0 0
      %1824 = vmatpush1.bf16.msra.mxu0 0
      %1825 = vmatprep.subr.bf16.mxu0 0
      %1826 = vmatpush1.bf16.msra.mxu0 0
      %1827 = vmatprep.subr.bf16.mxu0 0
      %1828 = vmatpush1.bf16.msra.mxu0 0
      %1829 = vmatprep.subr.bf16.mxu0 0
      %1830 = vmatpush1.bf16.msra.mxu0 0
      %1831 = vmatprep.subr.bf16.mxu0 0
      %1832 = vmatpush1.bf16.msra.mxu0 0
      %1833 = vmatprep.subr.bf16.mxu0 0
      %1834 = vmatpush1.bf16.msra.mxu0 0
      %1835 = vmatprep.subr.bf16.mxu0 0
      %1836 = vmatpush1.bf16.msra.mxu0 0
      %1837 = vmatprep.mubr.bf16.mxu0 0
      %1838 = vmatmul.mubr.bf16.gmra.mrb[0].mxu0 %v1723
      %v1839 = vpop.f32.mrb[0].mxu0
      %v1840 = vadd.f32 %v1671, %v1839
      %v1841 = vpop.f32.mrb[0].mxu0
      %v1842 = vpop.f32.mrb[0].mxu0
      %v1843 = vadd.f32 %v1676, %v1842
      %v1844 = vpop.f32.mrb[0].mxu0
      %1845 = vmatprep.mubr.bf16.mxu0 0
      %1846 = vmatmul.mubr.bf16.gmra.mrb[0].mxu0 %v1726
      %v1847 = vpop.f32.mrb[0].mxu0
      %v1848 = vadd.f32 %v1681, %v1847
      %v1849 = vpop.f32.mrb[0].mxu0
      %v1850 = vpop.f32.mrb[0].mxu0
      %v1851 = vadd.f32 %v1686, %v1850
      %v1852 = vpop.f32.mrb[0].mxu0
      %1853 = vmatprep.mubr.bf16.mxu0 0
      %1854 = vmatmul.mubr.bf16.gmra.mrb[0].mxu0 %v1729
      %v1855 = vpop.f32.mrb[0].mxu0
      %v1856 = vadd.f32 %v1691, %v1855
      %v1857 = vpop.f32.mrb[0].mxu0
      %v1858 = vpop.f32.mrb[0].mxu0
      %v1859 = vadd.f32 %v1696, %v1858
      %v1860 = vpop.f32.mrb[0].mxu0
      %1861 = vmatprep.mubr.bf16.mxu0 0
      %1862 = vmatmul.mubr.bf16.gmra.mrb[0].mxu0 %v1732
      %v1863 = vpop.f32.mrb[0].mxu0
      %v1864 = vadd.f32 %v1701, %v1863
      %v1865 = vpop.f32.mrb[0].mxu0
      %v1866 = vpop.f32.mrb[0].mxu0
      %v1867 = vpop.f32.mrb[0].mxu0
      %1868 = vdwg.mxu0
      %1869 = vst [vmem:[%s264] sm:$0xff] %v1769
      %1870 = vst [vmem:[%s264 + $0x8] sm:$0xff] %v1771
      %1871 = vst [vmem:[%s264 + $0x10] sm:$0xff] %v1840
      %1872 = vst [vmem:[%s264 + $0x18] sm:$0xff] %v1773
      %1873 = vst [vmem:[%s264 + $0x20] sm:$0xff] %v1775
      %1874 = vst [vmem:[%s264 + $0x28] sm:$0xff] %v1843
      %1875 = vst [vmem:[%s264 + $0x30] sm:$0xff] %v1779
      %1876 = vst [vmem:[%s264 + $0x38] sm:$0xff] %v1781
      %1877 = vst [vmem:[%s264 + $0x40] sm:$0xff] %v1848
      %1878 = vst [vmem:[%s264 + $0x48] sm:$0xff] %v1783
      %1879 = vst [vmem:[%s264 + $0x50] sm:$0xff] %v1785
      %1880 = vst [vmem:[%s264 + $0x58] sm:$0xff] %v1851
      %1881 = vst [vmem:[%s264 + $0x60] sm:$0xf] %v1789
      %1882 = vst [vmem:[%s264 + $0x68] sm:$0xf] %v1791
      %1883 = vst [vmem:[%s264 + $0x70] sm:$0xf] %v1856
      %v1884 = vand.u32 2147483647, %v1793
      %v1885 = vand.u32 2147483647, %v1795
      %v1886 = vand.u32 2147483647, %v1859
      %v1887 = vand.u32 2147483647, %v1799
      %v1888 = vand.u32 2147483647, %v1801
      %v1889 = vand.u32 2147483647, %v1864
      %v1890 = vsub.f32 0.0, %v1884
      %v1891 = vsub.f32 0.0, %v1885
      %v1892 = vsub.f32 0.0, %v1886
      %v1893 = vsub.f32 0.0, %v1887
      %v1894 = vsub.f32 0.0, %v1888
      %v1895 = vsub.f32 0.0, %v1889
      %v1896 = vmul.f32 %v1890, 1.442695
      %v1897 = vpow.pop %v1896
      %v1898 = vmul.f32 %v1891, 1.442695
      %v1899 = vpow.pop %v1898
      %v1900 = vmul.f32 %v1892, 1.442695
      %v1901 = vpow.pop %v1900
      %v1902 = vmul.f32 %v1893, 1.442695
      %v1903 = vpow.pop %v1902
      %v1904 = vmul.f32 %v1894, 1.442695
      %v1905 = vpow.pop %v1904
      %v1906 = vmul.f32 %v1895, 1.442695
      %v1907 = vpow.pop %v1906
      %v1908 = vadd.f32 %v1897, 1.0
      %v1909 = vadd.f32 %v1899, 1.0
      %v1910 = vadd.f32 %v1901, 1.0
      %v1911 = vadd.f32 %v1903, 1.0
      %v1912 = vadd.f32 %v1905, 1.0
      %v1913 = vadd.f32 %v1907, 1.0
      %v1914 = vrcp.pop %v1908
      %v1915 = vmul.f32 1.0, %v1914
      %v1916 = vrcp.pop %v1909
      %v1917 = vmul.f32 1.0, %v1916
      %v1918 = vrcp.pop %v1910
      %v1919 = vmul.f32 1.0, %v1918
      %v1920 = vrcp.pop %v1911
      %v1921 = vmul.f32 1.0, %v1920
      %v1922 = vrcp.pop %v1912
      %v1923 = vmul.f32 1.0, %v1922
      %v1924 = vrcp.pop %v1913
      %v1925 = vmul.f32 1.0, %v1924
      %vm1926 = vcmp.ge.f32.partialorder %v1793, 0.0
      %vm1927 = vcmp.ge.f32.partialorder %v1795, 0.0
      %vm1928 = vcmp.ge.f32.partialorder %v1859, 0.0
      %vm1929 = vcmp.ge.f32.partialorder %v1799, 0.0
      %vm1930 = vcmp.ge.f32.partialorder %v1801, 0.0
      %vm1931 = vcmp.ge.f32.partialorder %v1864, 0.0
      %v1932 = vsub.f32 1.0, %v1915
      %v1933 = vsub.f32 1.0, %v1917
      %v1934 = vsub.f32 1.0, %v1919
      %v1935 = vsub.f32 1.0, %v1921
      %v1936 = vsub.f32 1.0, %v1923
      %v1937 = vsub.f32 1.0, %v1925
      %v1938 = vsel %vm1926, %v1915, %v1932
      %v1939 = vsel %vm1927, %v1917, %v1933
      %v1940 = vsel %vm1928, %v1919, %v1934
      %v1941 = vsel %vm1929, %v1921, %v1935
      %v1942 = vsel %vm1930, %v1923, %v1936
      %v1943 = vsel %vm1931, %v1925, %v1937
      %1944 = vst [vmem:[%s259] sm:$0xff] %v1938
      %1945 = vst [vmem:[%s259 + $0x8] sm:$0xff] %v1939
      %1946 = vst [vmem:[%s259 + $0x10] sm:$0xff] %v1940
      %1947 = vst [vmem:[%s259 + $0x18] sm:$0x1] %v1941
      %1948 = vst [vmem:[%s259 + $0x20] sm:$0x1] %v1942
      %1949 = vst [vmem:[%s259 + $0x28] sm:$0x1] %v1943
      %v1950 = vsub.f32 1.0, %v1938
      %v1951 = vsub.f32 1.0, %v1939
      %v1952 = vsub.f32 1.0, %v1940
      %v1953 = vsub.f32 1.0, %v1941
      %v1954 = vsub.f32 1.0, %v1942
      %v1955 = vsub.f32 1.0, %v1943
      %vm1962 = vcmask 1040384
      %v1963 = vrot.slane %v1950, 7
      %v1964 = vrot.slane %v1951, 7
      %v1965 = vrot.slane %v1952, 7
      %v1966 = vrot.slane %v1953, 7
      %v1967 = vsel %vm1962, %v1963, %v1966
      %v1968 = vrot.slane %v1954, 7
      %v1969 = vsel %vm1962, %v1964, %v1968
      %v1970 = vrot.slane %v1955, 7
      %v1971 = vsel %vm1962, %v1965, %v1970
      %1978 = vst [vmem:[%s259 + $0x18] sm:$0xfe] %v1963
      %1979 = vst [vmem:[%s259 + $0x20] sm:$0xfe] %v1964
      %1980 = vst [vmem:[%s259 + $0x28] sm:$0xfe] %v1965
      %1981 = vst [vmem:[%s259 + $0x30] sm:$0x3] %v1967
      %1982 = vst [vmem:[%s259 + $0x38] sm:$0x3] %v1969
      %1983 = vst [vmem:[%s259 + $0x40] sm:$0x3] %v1971
      %p1984 = scmp.lt.s32.totalorder %s18, 1
      %s1985 = scalar_select %p1984, %s18, 1
      %s1986 = smul.addr %s1985, 9
      %s1987 = smul.addr %s1986, 8
      %s1988 = scalar_lea.vmem %s5, %s1987
      %p1989 = scmp.lt.s32.totalorder %s18, 1
      %s1990 = scalar_select %p1989, %s18, 1
      %s1991 = smul.addr %s1990, 15
      %s1992 = smul.addr %s1991, 8
      %s1993 = scalar_lea.vmem %s6, %s1992
      // Predicated region
      $region41: #{tpu_custom_call.1} parent=39 // pred_check
        %p1994 = pneg %p146
      $region42: #{tpu_custom_call.1} parent=39 // pred_check_branch
        %1996 = sbr.rel (%p1994) target = $region44
      $region43: #{tpu_custom_call.1} parent=39 // pred_region
        _
      $region44: #{tpu_custom_call.1} parent=39 // pred_fallthru
        _
      // Predicated region
      $region45: #{tpu_custom_call.1} parent=39 // pred_check
        %p1997 = pneg %p172
      $region46: #{tpu_custom_call.1} parent=39 // pred_check_branch
        %1999 = sbr.rel (%p1997) target = $region48
      $region47: #{tpu_custom_call.1} parent=39 // pred_region
        _
      $region48: #{tpu_custom_call.1} parent=39 // pred_fallthru
        _
    $region40: #{tpu_custom_call.1} parent=5 // pred_fallthru
      _
    %p2000 = scmp.le.s32.totalorder 2, %s13
    // Predicated region
    $region49: #{tpu_custom_call.1} parent=5 // pred_check
      %p2001 = pneg %p2000
    $region50: #{tpu_custom_call.1} parent=5 // pred_check_branch
      %2003 = sbr.rel (%p2001) target = $region52
    $region51: #{tpu_custom_call.1} parent=5 // pred_region
      %s2004 = ssub.s32 %s13, 2
      // Predicated region
      $region53: #{tpu_custom_call.1} parent=51 // pred_check
        %p2005 = pneg %p152
      $region54: #{tpu_custom_call.1} parent=51 // pred_check_branch
        %2007 = sbr.rel (%p2005) target = $region56
      $region55: #{tpu_custom_call.1} parent=51 // pred_region
        %p2008 = scmp.lt.s32.totalorder %s19, 1
        %s2009 = scalar_select %p2008, %s19, 1
        %s2010 = smul.addr %s2009, 9
        %s2011 = smul.addr %s2010, 8
        %s2012 = scalar_lea.vmem %s5, %s2011
      $region56: #{tpu_custom_call.1} parent=51 // pred_fallthru
        _
      // Predicated region
      $region57: #{tpu_custom_call.1} parent=51 // pred_check
        %p2013 = pneg %p178
      $region58: #{tpu_custom_call.1} parent=51 // pred_check_branch
        %2015 = sbr.rel (%p2013) target = $region60
      $region59: #{tpu_custom_call.1} parent=51 // pred_region
        %p2016 = scmp.lt.s32.totalorder %s19, 1
        %s2017 = scalar_select %p2016, %s19, 1
        %s2018 = smul.addr %s2017, 15
        %s2019 = smul.addr %s2018, 8
        %s2020 = scalar_lea.vmem %s6, %s2019
      $region60: #{tpu_custom_call.1} parent=51 // pred_fallthru
        _
    $region52: #{tpu_custom_call.1} parent=5 // pred_fallthru
      _
  $region6: #{tpu_custom_call.1} parent=0 // loop_footer
    %s17 = sadd.s32 1, %s13
  $region7: #{tpu_custom_call.1} parent=0 // loop_footer_branch
    %12 = sbr.rel target = $region3
  $region8: #{tpu_custom_call.1} parent=0 // loop_exit
    _

// kernel: tpu_custom_call.1
$region0: #{tpu_custom_call.1}
  #allocation0 [shape = 'u32[]', space=smem, size = 0x4, offset = 0x4, fixed_abs, tag = 'smem constant byte address 0x4 - core index']
  #allocation1 [shape = 'u32[144,128]{1,0:T(1,128)}', space=vmem, size = 0x12000, scoped, tag = 'internal scratch']
  %s0 = inlined_call_operand.vmem [shape: bf16[2,16,456], index: 0, kind: input, shape index: {}]
  %s1 = inlined_call_operand.vmem [shape: bf16[9,32,16], index: 1, kind: input, shape index: {}]
  %s2 = inlined_call_operand.vmem [shape: f32[32,1], index: 2, kind: input, shape index: {}]
  %s3 = inlined_call_operand.vmem [shape: bf16[56,32], index: 3, kind: input, shape index: {}]
  %s4 = inlined_call_operand.vmem [shape: f32[56,1], index: 4, kind: input, shape index: {}]
  %s5 = inlined_call_operand.vmem [shape: f32[2,18,384], index: 5, kind: output, shape index: {0}]
  %s6 = inlined_call_operand.vmem [shape: f32[2,36,384], index: 6, kind: output, shape index: {1}]
  %7 = xla_tuple %s5, %s6
  %s8 = sld [smem:[#allocation0]]
  $region61: #{tpu_custom_call.1} parent=0
    _
  %s10 = ssub.s32 1, %s8
  %s11 = scalar_select 0, %s10, %s8
  loop: start=0, step=1, limit=4
  $region2: #{tpu_custom_call.1} parent=0 // loop_pre_header
    _
  $region3: #{tpu_custom_call.1} parent=0 // loop_header
    %s13 = sphi 0, %s17
    %p14 = scmp.ge.s32.totalorder %s13, 4
    %s23 = sphi 0, %s25
    %s26 = sphi 0, %s23
    %s27 = sphi 0, %s26
    %s43 = sphi 0, %s27
    %s47 = sphi 0, %s47
    %s49 = sphi 0, %s47
    %s50 = sphi 0, %s49
    %s64 = sphi 0, %s50
    %s68 = sphi 0, %s68
    %s70 = sphi 0, %s68
    %s71 = sphi 0, %s70
    %s85 = sphi 0, %s71
    %s89 = sphi 0, %s89
    %s91 = sphi 0, %s89
    %s92 = sphi 0, %s91
    %s106 = sphi 0, %s92
    %s110 = sphi 0, %s110
    %s112 = sphi 0, %s110
    %s113 = sphi 0, %s112
    %s127 = sphi 0, %s113
    %s133 = sphi 0, %s135
    %s136 = sphi 0, %s133
    %s137 = sphi 0, %s136
    %s153 = sphi 0, %s137
    %s159 = sphi 0, %s161
    %s162 = sphi 0, %s159
    %s163 = sphi 0, %s162
    %s179 = sphi 0, %s163
  $region4: #{tpu_custom_call.1} parent=0 // loop_header_branch
    %16 = sbr.rel (%p14) target = $region8
  $region5: #{tpu_custom_call.1} parent=0 // loop_body
    %s18 = ssub.s32 %s13, 1
    %s19 = ssub.s32 %s13, 2
    %s20 = sadd.s32 %s13, 1
    %s21 = ssub.s32 %s13, %s20
    %p22 = scmp.eq.s32.totalorder %s21, 0
    %s24 = sadd.s32 %s23, 1
    %s25 = scalar_select %p22, %s23, %s24
    %p28 = pneg %p22
    %p29 = scmp.eq.s32.totalorder %s13, 1
    %p30 = por %p28, %p29
    %p31 = scmp.ne.s32.totalorder %s23, %s26
    %p32 = scmp.eq.s32.totalorder %s13, 0
    %p33 = por %p31, %p32
    %p34 = scmp.ne.s32.totalorder %s23, %s26
    %p35 = scmp.eq.s32.totalorder %s18, 1
    %p36 = por %p34, %p35
    %p37 = scmp.ne.s32.totalorder %s26, %s27
    %p38 = scmp.eq.s32.totalorder %s18, 0
    %p39 = por %p37, %p38
    %p40 = scmp.ne.s32.totalorder %s26, %s27
    %p41 = scmp.eq.s32.totalorder %s19, 1
    %p42 = por %p40, %p41
    %p44 = scmp.ne.s32.totalorder %s27, %s43
    %p45 = scmp.eq.s32.totalorder %s19, 0
    %p46 = por %p44, %p45
    %s48 = sadd.s32 %s47, 1
    %p51 = scmp.eq.s32.totalorder %s13, 1
    %p52 = scmp.ne.s32.totalorder %s47, %s49
    %p53 = scmp.eq.s32.totalorder %s13, 0
    %p54 = por %p52, %p53
    %p55 = scmp.ne.s32.totalorder %s47, %s49
    %p56 = scmp.eq.s32.totalorder %s18, 1
    %p57 = por %p55, %p56
    %p58 = scmp.ne.s32.totalorder %s49, %s50
    %p59 = scmp.eq.s32.totalorder %s18, 0
    %p60 = por %p58, %p59
    %p61 = scmp.ne.s32.totalorder %s49, %s50
    %p62 = scmp.eq.s32.totalorder %s19, 1
    %p63 = por %p61, %p62
    %p65 = scmp.ne.s32.totalorder %s50, %s64
    %p66 = scmp.eq.s32.totalorder %s19, 0
    %p67 = por %p65, %p66
    %s69 = sadd.s32 %s68, 1
    %p72 = scmp.eq.s32.totalorder %s13, 1
    %p73 = scmp.ne.s32.totalorder %s68, %s70
    %p74 = scmp.eq.s32.totalorder %s13, 0
    %p75 = por %p73, %p74
    %p76 = scmp.ne.s32.totalorder %s68, %s70
    %p77 = scmp.eq.s32.totalorder %s18, 1
    %p78 = por %p76, %p77
    %p79 = scmp.ne.s32.totalorder %s70, %s71
    %p80 = scmp.eq.s32.totalorder %s18, 0
    %p81 = por %p79, %p80
    %p82 = scmp.ne.s32.totalorder %s70, %s71
    %p83 = scmp.eq.s32.totalorder %s19, 1
    %p84 = por %p82, %p83
    %p86 = scmp.ne.s32.totalorder %s71, %s85
    %p87 = scmp.eq.s32.totalorder %s19, 0
    %p88 = por %p86, %p87
    %s90 = sadd.s32 %s89, 1
    %p93 = scmp.eq.s32.totalorder %s13, 1
    %p94 = scmp.ne.s32.totalorder %s89, %s91
    %p95 = scmp.eq.s32.totalorder %s13, 0
    %p96 = por %p94, %p95
    %p97 = scmp.ne.s32.totalorder %s89, %s91
    %p98 = scmp.eq.s32.totalorder %s18, 1
    %p99 = por %p97, %p98
    %p100 = scmp.ne.s32.totalorder %s91, %s92
    %p101 = scmp.eq.s32.totalorder %s18, 0
    %p102 = por %p100, %p101
    %p103 = scmp.ne.s32.totalorder %s91, %s92
    %p104 = scmp.eq.s32.totalorder %s19, 1
    %p105 = por %p103, %p104
    %p107 = scmp.ne.s32.totalorder %s92, %s106
    %p108 = scmp.eq.s32.totalorder %s19, 0
    %p109 = por %p107, %p108
    %s111 = sadd.s32 %s110, 1
    %p114 = scmp.eq.s32.totalorder %s13, 1
    %p115 = scmp.ne.s32.totalorder %s110, %s112
    %p116 = scmp.eq.s32.totalorder %s13, 0
    %p117 = por %p115, %p116
    %p118 = scmp.ne.s32.totalorder %s110, %s112
    %p119 = scmp.eq.s32.totalorder %s18, 1
    %p120 = por %p118, %p119
    %p121 = scmp.ne.s32.totalorder %s112, %s113
    %p122 = scmp.eq.s32.totalorder %s18, 0
    %p123 = por %p121, %p122
    %p124 = scmp.ne.s32.totalorder %s112, %s113
    %p125 = scmp.eq.s32.totalorder %s19, 1
    %p126 = por %p124, %p125
    %p128 = scmp.ne.s32.totalorder %s113, %s127
    %p129 = scmp.eq.s32.totalorder %s19, 0
    %p130 = por %p128, %p129
    %s131 = ssub.s32 %s13, %s20
    %p132 = scmp.eq.s32.totalorder %s131, 0
    %s134 = sadd.s32 %s133, 1
    %s135 = scalar_select %p132, %s133, %s134
    %p138 = pneg %p132
    %p139 = scmp.eq.s32.totalorder %s13, 1
    %p140 = por %p138, %p139
    %p141 = scmp.ne.s32.totalorder %s133, %s136
    %p142 = scmp.eq.s32.totalorder %s13, 0
    %p143 = por %p141, %p142
    %p144 = scmp.ne.s32.totalorder %s133, %s136
    %p145 = scmp.eq.s32.totalorder %s18, 1
    %p146 = por %p144, %p145
    %p147 = scmp.ne.s32.totalorder %s136, %s137
    %p148 = scmp.eq.s32.totalorder %s18, 0
    %p149 = por %p147, %p148
    %p150 = scmp.ne.s32.totalorder %s136, %s137
    %p151 = scmp.eq.s32.totalorder %s19, 1
    %p152 = por %p150, %p151
    %p154 = scmp.ne.s32.totalorder %s137, %s153
    %p155 = scmp.eq.s32.totalorder %s19, 0
    %p156 = por %p154, %p155
    %s157 = ssub.s32 %s13, %s20
    %p158 = scmp.eq.s32.totalorder %s157, 0
    %s160 = sadd.s32 %s159, 1
    %s161 = scalar_select %p158, %s159, %s160
    %p164 = pneg %p158
    %p165 = scmp.eq.s32.totalorder %s13, 1
    %p166 = por %p164, %p165
    %p167 = scmp.ne.s32.totalorder %s159, %s162
    %p168 = scmp.eq.s32.totalorder %s13, 0
    %p169 = por %p167, %p168
    %p170 = scmp.ne.s32.totalorder %s159, %s162
    %p171 = scmp.eq.s32.totalorder %s18, 1
    %p172 = por %p170, %p171
    %p173 = scmp.ne.s32.totalorder %s162, %s163
    %p174 = scmp.eq.s32.totalorder %s18, 0
    %p175 = por %p173, %p174
    %p176 = scmp.ne.s32.totalorder %s162, %s163
    %p177 = scmp.eq.s32.totalorder %s19, 1
    %p178 = por %p176, %p177
    %p180 = scmp.ne.s32.totalorder %s163, %s179
    %p181 = scmp.eq.s32.totalorder %s19, 0
    %p182 = por %p180, %p181
    %p183 = scmp.le.s32.totalorder 1, %s13
    %p184 = scmp.lt.s32.totalorder %s13, 3
    %p185 = pnand %p183, %p184
    %p186 = pneg %p185
    // Predicated region
    $region9: #{tpu_custom_call.1} parent=5 // pred_check
      _
    $region10: #{tpu_custom_call.1} parent=5 // pred_check_branch
      %188 = sbr.rel (%p185) target = $region12
    $region11: #{tpu_custom_call.1} parent=5 // pred_region
      %s189 = ssub.s32 %s13, 1
      // Predicated region
      $region13: #{tpu_custom_call.1} parent=11 // pred_check
        %p190 = pneg %p60
      $region14: #{tpu_custom_call.1} parent=11 // pred_check_branch
        %192 = sbr.rel (%p190) target = $region16
      $region15: #{tpu_custom_call.1} parent=11 // pred_region
        _
      $region16: #{tpu_custom_call.1} parent=11 // pred_fallthru
        _
      // Predicated region
      $region17: #{tpu_custom_call.1} parent=11 // pred_check
        %p193 = pneg %p81
      $region18: #{tpu_custom_call.1} parent=11 // pred_check_branch
        %195 = sbr.rel (%p193) target = $region20
      $region19: #{tpu_custom_call.1} parent=11 // pred_region
        _
      $region20: #{tpu_custom_call.1} parent=11 // pred_fallthru
        _
      // Predicated region
      $region21: #{tpu_custom_call.1} parent=11 // pred_check
        %p196 = pneg %p102
      $region22: #{tpu_custom_call.1} parent=11 // pred_check_branch
        %198 = sbr.rel (%p196) target = $region24
      $region23: #{tpu_custom_call.1} parent=11 // pred_region
        _
      $region24: #{tpu_custom_call.1} parent=11 // pred_fallthru
        _
      // Predicated region
      $region25: #{tpu_custom_call.1} parent=11 // pred_check
        %p199 = pneg %p123
      $region26: #{tpu_custom_call.1} parent=11 // pred_check_branch
        %201 = sbr.rel (%p199) target = $region28
      $region27: #{tpu_custom_call.1} parent=11 // pred_region
        _
      $region28: #{tpu_custom_call.1} parent=11 // pred_fallthru
        _
    $region12: #{tpu_custom_call.1} parent=5 // pred_fallthru
      _
    %p202 = scmp.lt.s32.totalorder %s13, 2
    // Predicated region
    $region29: #{tpu_custom_call.1} parent=5 // pred_check
      %p203 = pneg %p202
    $region30: #{tpu_custom_call.1} parent=5 // pred_check_branch
      %205 = sbr.rel (%p203) target = $region32
    $region31: #{tpu_custom_call.1} parent=5 // pred_region
      // Predicated region
      $region33: #{tpu_custom_call.1} parent=31 // pred_check
        %p206 = pneg %p33
      $region34: #{tpu_custom_call.1} parent=31 // pred_check_branch
        %208 = sbr.rel (%p206) target = $region36
      $region35: #{tpu_custom_call.1} parent=31 // pred_region
        %p209 = scmp.lt.s32.totalorder %s13, 1
        %s210 = scalar_select %p209, %s13, 1
        %s211 = smul.addr %s210, 8
        %s212 = smul.addr %s211, 4
        %s213 = scalar_lea.vmem %s0, %s212
      $region36: #{tpu_custom_call.1} parent=31 // pred_fallthru
        _
    $region32: #{tpu_custom_call.1} parent=5 // pred_fallthru
      _
    %p214 = scmp.le.s32.totalorder 1, %s13
    %p215 = scmp.lt.s32.totalorder %s13, 3
    %p216 = pnand %p214, %p215
    %p217 = pneg %p216
    // Predicated region
    $region37: #{tpu_custom_call.1} parent=5 // pred_check
      _
    $region38: #{tpu_custom_call.1} parent=5 // pred_check_branch
      %219 = sbr.rel (%p216) target = $region40
    $region39: #{tpu_custom_call.1} parent=5 // pred_region
      %s220 = ssub.s32 %s13, 1
      %p221 = scmp.lt.s32.totalorder %s18, 1
      %s222 = scalar_select %p221, %s18, 1
      %s223 = smul.addr %s222, 8
      %s224 = smul.addr %s223, 4
      %s225 = scalar_lea.vmem %s0, %s224
      %p226 = pneg %p39
      %p227 = pneg %p36
      %p228 = pneg %p60
      %p229 = pneg %p57
      %p230 = pneg %p81
      %p231 = pneg %p78
      %p232 = pneg %p102
      %p233 = pneg %p99
      %p234 = pneg %p123
      %p235 = pneg %p120
      %p236 = pneg %p149
      %p237 = pneg %p146
      %p238 = scmp.lt.s32.totalorder %s18, 1
      %s239 = scalar_select %p238, %s18, 1
      %s240 = smul.addr %s239, 9
      %s241 = smul.addr %s240, 8
      %s242 = scalar_lea.vmem %s5, %s241
      %p243 = pneg %p175
      %p244 = pneg %p172
      %p245 = scmp.lt.s32.totalorder %s18, 1
      %s246 = scalar_select %p245, %s18, 1
      %s247 = smul.addr %s246, 15
      %s248 = smul.addr %s247, 8
      %s249 = scalar_lea.vmem %s6, %s248
      %p250 = scmp.lt.s32.totalorder %s18, 1
      %s251 = scalar_select %p250, %s18, 1
      %s252 = smul.addr %s251, 8
      %s253 = smul.addr %s252, 4
      %s254 = scalar_lea.vmem %s0, %s253
      %p255 = scmp.lt.s32.totalorder %s18, 1
      %s256 = scalar_select %p255, %s18, 1
      %s257 = smul.addr %s256, 9
      %s258 = smul.addr %s257, 8
      %s259 = scalar_lea.vmem %s5, %s258
      %p260 = scmp.lt.s32.totalorder %s18, 1
      %s261 = scalar_select %p260, %s18, 1
      %s262 = smul.addr %s261, 15
      %s263 = smul.addr %s262, 8
      %s264 = scalar_lea.vmem %s6, %s263
      %v266 = vld [vmem:[%s254] sm:$0xff]
      %v267 = vld [vmem:[%s254 + $0x8] sm:$0xff]
      %v268 = vld [vmem:[%s254 + $0x10] sm:$0xff]
      %v269 = vld [vmem:[%s254 + $0x18] sm:$0xff]
      %v270 = vld [vmem:[%s1] sm:$0xf]
      %v271 = vld [vmem:[%s1 + $0x4] sm:$0xf]
      %v272 = vld [vmem:[%s1 + $0x8] sm:$0xf]
      %v273 = vld [vmem:[%s1 + $0xc] sm:$0xf]
      %s274 = scalar_lea.vmem %s1, 16
      %v275 = vld [vmem:[%s274] sm:$0xf]
      %v276 = vld [vmem:[%s274 + $0x4] sm:$0xf]
      %v277 = vld [vmem:[%s274 + $0x8] sm:$0xf]
      %v278 = vld [vmem:[%s274 + $0xc] sm:$0xf]
      %v283 = vunpack.c.l.b16 %v275
      %v284 = vunpack.c.l.b16 %v276
      %v285 = vunpack.c.l.b16 %v277
      %v286 = vunpack.c.l.b16 %v278
      %v287 = vpack.c.b16 %v284, %v283
      %v288 = vpack.c.b16 %v286, %v285
      %v293 = vunpack.c.l.b16 %v266
      %v294 = vunpack.c.h.b16 %v266
      %v295 = vunpack.c.l.b16 %v267
      %v296 = vunpack.c.h.b16 %v267
      %v297 = vunpack.c.l.b16 %v268
      %v298 = vunpack.c.h.b16 %v268
      %v299 = vunpack.c.l.b16 %v269
      %v300 = vunpack.c.h.b16 %v269
      %v301 = vpack.c.b16 %v297, %v293
      %v302 = vpack.c.b16 %v298, %v294
      %v303 = vpack.c.b16 %v299, %v295
      %v304 = vpack.c.b16 %v300, %v296
      %305 = vrot.lane.b32.xlu0 %v301, 127
      %v306 = vpop.permute.xlu0 %305
      %307 = vrot.lane.b32.xlu0 %v302, 127
      %v308 = vpop.permute.xlu0 %307
      %309 = vrot.lane.b32.xlu0 %v303, 127
      %v310 = vpop.permute.xlu0 %309
      %311 = vrot.lane.b32.xlu0 %v304, 127
      %v312 = vpop.permute.xlu0 %311
      %vm313 = vcmask 1039360
      %v314 = vsel %vm313, %v306, %v308
      %v315 = vsel %vm313, %v308, %v310
      %v316 = vsel %vm313, %v310, %v312
      %vm320 = vcmask 130048
      %v322 = vsel %vm320, %v287, 0
      %v325 = vsel %vm320, %v288, 0
      %327 = vmatprep.subr.bf16.mxu0 %v315
      %328 = vmatpush1.bf16.msra.mxu0 %v314
      %329 = vmatprep.subr.bf16.mxu0 0
      %330 = vmatpush1.bf16.msra.mxu0 0
      %331 = vmatprep.subr.bf16.mxu0 0
      %332 = vmatpush1.bf16.msra.mxu0 0
      %333 = vmatprep.subr.bf16.mxu0 0
      %334 = vmatpush1.bf16.msra.mxu0 0
      %335 = vmatprep.subr.bf16.mxu0 0
      %336 = vmatpush1.bf16.msra.mxu0 0
      %337 = vmatprep.subr.bf16.mxu0 0
      %338 = vmatpush1.bf16.msra.mxu0 0
      %339 = vmatprep.subr.bf16.mxu0 0
      %340 = vmatpush1.bf16.msra.mxu0 0
      %341 = vmatprep.subr.bf16.mxu0 0
      %342 = vmatpush1.bf16.msra.mxu0 0
      %343 = vmatprep.subr.bf16.mxu0 0
      %344 = vmatpush1.bf16.msra.mxu0 0
      %345 = vmatprep.subr.bf16.mxu0 0
      %346 = vmatpush1.bf16.msra.mxu0 0
      %347 = vmatprep.subr.bf16.mxu0 0
      %348 = vmatpush1.bf16.msra.mxu0 0
      %349 = vmatprep.subr.bf16.mxu0 0
      %350 = vmatpush1.bf16.msra.mxu0 0
      %351 = vmatprep.subr.bf16.mxu0 0
      %352 = vmatpush1.bf16.msra.mxu0 0
      %353 = vmatprep.subr.bf16.mxu0 0
      %354 = vmatpush1.bf16.msra.mxu0 0
      %355 = vmatprep.subr.bf16.mxu0 0
      %356 = vmatpush1.bf16.msra.mxu0 0
      %357 = vmatprep.subr.bf16.mxu0 0
      %358 = vmatpush1.bf16.msra.mxu0 0
      %359 = vmatprep.mubr.bf16.mxu0 0
      %360 = vmatmul.mubr.bf16.gmra.mrb[0].mxu0 %v322
      %v361 = vpop.f32.mrb[0].mxu0
      %v362 = vadd.f32 0.0, %v361
      %v363 = vpop.f32.mrb[0].mxu0
      %v364 = vadd.f32 0.0, %v363
      %v365 = vpop.f32.mrb[0].mxu0
      %v366 = vadd.f32 0.0, %v365
      %v367 = vpop.f32.mrb[0].mxu0
      %v368 = vadd.f32 0.0, %v367
      %369 = vmatprep.mubr.bf16.mxu0 0
      %370 = vmatmul.mubr.bf16.gmra.mrb[0].mxu0 %v325
      %v371 = vpop.f32.mrb[0].mxu0
      %v372 = vadd.f32 0.0, %v371
      %v373 = vpop.f32.mrb[0].mxu0
      %v374 = vadd.f32 0.0, %v373
      %v375 = vpop.f32.mrb[0].mxu0
      %v376 = vadd.f32 0.0, %v375
      %v377 = vpop.f32.mrb[0].mxu0
      %v378 = vadd.f32 0.0, %v377
      %379 = vdwg.mxu0
      %380 = vmatprep.subr.bf16.mxu0 0
      %381 = vmatpush1.bf16.msra.mxu0 %v316
      %382 = vmatprep.subr.bf16.mxu0 0
      %383 = vmatpush1.bf16.msra.mxu0 0
      %384 = vmatprep.subr.bf16.mxu0 0
      %385 = vmatpush1.bf16.msra.mxu0 0
      %386 = vmatprep.subr.bf16.mxu0 0
      %387 = vmatpush1.bf16.msra.mxu0 0
      %388 = vmatprep.subr.bf16.mxu0 0
      %389 = vmatpush1.bf16.msra.mxu0 0
      %390 = vmatprep.subr.bf16.mxu0 0
      %391 = vmatpush1.bf16.msra.mxu0 0
      %392 = vmatprep.subr.bf16.mxu0 0
      %393 = vmatpush1.bf16.msra.mxu0 0
      %394 = vmatprep.subr.bf16.mxu0 0
      %395 = vmatpush1.bf16.msra.mxu0 0
      %396 = vmatprep.subr.bf16.mxu0 0
      %397 = vmatpush1.bf16.msra.mxu0 0
      %398 = vmatprep.subr.bf16.mxu0 0
      %399 = vmatpush1.bf16.msra.mxu0 0
      %400 = vmatprep.subr.bf16.mxu0 0
      %401 = vmatpush1.bf16.msra.mxu0 0
      %402 = vmatprep.subr.bf16.mxu0 0
      %403 = vmatpush1.bf16.msra.mxu0 0
      %404 = vmatprep.subr.bf16.mxu0 0
      %405 = vmatpush1.bf16.msra.mxu0 0
      %406 = vmatprep.subr.bf16.mxu0 0
      %407 = vmatpush1.bf16.msra.mxu0 0
      %408 = vmatprep.subr.bf16.mxu0 0
      %409 = vmatpush1.bf16.msra.mxu0 0
      %410 = vmatprep.subr.bf16.mxu0 0
      %411 = vmatpush1.bf16.msra.mxu0 0
      %412 = vmatprep.mubr.bf16.mxu0 0
      %413 = vmatmul.mubr.bf16.gmra.mrb[0].mxu0 %v322
      %v414 = vpop.f32.mrb[0].mxu0
      %v415 = vadd.f32 0.0, %v414
      %v416 = vpop.f32.mrb[0].mxu0
      %v417 = vpop.f32.mrb[0].mxu0
      %v418 = vadd.f32 0.0, %v417
      %v419 = vpop.f32.mrb[0].mxu0
      %420 = vmatprep.mubr.bf16.mxu0 0
      %421 = vmatmul.mubr.bf16.gmra.mrb[0].mxu0 %v325
      %v422 = vpop.f32.mrb[0].mxu0
      %v423 = vadd.f32 0.0, %v422
      %v424 = vpop.f32.mrb[0].mxu0
      %v425 = vpop.f32.mrb[0].mxu0
      %v426 = vadd.f32 0.0, %v425
      %v427 = vpop.f32.mrb[0].mxu0
      %428 = vdwg.mxu0
      %v433 = vunpack.c.l.b16 %v270
      %v434 = vunpack.c.l.b16 %v271
      %v435 = vunpack.c.l.b16 %v272
      %v436 = vunpack.c.l.b16 %v273
      %v437 = vpack.c.b16 %v434, %v433
      %v438 = vpack.c.b16 %v436, %v435
      %v443 = vsel %vm320, %v437, 0
      %v446 = vsel %vm320, %v438, 0
      %448 = vmatprep.subr.bf16.mxu0 %v302
      %449 = vmatpush1.bf16.msra.mxu0 %v301
      %450 = vmatprep.subr.bf16.mxu0 0
      %451 = vmatpush1.bf16.msra.mxu0 0
      %452 = vmatprep.subr.bf16.mxu0 0
      %453 = vmatpush1.bf16.msra.mxu0 0
      %454 = vmatprep.subr.bf16.mxu0 0
      %455 = vmatpush1.bf16.msra.mxu0 0
      %456 = vmatprep.subr.bf16.mxu0 0
      %457 = vmatpush1.bf16.msra.mxu0 0
      %458 = vmatprep.subr.bf16.mxu0 0
      %459 = vmatpush1.bf16.msra.mxu0 0
      %460 = vmatprep.subr.bf16.mxu0 0
      %461 = vmatpush1.bf16.msra.mxu0 0
      %462 = vmatprep.subr.bf16.mxu0 0
      %463 = vmatpush1.bf16.msra.mxu0 0
      %464 = vmatprep.subr.bf16.mxu0 0
      %465 = vmatpush1.bf16.msra.mxu0 0
      %466 = vmatprep.subr.bf16.mxu0 0
      %467 = vmatpush1.bf16.msra.mxu0 0
      %468 = vmatprep.subr.bf16.mxu0 0
      %469 = vmatpush1.bf16.msra.mxu0 0
      %470 = vmatprep.subr.bf16.mxu0 0
      %471 = vmatpush1.bf16.msra.mxu0 0
      %472 = vmatprep.subr.bf16.mxu0 0
      %473 = vmatpush1.bf16.msra.mxu0 0
      %474 = vmatprep.subr.bf16.mxu0 0
      %475 = vmatpush1.bf16.msra.mxu0 0
      %476 = vmatprep.subr.bf16.mxu0 0
      %477 = vmatpush1.bf16.msra.mxu0 0
      %478 = vmatprep.subr.bf16.mxu0 0
      %479 = vmatpush1.bf16.msra.mxu0 0
      %480 = vmatprep.mubr.bf16.mxu0 0
      %481 = vmatmul.mubr.bf16.gmra.mrb[0].mxu0 %v443
      %v482 = vpop.f32.mrb[0].mxu0
      %v483 = vadd.f32 %v362, %v482
      %v484 = vpop.f32.mrb[0].mxu0
      %v485 = vadd.f32 %v364, %v484
      %v486 = vpop.f32.mrb[0].mxu0
      %v487 = vadd.f32 %v366, %v486
      %v488 = vpop.f32.mrb[0].mxu0
      %v489 = vadd.f32 %v368, %v488
      %490 = vmatprep.mubr.bf16.mxu0 0
      %491 = vmatmul.mubr.bf16.gmra.mrb[0].mxu0 %v446
      %v492 = vpop.f32.mrb[0].mxu0
      %v493 = vadd.f32 %v372, %v492
      %v494 = vpop.f32.mrb[0].mxu0
      %v495 = vadd.f32 %v374, %v494
      %v496 = vpop.f32.mrb[0].mxu0
      %v497 = vadd.f32 %v376, %v496
      %v498 = vpop.f32.mrb[0].mxu0
      %v499 = vadd.f32 %v378, %v498
      %500 = vdwg.mxu0
      %501 = vmatprep.subr.bf16.mxu0 0
      %502 = vmatpush1.bf16.msra.mxu0 %v303
      %503 = vmatprep.subr.bf16.mxu0 0
      %504 = vmatpush1.bf16.msra.mxu0 0
      %505 = vmatprep.subr.bf16.mxu0 0
      %506 = vmatpush1.bf16.msra.mxu0 0
      %507 = vmatprep.subr.bf16.mxu0 0
      %508 = vmatpush1.bf16.msra.mxu0 0
      %509 = vmatprep.subr.bf16.mxu0 0
      %510 = vmatpush1.bf16.msra.mxu0 0
      %511 = vmatprep.subr.bf16.mxu0 0
      %512 = vmatpush1.bf16.msra.mxu0 0
      %513 = vmatprep.subr.bf16.mxu0 0
      %514 = vmatpush1.bf16.msra.mxu0 0
      %515 = vmatprep.subr.bf16.mxu0 0
      %516 = vmatpush1.bf16.msra.mxu0 0
      %517 = vmatprep.subr.bf16.mxu0 0
      %518 = vmatpush1.bf16.msra.mxu0 0
      %519 = vmatprep.subr.bf16.mxu0 0
      %520 = vmatpush1.bf16.msra.mxu0 0
      %521 = vmatprep.subr.bf16.mxu0 0
      %522 = vmatpush1.bf16.msra.mxu0 0
      %523 = vmatprep.subr.bf16.mxu0 0
      %524 = vmatpush1.bf16.msra.mxu0 0
      %525 = vmatprep.subr.bf16.mxu0 0
      %526 = vmatpush1.bf16.msra.mxu0 0
      %527 = vmatprep.subr.bf16.mxu0 0
      %528 = vmatpush1.bf16.msra.mxu0 0
      %529 = vmatprep.subr.bf16.mxu0 0
      %530 = vmatpush1.bf16.msra.mxu0 0
      %531 = vmatprep.subr.bf16.mxu0 0
      %532 = vmatpush1.bf16.msra.mxu0 0
      %533 = vmatprep.mubr.bf16.mxu0 0
      %534 = vmatmul.mubr.bf16.gmra.mrb[0].mxu0 %v443
      %v535 = vpop.f32.mrb[0].mxu0
      %v536 = vadd.f32 %v415, %v535
      %v537 = vpop.f32.mrb[0].mxu0
      %v538 = vpop.f32.mrb[0].mxu0
      %v539 = vadd.f32 %v418, %v538
      %v540 = vpop.f32.mrb[0].mxu0
      %541 = vmatprep.mubr.bf16.mxu0 0
      %542 = vmatmul.mubr.bf16.gmra.mrb[0].mxu0 %v446
      %v543 = vpop.f32.mrb[0].mxu0
      %v544 = vadd.f32 %v423, %v543
      %v545 = vpop.f32.mrb[0].mxu0
      %v546 = vpop.f32.mrb[0].mxu0
      %v547 = vadd.f32 %v426, %v546
      %v548 = vpop.f32.mrb[0].mxu0
      %549 = vdwg.mxu0
      %s550 = scalar_lea.vmem %s1, 32
      %v551 = vld [vmem:[%s550] sm:$0xf]
      %v552 = vld [vmem:[%s550 + $0x4] sm:$0xf]
      %v553 = vld [vmem:[%s550 + $0x8] sm:$0xf]
      %v554 = vld [vmem:[%s550 + $0xc] sm:$0xf]
      %v559 = vunpack.c.l.b16 %v551
      %v560 = vunpack.c.l.b16 %v552
      %v561 = vunpack.c.l.b16 %v553
      %v562 = vunpack.c.l.b16 %v554
      %v563 = vpack.c.b16 %v560, %v559
      %v564 = vpack.c.b16 %v562, %v561
      %565 = vrot.lane.b32.xlu0 %v301, 126
      %v566 = vpop.permute.xlu0 %565
      %567 = vrot.lane.b32.xlu0 %v302, 126
      %v568 = vpop.permute.xlu0 %567
      %569 = vrot.lane.b32.xlu0 %v303, 126
      %v570 = vpop.permute.xlu0 %569
      %571 = vrot.lane.b32.xlu0 %v304, 126
      %v572 = vpop.permute.xlu0 %571
      %vm573 = vcmask 1031168
      %v574 = vsel %vm573, %v566, %v568
      %v575 = vsel %vm573, %v568, %v570
      %v576 = vsel %vm573, %v570, %v572
      %v581 = vsel %vm320, %v563, 0
      %v584 = vsel %vm320, %v564, 0
      %586 = vmatprep.subr.bf16.mxu0 %v575
      %587 = vmatpush1.bf16.msra.mxu0 %v574
      %588 = vmatprep.subr.bf16.mxu0 0
      %589 = vmatpush1.bf16.msra.mxu0 0
      %590 = vmatprep.subr.bf16.mxu0 0
      %591 = vmatpush1.bf16.msra.mxu0 0
      %592 = vmatprep.subr.bf16.mxu0 0
      %593 = vmatpush1.bf16.msra.mxu0 0
      %594 = vmatprep.subr.bf16.mxu0 0
      %595 = vmatpush1.bf16.msra.mxu0 0
      %596 = vmatprep.subr.bf16.mxu0 0
      %597 = vmatpush1.bf16.msra.mxu0 0
      %598 = vmatprep.subr.bf16.mxu0 0
      %599 = vmatpush1.bf16.msra.mxu0 0
      %600 = vmatprep.subr.bf16.mxu0 0
      %601 = vmatpush1.bf16.msra.mxu0 0
      %602 = vmatprep.subr.bf16.mxu0 0
      %603 = vmatpush1.bf16.msra.mxu0 0
      %604 = vmatprep.subr.bf16.mxu0 0
      %605 = vmatpush1.bf16.msra.mxu0 0
      %606 = vmatprep.subr.bf16.mxu0 0
      %607 = vmatpush1.bf16.msra.mxu0 0
      %608 = vmatprep.subr.bf16.mxu0 0
      %609 = vmatpush1.bf16.msra.mxu0 0
      %610 = vmatprep.subr.bf16.mxu0 0
      %611 = vmatpush1.bf16.msra.mxu0 0
      %612 = vmatprep.subr.bf16.mxu0 0
      %613 = vmatpush1.bf16.msra.mxu0 0
      %614 = vmatprep.subr.bf16.mxu0 0
      %615 = vmatpush1.bf16.msra.mxu0 0
      %616 = vmatprep.subr.bf16.mxu0 0
      %617 = vmatpush1.bf16.msra.mxu0 0
      %618 = vmatprep.mubr.bf16.mxu0 0
      %619 = vmatmul.mubr.bf16.gmra.mrb[0].mxu0 %v581
      %v620 = vpop.f32.mrb[0].mxu0
      %v621 = vadd.f32 0.0, %v620
      %v622 = vpop.f32.mrb[0].mxu0
      %v623 = vadd.f32 0.0, %v622
      %v624 = vpop.f32.mrb[0].mxu0
      %v625 = vadd.f32 0.0, %v624
      %v626 = vpop.f32.mrb[0].mxu0
      %v627 = vadd.f32 0.0, %v626
      %628 = vmatprep.mubr.bf16.mxu0 0
      %629 = vmatmul.mubr.bf16.gmra.mrb[0].mxu0 %v584
      %v630 = vpop.f32.mrb[0].mxu0
      %v631 = vadd.f32 0.0, %v630
      %v632 = vpop.f32.mrb[0].mxu0
      %v633 = vadd.f32 0.0, %v632
      %v634 = vpop.f32.mrb[0].mxu0
      %v635 = vadd.f32 0.0, %v634
      %v636 = vpop.f32.mrb[0].mxu0
      %v637 = vadd.f32 0.0, %v636
      %638 = vdwg.mxu0
      %639 = vmatprep.subr.bf16.mxu0 0
      %640 = vmatpush1.bf16.msra.mxu0 %v576
      %641 = vmatprep.subr.bf16.mxu0 0
      %642 = vmatpush1.bf16.msra.mxu0 0
      %643 = vmatprep.subr.bf16.mxu0 0
      %644 = vmatpush1.bf16.msra.mxu0 0
      %645 = vmatprep.subr.bf16.mxu0 0
      %646 = vmatpush1.bf16.msra.mxu0 0
      %647 = vmatprep.subr.bf16.mxu0 0
      %648 = vmatpush1.bf16.msra.mxu0 0
      %649 = vmatprep.subr.bf16.mxu0 0
      %650 = vmatpush1.bf16.msra.mxu0 0
      %651 = vmatprep.subr.bf16.mxu0 0
      %652 = vmatpush1.bf16.msra.mxu0 0
      %653 = vmatprep.subr.bf16.mxu0 0
      %654 = vmatpush1.bf16.msra.mxu0 0
      %655 = vmatprep.subr.bf16.mxu0 0
      %656 = vmatpush1.bf16.msra.mxu0 0
      %657 = vmatprep.subr.bf16.mxu0 0
      %658 = vmatpush1.bf16.msra.mxu0 0
      %659 = vmatprep.subr.bf16.mxu0 0
      %660 = vmatpush1.bf16.msra.mxu0 0
      %661 = vmatprep.subr.bf16.mxu0 0
      %662 = vmatpush1.bf16.msra.mxu0 0
      %663 = vmatprep.subr.bf16.mxu0 0
      %664 = vmatpush1.bf16.msra.mxu0 0
      %665 = vmatprep.subr.bf16.mxu0 0
      %666 = vmatpush1.bf16.msra.mxu0 0
      %667 = vmatprep.subr.bf16.mxu0 0
      %668 = vmatpush1.bf16.msra.mxu0 0
      %669 = vmatprep.subr.bf16.mxu0 0
      %670 = vmatpush1.bf16.msra.mxu0 0
      %671 = vmatprep.mubr.bf16.mxu0 0
      %672 = vmatmul.mubr.bf16.gmra.mrb[0].mxu0 %v581
      %v673 = vpop.f32.mrb[0].mxu0
      %v674 = vadd.f32 0.0, %v673
      %v675 = vpop.f32.mrb[0].mxu0
      %v676 = vpop.f32.mrb[0].mxu0
      %v677 = vadd.f32 0.0, %v676
      %v678 = vpop.f32.mrb[0].mxu0
      %679 = vmatprep.mubr.bf16.mxu0 0
      %680 = vmatmul.mubr.bf16.gmra.mrb[0].mxu0 %v584
      %v681 = vpop.f32.mrb[0].mxu0
      %v682 = vadd.f32 0.0, %v681
      %v683 = vpop.f32.mrb[0].mxu0
      %v684 = vpop.f32.mrb[0].mxu0
      %v685 = vadd.f32 0.0, %v684
      %v686 = vpop.f32.mrb[0].mxu0
      %687 = vdwg.mxu0
      %v688 = vadd.f32 %v483, %v621
      %v689 = vadd.f32 %v485, %v623
      %v690 = vadd.f32 %v536, %v674
      %v691 = vadd.f32 %v487, %v625
      %v692 = vadd.f32 %v489, %v627
      %v693 = vadd.f32 %v539, %v677
      %v694 = vadd.f32 %v493, %v631
      %v695 = vadd.f32 %v495, %v633
      %v696 = vadd.f32 %v544, %v682
      %v697 = vadd.f32 %v497, %v635
      %v698 = vadd.f32 %v499, %v637
      %v699 = vadd.f32 %v547, %v685
      %s700 = scalar_lea.vmem %s1, 48
      %v701 = vld [vmem:[%s700] sm:$0xf]
      %v702 = vld [vmem:[%s700 + $0x4] sm:$0xf]
      %v703 = vld [vmem:[%s700 + $0x8] sm:$0xf]
      %v704 = vld [vmem:[%s700 + $0xc] sm:$0xf]
      %v709 = vunpack.c.l.b16 %v701
      %v710 = vunpack.c.l.b16 %v702
      %v711 = vunpack.c.l.b16 %v703
      %v712 = vunpack.c.l.b16 %v704
      %v713 = vpack.c.b16 %v710, %v709
      %v714 = vpack.c.b16 %v712, %v711
      %715 = vrot.lane.b32.xlu0 %v301, 104
      %v716 = vpop.permute.xlu0 %715
      %717 = vrot.lane.b32.xlu0 %v302, 104
      %v718 = vpop.permute.xlu0 %717
      %719 = vrot.lane.b32.xlu0 %v303, 104
      %v720 = vpop.permute.xlu0 %719
      %721 = vrot.lane.b32.xlu0 %v304, 104
      %v722 = vpop.permute.xlu0 %721
      %vm723 = vcmask 850944
      %v724 = vsel %vm723, %v716, %v718
      %v725 = vsel %vm723, %v718, %v720
      %v726 = vsel %vm723, %v720, %v722
      %v731 = vsel %vm320, %v713, 0
      %v734 = vsel %vm320, %v714, 0
      %736 = vmatprep.subr.bf16.mxu0 %v725
      %737 = vmatpush1.bf16.msra.mxu0 %v724
      %738 = vmatprep.subr.bf16.mxu0 0
      %739 = vmatpush1.bf16.msra.mxu0 0
      %740 = vmatprep.subr.bf16.mxu0 0
      %741 = vmatpush1.bf16.msra.mxu0 0
      %742 = vmatprep.subr.bf16.mxu0 0
      %743 = vmatpush1.bf16.msra.mxu0 0
      %744 = vmatprep.subr.bf16.mxu0 0
      %745 = vmatpush1.bf16.msra.mxu0 0
      %746 = vmatprep.subr.bf16.mxu0 0
      %747 = vmatpush1.bf16.msra.mxu0 0
      %748 = vmatprep.subr.bf16.mxu0 0
      %749 = vmatpush1.bf16.msra.mxu0 0
      %750 = vmatprep.subr.bf16.mxu0 0
      %751 = vmatpush1.bf16.msra.mxu0 0
      %752 = vmatprep.subr.bf16.mxu0 0
      %753 = vmatpush1.bf16.msra.mxu0 0
      %754 = vmatprep.subr.bf16.mxu0 0
      %755 = vmatpush1.bf16.msra.mxu0 0
      %756 = vmatprep.subr.bf16.mxu0 0
      %757 = vmatpush1.bf16.msra.mxu0 0
      %758 = vmatprep.subr.bf16.mxu0 0
      %759 = vmatpush1.bf16.msra.mxu0 0
      %760 = vmatprep.subr.bf16.mxu0 0
      %761 = vmatpush1.bf16.msra.mxu0 0
      %762 = vmatprep.subr.bf16.mxu0 0
      %763 = vmatpush1.bf16.msra.mxu0 0
      %764 = vmatprep.subr.bf16.mxu0 0
      %765 = vmatpush1.bf16.msra.mxu0 0
      %766 = vmatprep.subr.bf16.mxu0 0
      %767 = vmatpush1.bf16.msra.mxu0 0
      %768 = vmatprep.mubr.bf16.mxu0 0
      %769 = vmatmul.mubr.bf16.gmra.mrb[0].mxu0 %v731
      %v770 = vpop.f32.mrb[0].mxu0
      %v771 = vadd.f32 0.0, %v770
      %v772 = vpop.f32.mrb[0].mxu0
      %v773 = vadd.f32 0.0, %v772
      %v774 = vpop.f32.mrb[0].mxu0
      %v775 = vadd.f32 0.0, %v774
      %v776 = vpop.f32.mrb[0].mxu0
      %v777 = vadd.f32 0.0, %v776
      %778 = vmatprep.mubr.bf16.mxu0 0
      %779 = vmatmul.mubr.bf16.gmra.mrb[0].mxu0 %v734
      %v780 = vpop.f32.mrb[0].mxu0
      %v781 = vadd.f32 0.0, %v780
      %v782 = vpop.f32.mrb[0].mxu0
      %v783 = vadd.f32 0.0, %v782
      %v784 = vpop.f32.mrb[0].mxu0
      %v785 = vadd.f32 0.0, %v784
      %v786 = vpop.f32.mrb[0].mxu0
      %v787 = vadd.f32 0.0, %v786
      %788 = vdwg.mxu0
      %789 = vmatprep.subr.bf16.mxu0 0
      %790 = vmatpush1.bf16.msra.mxu0 %v726
      %791 = vmatprep.subr.bf16.mxu0 0
      %792 = vmatpush1.bf16.msra.mxu0 0
      %793 = vmatprep.subr.bf16.mxu0 0
      %794 = vmatpush1.bf16.msra.mxu0 0
      %795 = vmatprep.subr.bf16.mxu0 0
      %796 = vmatpush1.bf16.msra.mxu0 0
      %797 = vmatprep.subr.bf16.mxu0 0
      %798 = vmatpush1.bf16.msra.mxu0 0
      %799 = vmatprep.subr.bf16.mxu0 0
      %800 = vmatpush1.bf16.msra.mxu0 0
      %801 = vmatprep.subr.bf16.mxu0 0
      %802 = vmatpush1.bf16.msra.mxu0 0
      %803 = vmatprep.subr.bf16.mxu0 0
      %804 = vmatpush1.bf16.msra.mxu0 0
      %805 = vmatprep.subr.bf16.mxu0 0
      %806 = vmatpush1.bf16.msra.mxu0 0
      %807 = vmatprep.subr.bf16.mxu0 0
      %808 = vmatpush1.bf16.msra.mxu0 0
      %809 = vmatprep.subr.bf16.mxu0 0
      %810 = vmatpush1.bf16.msra.mxu0 0
      %811 = vmatprep.subr.bf16.mxu0 0
      %812 = vmatpush1.bf16.msra.mxu0 0
      %813 = vmatprep.subr.bf16.mxu0 0
      %814 = vmatpush1.bf16.msra.mxu0 0
      %815 = vmatprep.subr.bf16.mxu0 0
      %816 = vmatpush1.bf16.msra.mxu0 0
      %817 = vmatprep.subr.bf16.mxu0 0
      %818 = vmatpush1.bf16.msra.mxu0 0
      %819 = vmatprep.subr.bf16.mxu0 0
      %820 = vmatpush1.bf16.msra.mxu0 0
      %821 = vmatprep.mubr.bf16.mxu0 0
      %822 = vmatmul.mubr.bf16.gmra.mrb[0].mxu0 %v731
      %v823 = vpop.f32.mrb[0].mxu0
      %v824 = vadd.f32 0.0, %v823
      %v825 = vpop.f32.mrb[0].mxu0
      %v826 = vpop.f32.mrb[0].mxu0
      %v827 = vadd.f32 0.0, %v826
      %v828 = vpop.f32.mrb[0].mxu0
      %829 = vmatprep.mubr.bf16.mxu0 0
      %830 = vmatmul.mubr.bf16.gmra.mrb[0].mxu0 %v734
      %v831 = vpop.f32.mrb[0].mxu0
      %v832 = vadd.f32 0.0, %v831
      %v833 = vpop.f32.mrb[0].mxu0
      %v834 = vpop.f32.mrb[0].mxu0
      %v835 = vadd.f32 0.0, %v834
      %v836 = vpop.f32.mrb[0].mxu0
      %837 = vdwg.mxu0
      %v838 = vadd.f32 %v688, %v771
      %v839 = vadd.f32 %v689, %v773
      %v840 = vadd.f32 %v690, %v824
      %v841 = vadd.f32 %v691, %v775
      %v842 = vadd.f32 %v692, %v777
      %v843 = vadd.f32 %v693, %v827
      %v844 = vadd.f32 %v694, %v781
      %v845 = vadd.f32 %v695, %v783
      %v846 = vadd.f32 %v696, %v832
      %v847 = vadd.f32 %v697, %v785
      %v848 = vadd.f32 %v698, %v787
      %v849 = vadd.f32 %v699, %v835
      %s850 = scalar_lea.vmem %s1, 64
      %v851 = vld [vmem:[%s850] sm:$0xf]
      %v852 = vld [vmem:[%s850 + $0x4] sm:$0xf]
      %v853 = vld [vmem:[%s850 + $0x8] sm:$0xf]
      %v854 = vld [vmem:[%s850 + $0xc] sm:$0xf]
      %v859 = vunpack.c.l.b16 %v851
      %v860 = vunpack.c.l.b16 %v852
      %v861 = vunpack.c.l.b16 %v853
      %v862 = vunpack.c.l.b16 %v854
      %v863 = vpack.c.b16 %v860, %v859
      %v864 = vpack.c.b16 %v862, %v861
      %865 = vrot.lane.b32.xlu0 %v301, 103
      %v866 = vpop.permute.xlu0 %865
      %867 = vrot.lane.b32.xlu0 %v302, 103
      %v868 = vpop.permute.xlu0 %867
      %869 = vrot.lane.b32.xlu0 %v303, 103
      %v870 = vpop.permute.xlu0 %869
      %871 = vrot.lane.b32.xlu0 %v304, 103
      %v872 = vpop.permute.xlu0 %871
      %vm873 = vcmask 842752
      %v874 = vsel %vm873, %v866, %v868
      %v875 = vsel %vm873, %v868, %v870
      %v876 = vsel %vm873, %v870, %v872
      %v881 = vsel %vm320, %v863, 0
      %v884 = vsel %vm320, %v864, 0
      %886 = vmatprep.subr.bf16.mxu0 %v875
      %887 = vmatpush1.bf16.msra.mxu0 %v874
      %888 = vmatprep.subr.bf16.mxu0 0
      %889 = vmatpush1.bf16.msra.mxu0 0
      %890 = vmatprep.subr.bf16.mxu0 0
      %891 = vmatpush1.bf16.msra.mxu0 0
      %892 = vmatprep.subr.bf16.mxu0 0
      %893 = vmatpush1.bf16.msra.mxu0 0
      %894 = vmatprep.subr.bf16.mxu0 0
      %895 = vmatpush1.bf16.msra.mxu0 0
      %896 = vmatprep.subr.bf16.mxu0 0
      %897 = vmatpush1.bf16.msra.mxu0 0
      %898 = vmatprep.subr.bf16.mxu0 0
      %899 = vmatpush1.bf16.msra.mxu0 0
      %900 = vmatprep.subr.bf16.mxu0 0
      %901 = vmatpush1.bf16.msra.mxu0 0
      %902 = vmatprep.subr.bf16.mxu0 0
      %903 = vmatpush1.bf16.msra.mxu0 0
      %904 = vmatprep.subr.bf16.mxu0 0
      %905 = vmatpush1.bf16.msra.mxu0 0
      %906 = vmatprep.subr.bf16.mxu0 0
      %907 = vmatpush1.bf16.msra.mxu0 0
      %908 = vmatprep.subr.bf16.mxu0 0
      %909 = vmatpush1.bf16.msra.mxu0 0
      %910 = vmatprep.subr.bf16.mxu0 0
      %911 = vmatpush1.bf16.msra.mxu0 0
      %912 = vmatprep.subr.bf16.mxu0 0
      %913 = vmatpush1.bf16.msra.mxu0 0
      %914 = vmatprep.subr.bf16.mxu0 0
      %915 = vmatpush1.bf16.msra.mxu0 0
      %916 = vmatprep.subr.bf16.mxu0 0
      %917 = vmatpush1.bf16.msra.mxu0 0
      %918 = vmatprep.mubr.bf16.mxu0 0
      %919 = vmatmul.mubr.bf16.gmra.mrb[0].mxu0 %v881
      %v920 = vpop.f32.mrb[0].mxu0
      %v921 = vadd.f32 0.0, %v920
      %v922 = vpop.f32.mrb[0].mxu0
      %v923 = vadd.f32 0.0, %v922
      %v924 = vpop.f32.mrb[0].mxu0
      %v925 = vadd.f32 0.0, %v924
      %v926 = vpop.f32.mrb[0].mxu0
      %v927 = vadd.f32 0.0, %v926
      %928 = vmatprep.mubr.bf16.mxu0 0
      %929 = vmatmul.mubr.bf16.gmra.mrb[0].mxu0 %v884
      %v930 = vpop.f32.mrb[0].mxu0
      %v931 = vadd.f32 0.0, %v930
      %v932 = vpop.f32.mrb[0].mxu0
      %v933 = vadd.f32 0.0, %v932
      %v934 = vpop.f32.mrb[0].mxu0
      %v935 = vadd.f32 0.0, %v934
      %v936 = vpop.f32.mrb[0].mxu0
      %v937 = vadd.f32 0.0, %v936
      %938 = vdwg.mxu0
      %939 = vmatprep.subr.bf16.mxu0 0
      %940 = vmatpush1.bf16.msra.mxu0 %v876
      %941 = vmatprep.subr.bf16.mxu0 0
      %942 = vmatpush1.bf16.msra.mxu0 0
      %943 = vmatprep.subr.bf16.mxu0 0
      %944 = vmatpush1.bf16.msra.mxu0 0
      %945 = vmatprep.subr.bf16.mxu0 0
      %946 = vmatpush1.bf16.msra.mxu0 0
      %947 = vmatprep.subr.bf16.mxu0 0
      %948 = vmatpush1.bf16.msra.mxu0 0
      %949 = vmatprep.subr.bf16.mxu0 0
      %950 = vmatpush1.bf16.msra.mxu0 0
      %951 = vmatprep.subr.bf16.mxu0 0
      %952 = vmatpush1.bf16.msra.mxu0 0
      %953 = vmatprep.subr.bf16.mxu0 0
      %954 = vmatpush1.bf16.msra.mxu0 0
      %955 = vmatprep.subr.bf16.mxu0 0
      %956 = vmatpush1.bf16.msra.mxu0 0
      %957 = vmatprep.subr.bf16.mxu0 0
      %958 = vmatpush1.bf16.msra.mxu0 0
      %959 = vmatprep.subr.bf16.mxu0 0
      %960 = vmatpush1.bf16.msra.mxu0 0
      %961 = vmatprep.subr.bf16.mxu0 0
      %962 = vmatpush1.bf16.msra.mxu0 0
      %963 = vmatprep.subr.bf16.mxu0 0
      %964 = vmatpush1.bf16.msra.mxu0 0
      %965 = vmatprep.subr.bf16.mxu0 0
      %966 = vmatpush1.bf16.msra.mxu0 0
      %967 = vmatprep.subr.bf16.mxu0 0
      %968 = vmatpush1.bf16.msra.mxu0 0
      %969 = vmatprep.subr.bf16.mxu0 0
      %970 = vmatpush1.bf16.msra.mxu0 0
      %971 = vmatprep.mubr.bf16.mxu0 0
      %972 = vmatmul.mubr.bf16.gmra.mrb[0].mxu0 %v881
      %v973 = vpop.f32.mrb[0].mxu0
      %v974 = vadd.f32 0.0, %v973
      %v975 = vpop.f32.mrb[0].mxu0
      %v976 = vpop.f32.mrb[0].mxu0
      %v977 = vadd.f32 0.0, %v976
      %v978 = vpop.f32.mrb[0].mxu0
      %979 = vmatprep.mubr.bf16.mxu0 0
      %980 = vmatmul.mubr.bf16.gmra.mrb[0].mxu0 %v884
      %v981 = vpop.f32.mrb[0].mxu0
      %v982 = vadd.f32 0.0, %v981
      %v983 = vpop.f32.mrb[0].mxu0
      %v984 = vpop.f32.mrb[0].mxu0
      %v985 = vadd.f32 0.0, %v984
      %v986 = vpop.f32.mrb[0].mxu0
      %987 = vdwg.mxu0
      %v988 = vadd.f32 %v838, %v921
      %v989 = vadd.f32 %v839, %v923
      %v990 = vadd.f32 %v840, %v974
      %v991 = vadd.f32 %v841, %v925
      %v992 = vadd.f32 %v842, %v927
      %v993 = vadd.f32 %v843, %v977
      %v994 = vadd.f32 %v844, %v931
      %v995 = vadd.f32 %v845, %v933
      %v996 = vadd.f32 %v846, %v982
      %v997 = vadd.f32 %v847, %v935
      %v998 = vadd.f32 %v848, %v937
      %v999 = vadd.f32 %v849, %v985
      %s1000 = scalar_lea.vmem %s1, 80
      %v1001 = vld [vmem:[%s1000] sm:$0xf]
      %v1002 = vld [vmem:[%s1000 + $0x4] sm:$0xf]
      %v1003 = vld [vmem:[%s1000 + $0x8] sm:$0xf]
      %v1004 = vld [vmem:[%s1000 + $0xc] sm:$0xf]
      %v1009 = vunpack.c.l.b16 %v1001
      %v1010 = vunpack.c.l.b16 %v1002
      %v1011 = vunpack.c.l.b16 %v1003
      %v1012 = vunpack.c.l.b16 %v1004
      %v1013 = vpack.c.b16 %v1010, %v1009
      %v1014 = vpack.c.b16 %v1012, %v1011
      %1015 = vrot.lane.b32.xlu0 %v301, 102
      %v1016 = vpop.permute.xlu0 %1015
      %1017 = vrot.lane.b32.xlu0 %v302, 102
      %v1018 = vpop.permute.xlu0 %1017
      %1019 = vrot.lane.b32.xlu0 %v303, 102
      %v1020 = vpop.permute.xlu0 %1019
      %1021 = vrot.lane.b32.xlu0 %v304, 102
      %v1022 = vpop.permute.xlu0 %1021
      %vm1023 = vcmask 834560
      %v1024 = vsel %vm1023, %v1016, %v1018
      %v1025 = vsel %vm1023, %v1018, %v1020
      %v1026 = vsel %vm1023, %v1020, %v1022
      %v1031 = vsel %vm320, %v1013, 0
      %v1034 = vsel %vm320, %v1014, 0
      %1036 = vmatprep.subr.bf16.mxu0 %v1025
      %1037 = vmatpush1.bf16.msra.mxu0 %v1024
      %1038 = vmatprep.subr.bf16.mxu0 0
      %1039 = vmatpush1.bf16.msra.mxu0 0
      %1040 = vmatprep.subr.bf16.mxu0 0
      %1041 = vmatpush1.bf16.msra.mxu0 0
      %1042 = vmatprep.subr.bf16.mxu0 0
      %1043 = vmatpush1.bf16.msra.mxu0 0
      %1044 = vmatprep.subr.bf16.mxu0 0
      %1045 = vmatpush1.bf16.msra.mxu0 0
      %1046 = vmatprep.subr.bf16.mxu0 0
      %1047 = vmatpush1.bf16.msra.mxu0 0
      %1048 = vmatprep.subr.bf16.mxu0 0
      %1049 = vmatpush1.bf16.msra.mxu0 0
      %1050 = vmatprep.subr.bf16.mxu0 0
      %1051 = vmatpush1.bf16.msra.mxu0 0
      %1052 = vmatprep.subr.bf16.mxu0 0
      %1053 = vmatpush1.bf16.msra.mxu0 0
      %1054 = vmatprep.subr.bf16.mxu0 0
      %1055 = vmatpush1.bf16.msra.mxu0 0
      %1056 = vmatprep.subr.bf16.mxu0 0
      %1057 = vmatpush1.bf16.msra.mxu0 0
      %1058 = vmatprep.subr.bf16.mxu0 0
      %1059 = vmatpush1.bf16.msra.mxu0 0
      %1060 = vmatprep.subr.bf16.mxu0 0
      %1061 = vmatpush1.bf16.msra.mxu0 0
      %1062 = vmatprep.subr.bf16.mxu0 0
      %1063 = vmatpush1.bf16.msra.mxu0 0
      %1064 = vmatprep.subr.bf16.mxu0 0
      %1065 = vmatpush1.bf16.msra.mxu0 0
      %1066 = vmatprep.subr.bf16.mxu0 0
      %1067 = vmatpush1.bf16.msra.mxu0 0
      %1068 = vmatprep.mubr.bf16.mxu0 0
      %1069 = vmatmul.mubr.bf16.gmra.mrb[0].mxu0 %v1031
      %v1070 = vpop.f32.mrb[0].mxu0
      %v1071 = vadd.f32 0.0, %v1070
      %v1072 = vpop.f32.mrb[0].mxu0
      %v1073 = vadd.f32 0.0, %v1072
      %v1074 = vpop.f32.mrb[0].mxu0
      %v1075 = vadd.f32 0.0, %v1074
      %v1076 = vpop.f32.mrb[0].mxu0
      %v1077 = vadd.f32 0.0, %v1076
      %1078 = vmatprep.mubr.bf16.mxu0 0
      %1079 = vmatmul.mubr.bf16.gmra.mrb[0].mxu0 %v1034
      %v1080 = vpop.f32.mrb[0].mxu0
      %v1081 = vadd.f32 0.0, %v1080
      %v1082 = vpop.f32.mrb[0].mxu0
      %v1083 = vadd.f32 0.0, %v1082
      %v1084 = vpop.f32.mrb[0].mxu0
      %v1085 = vadd.f32 0.0, %v1084
      %v1086 = vpop.f32.mrb[0].mxu0
      %v1087 = vadd.f32 0.0, %v1086
      %1088 = vdwg.mxu0
      %1089 = vmatprep.subr.bf16.mxu0 0
      %1090 = vmatpush1.bf16.msra.mxu0 %v1026
      %1091 = vmatprep.subr.bf16.mxu0 0
      %1092 = vmatpush1.bf16.msra.mxu0 0
      %1093 = vmatprep.subr.bf16.mxu0 0
      %1094 = vmatpush1.bf16.msra.mxu0 0
      %1095 = vmatprep.subr.bf16.mxu0 0
      %1096 = vmatpush1.bf16.msra.mxu0 0
      %1097 = vmatprep.subr.bf16.mxu0 0
      %1098 = vmatpush1.bf16.msra.mxu0 0
      %1099 = vmatprep.subr.bf16.mxu0 0
      %1100 = vmatpush1.bf16.msra.mxu0 0
      %1101 = vmatprep.subr.bf16.mxu0 0
      %1102 = vmatpush1.bf16.msra.mxu0 0
      %1103 = vmatprep.subr.bf16.mxu0 0
      %1104 = vmatpush1.bf16.msra.mxu0 0
      %1105 = vmatprep.subr.bf16.mxu0 0
      %1106 = vmatpush1.bf16.msra.mxu0 0
      %1107 = vmatprep.subr.bf16.mxu0 0
      %1108 = vmatpush1.bf16.msra.mxu0 0
      %1109 = vmatprep.subr.bf16.mxu0 0
      %1110 = vmatpush1.bf16.msra.mxu0 0
      %1111 = vmatprep.subr.bf16.mxu0 0
      %1112 = vmatpush1.bf16.msra.mxu0 0
      %1113 = vmatprep.subr.bf16.mxu0 0
      %1114 = vmatpush1.bf16.msra.mxu0 0
      %1115 = vmatprep.subr.bf16.mxu0 0
      %1116 = vmatpush1.bf16.msra.mxu0 0
      %1117 = vmatprep.subr.bf16.mxu0 0
      %1118 = vmatpush1.bf16.msra.mxu0 0
      %1119 = vmatprep.subr.bf16.mxu0 0
      %1120 = vmatpush1.bf16.msra.mxu0 0
      %1121 = vmatprep.mubr.bf16.mxu0 0
      %1122 = vmatmul.mubr.bf16.gmra.mrb[0].mxu0 %v1031
      %v1123 = vpop.f32.mrb[0].mxu0
      %v1124 = vadd.f32 0.0, %v1123
      %v1125 = vpop.f32.mrb[0].mxu0
      %v1126 = vpop.f32.mrb[0].mxu0
      %v1127 = vadd.f32 0.0, %v1126
      %v1128 = vpop.f32.mrb[0].mxu0
      %1129 = vmatprep.mubr.bf16.mxu0 0
      %1130 = vmatmul.mubr.bf16.gmra.mrb[0].mxu0 %v1034
      %v1131 = vpop.f32.mrb[0].mxu0
      %v1132 = vadd.f32 0.0, %v1131
      %v1133 = vpop.f32.mrb[0].mxu0
      %v1134 = vpop.f32.mrb[0].mxu0
      %v1135 = vadd.f32 0.0, %v1134
      %v1136 = vpop.f32.mrb[0].mxu0
      %1137 = vdwg.mxu0
      %v1138 = vadd.f32 %v988, %v1071
      %v1139 = vadd.f32 %v989, %v1073
      %v1140 = vadd.f32 %v990, %v1124
      %v1141 = vadd.f32 %v991, %v1075
      %v1142 = vadd.f32 %v992, %v1077
      %v1143 = vadd.f32 %v993, %v1127
      %v1144 = vadd.f32 %v994, %v1081
      %v1145 = vadd.f32 %v995, %v1083
      %v1146 = vadd.f32 %v996, %v1132
      %v1147 = vadd.f32 %v997, %v1085
      %v1148 = vadd.f32 %v998, %v1087
      %v1149 = vadd.f32 %v999, %v1135
      %s1150 = scalar_lea.vmem %s1, 96
      %v1151 = vld [vmem:[%s1150] sm:$0xf]
      %v1152 = vld [vmem:[%s1150 + $0x4] sm:$0xf]
      %v1153 = vld [vmem:[%s1150 + $0x8] sm:$0xf]
      %v1154 = vld [vmem:[%s1150 + $0xc] sm:$0xf]
      %v1159 = vunpack.c.l.b16 %v1151
      %v1160 = vunpack.c.l.b16 %v1152
      %v1161 = vunpack.c.l.b16 %v1153
      %v1162 = vunpack.c.l.b16 %v1154
      %v1163 = vpack.c.b16 %v1160, %v1159
      %v1164 = vpack.c.b16 %v1162, %v1161
      %1165 = vrot.lane.b32.xlu0 %v301, 80
      %v1166 = vpop.permute.xlu0 %1165
      %1167 = vrot.lane.b32.xlu0 %v302, 80
      %v1168 = vpop.permute.xlu0 %1167
      %1169 = vrot.lane.b32.xlu0 %v303, 80
      %v1170 = vpop.permute.xlu0 %1169
      %1171 = vrot.lane.b32.xlu0 %v304, 80
      %v1172 = vpop.permute.xlu0 %1171
      %vm1173 = vcmask 654336
      %v1174 = vsel %vm1173, %v1166, %v1168
      %v1175 = vsel %vm1173, %v1168, %v1170
      %v1176 = vsel %vm1173, %v1170, %v1172
      %v1181 = vsel %vm320, %v1163, 0
      %v1184 = vsel %vm320, %v1164, 0
      %1186 = vmatprep.subr.bf16.mxu0 %v1175
      %1187 = vmatpush1.bf16.msra.mxu0 %v1174
      %1188 = vmatprep.subr.bf16.mxu0 0
      %1189 = vmatpush1.bf16.msra.mxu0 0
      %1190 = vmatprep.subr.bf16.mxu0 0
      %1191 = vmatpush1.bf16.msra.mxu0 0
      %1192 = vmatprep.subr.bf16.mxu0 0
      %1193 = vmatpush1.bf16.msra.mxu0 0
      %1194 = vmatprep.subr.bf16.mxu0 0
      %1195 = vmatpush1.bf16.msra.mxu0 0
      %1196 = vmatprep.subr.bf16.mxu0 0
      %1197 = vmatpush1.bf16.msra.mxu0 0
      %1198 = vmatprep.subr.bf16.mxu0 0
      %1199 = vmatpush1.bf16.msra.mxu0 0
      %1200 = vmatprep.subr.bf16.mxu0 0
      %1201 = vmatpush1.bf16.msra.mxu0 0
      %1202 = vmatprep.subr.bf16.mxu0 0
      %1203 = vmatpush1.bf16.msra.mxu0 0
      %1204 = vmatprep.subr.bf16.mxu0 0
      %1205 = vmatpush1.bf16.msra.mxu0 0
      %1206 = vmatprep.subr.bf16.mxu0 0
      %1207 = vmatpush1.bf16.msra.mxu0 0
      %1208 = vmatprep.subr.bf16.mxu0 0
      %1209 = vmatpush1.bf16.msra.mxu0 0
      %1210 = vmatprep.subr.bf16.mxu0 0
      %1211 = vmatpush1.bf16.msra.mxu0 0
      %1212 = vmatprep.subr.bf16.mxu0 0
      %1213 = vmatpush1.bf16.msra.mxu0 0
      %1214 = vmatprep.subr.bf16.mxu0 0
      %1215 = vmatpush1.bf16.msra.mxu0 0
      %1216 = vmatprep.subr.bf16.mxu0 0
      %1217 = vmatpush1.bf16.msra.mxu0 0
      %1218 = vmatprep.mubr.bf16.mxu0 0
      %1219 = vmatmul.mubr.bf16.gmra.mrb[0].mxu0 %v1181
      %v1220 = vpop.f32.mrb[0].mxu0
      %v1221 = vadd.f32 0.0, %v1220
      %v1222 = vpop.f32.mrb[0].mxu0
      %v1223 = vadd.f32 0.0, %v1222
      %v1224 = vpop.f32.mrb[0].mxu0
      %v1225 = vadd.f32 0.0, %v1224
      %v1226 = vpop.f32.mrb[0].mxu0
      %v1227 = vadd.f32 0.0, %v1226
      %1228 = vmatprep.mubr.bf16.mxu0 0
      %1229 = vmatmul.mubr.bf16.gmra.mrb[0].mxu0 %v1184
      %v1230 = vpop.f32.mrb[0].mxu0
      %v1231 = vadd.f32 0.0, %v1230
      %v1232 = vpop.f32.mrb[0].mxu0
      %v1233 = vadd.f32 0.0, %v1232
      %v1234 = vpop.f32.mrb[0].mxu0
      %v1235 = vadd.f32 0.0, %v1234
      %v1236 = vpop.f32.mrb[0].mxu0
      %v1237 = vadd.f32 0.0, %v1236
      %1238 = vdwg.mxu0
      %1239 = vmatprep.subr.bf16.mxu0 0
      %1240 = vmatpush1.bf16.msra.mxu0 %v1176
      %1241 = vmatprep.subr.bf16.mxu0 0
      %1242 = vmatpush1.bf16.msra.mxu0 0
      %1243 = vmatprep.subr.bf16.mxu0 0
      %1244 = vmatpush1.bf16.msra.mxu0 0
      %1245 = vmatprep.subr.bf16.mxu0 0
      %1246 = vmatpush1.bf16.msra.mxu0 0
      %1247 = vmatprep.subr.bf16.mxu0 0
      %1248 = vmatpush1.bf16.msra.mxu0 0
      %1249 = vmatprep.subr.bf16.mxu0 0
      %1250 = vmatpush1.bf16.msra.mxu0 0
      %1251 = vmatprep.subr.bf16.mxu0 0
      %1252 = vmatpush1.bf16.msra.mxu0 0
      %1253 = vmatprep.subr.bf16.mxu0 0
      %1254 = vmatpush1.bf16.msra.mxu0 0
      %1255 = vmatprep.subr.bf16.mxu0 0
      %1256 = vmatpush1.bf16.msra.mxu0 0
      %1257 = vmatprep.subr.bf16.mxu0 0
      %1258 = vmatpush1.bf16.msra.mxu0 0
      %1259 = vmatprep.subr.bf16.mxu0 0
      %1260 = vmatpush1.bf16.msra.mxu0 0
      %1261 = vmatprep.subr.bf16.mxu0 0
      %1262 = vmatpush1.bf16.msra.mxu0 0
      %1263 = vmatprep.subr.bf16.mxu0 0
      %1264 = vmatpush1.bf16.msra.mxu0 0
      %1265 = vmatprep.subr.bf16.mxu0 0
      %1266 = vmatpush1.bf16.msra.mxu0 0
      %1267 = vmatprep.subr.bf16.mxu0 0
      %1268 = vmatpush1.bf16.msra.mxu0 0
      %1269 = vmatprep.subr.bf16.mxu0 0
      %1270 = vmatpush1.bf16.msra.mxu0 0
      %1271 = vmatprep.mubr.bf16.mxu0 0
      %1272 = vmatmul.mubr.bf16.gmra.mrb[0].mxu0 %v1181
      %v1273 = vpop.f32.mrb[0].mxu0
      %v1274 = vadd.f32 0.0, %v1273
      %v1275 = vpop.f32.mrb[0].mxu0
      %v1276 = vpop.f32.mrb[0].mxu0
      %v1277 = vadd.f32 0.0, %v1276
      %v1278 = vpop.f32.mrb[0].mxu0
      %1279 = vmatprep.mubr.bf16.mxu0 0
      %1280 = vmatmul.mubr.bf16.gmra.mrb[0].mxu0 %v1184
      %v1281 = vpop.f32.mrb[0].mxu0
      %v1282 = vadd.f32 0.0, %v1281
      %v1283 = vpop.f32.mrb[0].mxu0
      %v1284 = vpop.f32.mrb[0].mxu0
      %v1285 = vadd.f32 0.0, %v1284
      %v1286 = vpop.f32.mrb[0].mxu0
      %1287 = vdwg.mxu0
      %v1288 = vadd.f32 %v1138, %v1221
      %v1289 = vadd.f32 %v1139, %v1223
      %v1290 = vadd.f32 %v1140, %v1274
      %v1291 = vadd.f32 %v1141, %v1225
      %v1292 = vadd.f32 %v1142, %v1227
      %v1293 = vadd.f32 %v1143, %v1277
      %v1294 = vadd.f32 %v1144, %v1231
      %v1295 = vadd.f32 %v1145, %v1233
      %v1296 = vadd.f32 %v1146, %v1282
      %v1297 = vadd.f32 %v1147, %v1235
      %v1298 = vadd.f32 %v1148, %v1237
      %v1299 = vadd.f32 %v1149, %v1285
      %s1300 = scalar_lea.vmem %s1, 112
      %v1301 = vld [vmem:[%s1300] sm:$0xf]
      %v1302 = vld [vmem:[%s1300 + $0x4] sm:$0xf]
      %v1303 = vld [vmem:[%s1300 + $0x8] sm:$0xf]
      %v1304 = vld [vmem:[%s1300 + $0xc] sm:$0xf]
      %v1309 = vunpack.c.l.b16 %v1301
      %v1310 = vunpack.c.l.b16 %v1302
      %v1311 = vunpack.c.l.b16 %v1303
      %v1312 = vunpack.c.l.b16 %v1304
      %v1313 = vpack.c.b16 %v1310, %v1309
      %v1314 = vpack.c.b16 %v1312, %v1311
      %1315 = vrot.lane.b32.xlu0 %v301, 79
      %v1316 = vpop.permute.xlu0 %1315
      %1317 = vrot.lane.b32.xlu0 %v302, 79
      %v1318 = vpop.permute.xlu0 %1317
      %1319 = vrot.lane.b32.xlu0 %v303, 79
      %v1320 = vpop.permute.xlu0 %1319
      %1321 = vrot.lane.b32.xlu0 %v304, 79
      %v1322 = vpop.permute.xlu0 %1321
      %vm1323 = vcmask 646144
      %v1324 = vsel %vm1323, %v1316, %v1318
      %v1325 = vsel %vm1323, %v1318, %v1320
      %v1326 = vsel %vm1323, %v1320, %v1322
      %v1331 = vsel %vm320, %v1313, 0
      %v1334 = vsel %vm320, %v1314, 0
      %1336 = vmatprep.subr.bf16.mxu0 %v1325
      %1337 = vmatpush1.bf16.msra.mxu0 %v1324
      %1338 = vmatprep.subr.bf16.mxu0 0
      %1339 = vmatpush1.bf16.msra.mxu0 0
      %1340 = vmatprep.subr.bf16.mxu0 0
      %1341 = vmatpush1.bf16.msra.mxu0 0
      %1342 = vmatprep.subr.bf16.mxu0 0
      %1343 = vmatpush1.bf16.msra.mxu0 0
      %1344 = vmatprep.subr.bf16.mxu0 0
      %1345 = vmatpush1.bf16.msra.mxu0 0
      %1346 = vmatprep.subr.bf16.mxu0 0
      %1347 = vmatpush1.bf16.msra.mxu0 0
      %1348 = vmatprep.subr.bf16.mxu0 0
      %1349 = vmatpush1.bf16.msra.mxu0 0
      %1350 = vmatprep.subr.bf16.mxu0 0
      %1351 = vmatpush1.bf16.msra.mxu0 0
      %1352 = vmatprep.subr.bf16.mxu0 0
      %1353 = vmatpush1.bf16.msra.mxu0 0
      %1354 = vmatprep.subr.bf16.mxu0 0
      %1355 = vmatpush1.bf16.msra.mxu0 0
      %1356 = vmatprep.subr.bf16.mxu0 0
      %1357 = vmatpush1.bf16.msra.mxu0 0
      %1358 = vmatprep.subr.bf16.mxu0 0
      %1359 = vmatpush1.bf16.msra.mxu0 0
      %1360 = vmatprep.subr.bf16.mxu0 0
      %1361 = vmatpush1.bf16.msra.mxu0 0
      %1362 = vmatprep.subr.bf16.mxu0 0
      %1363 = vmatpush1.bf16.msra.mxu0 0
      %1364 = vmatprep.subr.bf16.mxu0 0
      %1365 = vmatpush1.bf16.msra.mxu0 0
      %1366 = vmatprep.subr.bf16.mxu0 0
      %1367 = vmatpush1.bf16.msra.mxu0 0
      %1368 = vmatprep.mubr.bf16.mxu0 0
      %1369 = vmatmul.mubr.bf16.gmra.mrb[0].mxu0 %v1331
      %v1370 = vpop.f32.mrb[0].mxu0
      %v1371 = vadd.f32 0.0, %v1370
      %v1372 = vpop.f32.mrb[0].mxu0
      %v1373 = vadd.f32 0.0, %v1372
      %v1374 = vpop.f32.mrb[0].mxu0
      %v1375 = vadd.f32 0.0, %v1374
      %v1376 = vpop.f32.mrb[0].mxu0
      %v1377 = vadd.f32 0.0, %v1376
      %1378 = vmatprep.mubr.bf16.mxu0 0
      %1379 = vmatmul.mubr.bf16.gmra.mrb[0].mxu0 %v1334
      %v1380 = vpop.f32.mrb[0].mxu0
      %v1381 = vadd.f32 0.0, %v1380
      %v1382 = vpop.f32.mrb[0].mxu0
      %v1383 = vadd.f32 0.0, %v1382
      %v1384 = vpop.f32.mrb[0].mxu0
      %v1385 = vadd.f32 0.0, %v1384
      %v1386 = vpop.f32.mrb[0].mxu0
      %v1387 = vadd.f32 0.0, %v1386
      %1388 = vdwg.mxu0
      %1389 = vmatprep.subr.bf16.mxu0 0
      %1390 = vmatpush1.bf16.msra.mxu0 %v1326
      %1391 = vmatprep.subr.bf16.mxu0 0
      %1392 = vmatpush1.bf16.msra.mxu0 0
      %1393 = vmatprep.subr.bf16.mxu0 0
      %1394 = vmatpush1.bf16.msra.mxu0 0
      %1395 = vmatprep.subr.bf16.mxu0 0
      %1396 = vmatpush1.bf16.msra.mxu0 0
      %1397 = vmatprep.subr.bf16.mxu0 0
      %1398 = vmatpush1.bf16.msra.mxu0 0
      %1399 = vmatprep.subr.bf16.mxu0 0
      %1400 = vmatpush1.bf16.msra.mxu0 0
      %1401 = vmatprep.subr.bf16.mxu0 0
      %1402 = vmatpush1.bf16.msra.mxu0 0
      %1403 = vmatprep.subr.bf16.mxu0 0
      %1404 = vmatpush1.bf16.msra.mxu0 0
      %1405 = vmatprep.subr.bf16.mxu0 0
      %1406 = vmatpush1.bf16.msra.mxu0 0
      %1407 = vmatprep.subr.bf16.mxu0 0
      %1408 = vmatpush1.bf16.msra.mxu0 0
      %1409 = vmatprep.subr.bf16.mxu0 0
      %1410 = vmatpush1.bf16.msra.mxu0 0
      %1411 = vmatprep.subr.bf16.mxu0 0
      %1412 = vmatpush1.bf16.msra.mxu0 0
      %1413 = vmatprep.subr.bf16.mxu0 0
      %1414 = vmatpush1.bf16.msra.mxu0 0
      %1415 = vmatprep.subr.bf16.mxu0 0
      %1416 = vmatpush1.bf16.msra.mxu0 0
      %1417 = vmatprep.subr.bf16.mxu0 0
      %1418 = vmatpush1.bf16.msra.mxu0 0
      %1419 = vmatprep.subr.bf16.mxu0 0
      %1420 = vmatpush1.bf16.msra.mxu0 0
      %1421 = vmatprep.mubr.bf16.mxu0 0
      %1422 = vmatmul.mubr.bf16.gmra.mrb[0].mxu0 %v1331
      %v1423 = vpop.f32.mrb[0].mxu0
      %v1424 = vadd.f32 0.0, %v1423
      %v1425 = vpop.f32.mrb[0].mxu0
      %v1426 = vpop.f32.mrb[0].mxu0
      %v1427 = vadd.f32 0.0, %v1426
      %v1428 = vpop.f32.mrb[0].mxu0
      %1429 = vmatprep.mubr.bf16.mxu0 0
      %1430 = vmatmul.mubr.bf16.gmra.mrb[0].mxu0 %v1334
      %v1431 = vpop.f32.mrb[0].mxu0
      %v1432 = vadd.f32 0.0, %v1431
      %v1433 = vpop.f32.mrb[0].mxu0
      %v1434 = vpop.f32.mrb[0].mxu0
      %v1435 = vadd.f32 0.0, %v1434
      %v1436 = vpop.f32.mrb[0].mxu0
      %1437 = vdwg.mxu0
      %v1438 = vadd.f32 %v1288, %v1371
      %v1439 = vadd.f32 %v1289, %v1373
      %v1440 = vadd.f32 %v1290, %v1424
      %v1441 = vadd.f32 %v1291, %v1375
      %v1442 = vadd.f32 %v1292, %v1377
      %v1443 = vadd.f32 %v1293, %v1427
      %v1444 = vadd.f32 %v1294, %v1381
      %v1445 = vadd.f32 %v1295, %v1383
      %v1446 = vadd.f32 %v1296, %v1432
      %v1447 = vadd.f32 %v1297, %v1385
      %v1448 = vadd.f32 %v1298, %v1387
      %v1449 = vadd.f32 %v1299, %v1435
      %s1450 = scalar_lea.vmem %s1, 128
      %v1451 = vld [vmem:[%s1450] sm:$0xf]
      %v1452 = vld [vmem:[%s1450 + $0x4] sm:$0xf]
      %v1453 = vld [vmem:[%s1450 + $0x8] sm:$0xf]
      %v1454 = vld [vmem:[%s1450 + $0xc] sm:$0xf]
      %v1459 = vunpack.c.l.b16 %v1451
      %v1460 = vunpack.c.l.b16 %v1452
      %v1461 = vunpack.c.l.b16 %v1453
      %v1462 = vunpack.c.l.b16 %v1454
      %v1463 = vpack.c.b16 %v1460, %v1459
      %v1464 = vpack.c.b16 %v1462, %v1461
      %1465 = vrot.lane.b32.xlu0 %v301, 78
      %v1466 = vpop.permute.xlu0 %1465
      %1467 = vrot.lane.b32.xlu0 %v302, 78
      %v1468 = vpop.permute.xlu0 %1467
      %1469 = vrot.lane.b32.xlu0 %v303, 78
      %v1470 = vpop.permute.xlu0 %1469
      %1471 = vrot.lane.b32.xlu0 %v304, 78
      %v1472 = vpop.permute.xlu0 %1471
      %vm1473 = vcmask 637952
      %v1474 = vsel %vm1473, %v1466, %v1468
      %v1475 = vsel %vm1473, %v1468, %v1470
      %v1476 = vsel %vm1473, %v1470, %v1472
      %v1481 = vsel %vm320, %v1463, 0
      %v1484 = vsel %vm320, %v1464, 0
      %1486 = vmatprep.subr.bf16.mxu0 %v1475
      %1487 = vmatpush1.bf16.msra.mxu0 %v1474
      %1488 = vmatprep.subr.bf16.mxu0 0
      %1489 = vmatpush1.bf16.msra.mxu0 0
      %1490 = vmatprep.subr.bf16.mxu0 0
      %1491 = vmatpush1.bf16.msra.mxu0 0
      %1492 = vmatprep.subr.bf16.mxu0 0
      %1493 = vmatpush1.bf16.msra.mxu0 0
      %1494 = vmatprep.subr.bf16.mxu0 0
      %1495 = vmatpush1.bf16.msra.mxu0 0
      %1496 = vmatprep.subr.bf16.mxu0 0
      %1497 = vmatpush1.bf16.msra.mxu0 0
      %1498 = vmatprep.subr.bf16.mxu0 0
      %1499 = vmatpush1.bf16.msra.mxu0 0
      %1500 = vmatprep.subr.bf16.mxu0 0
      %1501 = vmatpush1.bf16.msra.mxu0 0
      %1502 = vmatprep.subr.bf16.mxu0 0
      %1503 = vmatpush1.bf16.msra.mxu0 0
      %1504 = vmatprep.subr.bf16.mxu0 0
      %1505 = vmatpush1.bf16.msra.mxu0 0
      %1506 = vmatprep.subr.bf16.mxu0 0
      %1507 = vmatpush1.bf16.msra.mxu0 0
      %1508 = vmatprep.subr.bf16.mxu0 0
      %1509 = vmatpush1.bf16.msra.mxu0 0
      %1510 = vmatprep.subr.bf16.mxu0 0
      %1511 = vmatpush1.bf16.msra.mxu0 0
      %1512 = vmatprep.subr.bf16.mxu0 0
      %1513 = vmatpush1.bf16.msra.mxu0 0
      %1514 = vmatprep.subr.bf16.mxu0 0
      %1515 = vmatpush1.bf16.msra.mxu0 0
      %1516 = vmatprep.subr.bf16.mxu0 0
      %1517 = vmatpush1.bf16.msra.mxu0 0
      %1518 = vmatprep.mubr.bf16.mxu0 0
      %1519 = vmatmul.mubr.bf16.gmra.mrb[0].mxu0 %v1481
      %v1520 = vpop.f32.mrb[0].mxu0
      %v1521 = vadd.f32 0.0, %v1520
      %v1522 = vpop.f32.mrb[0].mxu0
      %v1523 = vadd.f32 0.0, %v1522
      %v1524 = vpop.f32.mrb[0].mxu0
      %v1525 = vadd.f32 0.0, %v1524
      %v1526 = vpop.f32.mrb[0].mxu0
      %v1527 = vadd.f32 0.0, %v1526
      %1528 = vmatprep.mubr.bf16.mxu0 0
      %1529 = vmatmul.mubr.bf16.gmra.mrb[0].mxu0 %v1484
      %v1530 = vpop.f32.mrb[0].mxu0
      %v1531 = vadd.f32 0.0, %v1530
      %v1532 = vpop.f32.mrb[0].mxu0
      %v1533 = vadd.f32 0.0, %v1532
      %v1534 = vpop.f32.mrb[0].mxu0
      %v1535 = vadd.f32 0.0, %v1534
      %v1536 = vpop.f32.mrb[0].mxu0
      %v1537 = vadd.f32 0.0, %v1536
      %1538 = vdwg.mxu0
      %1539 = vmatprep.subr.bf16.mxu0 0
      %1540 = vmatpush1.bf16.msra.mxu0 %v1476
      %1541 = vmatprep.subr.bf16.mxu0 0
      %1542 = vmatpush1.bf16.msra.mxu0 0
      %1543 = vmatprep.subr.bf16.mxu0 0
      %1544 = vmatpush1.bf16.msra.mxu0 0
      %1545 = vmatprep.subr.bf16.mxu0 0
      %1546 = vmatpush1.bf16.msra.mxu0 0
      %1547 = vmatprep.subr.bf16.mxu0 0
      %1548 = vmatpush1.bf16.msra.mxu0 0
      %1549 = vmatprep.subr.bf16.mxu0 0
      %1550 = vmatpush1.bf16.msra.mxu0 0
      %1551 = vmatprep.subr.bf16.mxu0 0
      %1552 = vmatpush1.bf16.msra.mxu0 0
      %1553 = vmatprep.subr.bf16.mxu0 0
      %1554 = vmatpush1.bf16.msra.mxu0 0
      %1555 = vmatprep.subr.bf16.mxu0 0
      %1556 = vmatpush1.bf16.msra.mxu0 0
      %1557 = vmatprep.subr.bf16.mxu0 0
      %1558 = vmatpush1.bf16.msra.mxu0 0
      %1559 = vmatprep.subr.bf16.mxu0 0
      %1560 = vmatpush1.bf16.msra.mxu0 0
      %1561 = vmatprep.subr.bf16.mxu0 0
      %1562 = vmatpush1.bf16.msra.mxu0 0
      %1563 = vmatprep.subr.bf16.mxu0 0
      %1564 = vmatpush1.bf16.msra.mxu0 0
      %1565 = vmatprep.subr.bf16.mxu0 0
      %1566 = vmatpush1.bf16.msra.mxu0 0
      %1567 = vmatprep.subr.bf16.mxu0 0
      %1568 = vmatpush1.bf16.msra.mxu0 0
      %1569 = vmatprep.subr.bf16.mxu0 0
      %1570 = vmatpush1.bf16.msra.mxu0 0
      %1571 = vmatprep.mubr.bf16.mxu0 0
      %1572 = vmatmul.mubr.bf16.gmra.mrb[0].mxu0 %v1481
      %v1573 = vpop.f32.mrb[0].mxu0
      %v1574 = vadd.f32 0.0, %v1573
      %v1575 = vpop.f32.mrb[0].mxu0
      %v1576 = vpop.f32.mrb[0].mxu0
      %v1577 = vadd.f32 0.0, %v1576
      %v1578 = vpop.f32.mrb[0].mxu0
      %1579 = vmatprep.mubr.bf16.mxu0 0
      %1580 = vmatmul.mubr.bf16.gmra.mrb[0].mxu0 %v1484
      %v1581 = vpop.f32.mrb[0].mxu0
      %v1582 = vadd.f32 0.0, %v1581
      %v1583 = vpop.f32.mrb[0].mxu0
      %v1584 = vpop.f32.mrb[0].mxu0
      %v1585 = vadd.f32 0.0, %v1584
      %v1586 = vpop.f32.mrb[0].mxu0
      %1587 = vdwg.mxu0
      %v1588 = vadd.f32 %v1438, %v1521
      %v1589 = vadd.f32 %v1439, %v1523
      %v1590 = vadd.f32 %v1440, %v1574
      %v1591 = vadd.f32 %v1441, %v1525
      %v1592 = vadd.f32 %v1442, %v1527
      %v1593 = vadd.f32 %v1443, %v1577
      %v1594 = vadd.f32 %v1444, %v1531
      %v1595 = vadd.f32 %v1445, %v1533
      %v1596 = vadd.f32 %v1446, %v1582
      %v1597 = vadd.f32 %v1447, %v1535
      %v1598 = vadd.f32 %v1448, %v1537
      %v1599 = vadd.f32 %v1449, %v1585
      %v1600 = vld [vmem:[%s2] sm:$0xff]
      %v1601 = vld [vmem:[%s2 + $0x8] sm:$0xff]
      %v1602 = vld [vmem:[%s2 + $0x10] sm:$0xff]
      %v1603 = vld [vmem:[%s2 + $0x18] sm:$0xff]
      %1605 = vset.pattern.permute.xlu0 0
      %1606 = vperm.xlu0 %1605, %v1600
      %v1607 = vpop.permute.xlu0 %1606
      %1610 = vset.pattern.permute.xlu0 0
      %1611 = vperm.xlu0 %1610, %v1601
      %v1612 = vpop.permute.xlu0 %1611
      %1615 = vset.pattern.permute.xlu0 0
      %1616 = vperm.xlu0 %1615, %v1602
      %v1617 = vpop.permute.xlu0 %1616
      %1620 = vset.pattern.permute.xlu0 0
      %1621 = vperm.xlu0 %1620, %v1603
      %v1622 = vpop.permute.xlu0 %1621
      %v1624 = vadd.f32 %v1588, %v1607
      %v1625 = vadd.f32 %v1589, %v1607
      %v1626 = vadd.f32 %v1590, %v1607
      %v1627 = vadd.f32 %v1591, %v1612
      %v1628 = vadd.f32 %v1592, %v1612
      %v1629 = vadd.f32 %v1593, %v1612
      %v1630 = vadd.f32 %v1594, %v1617
      %v1631 = vadd.f32 %v1595, %v1617
      %v1632 = vadd.f32 %v1596, %v1617
      %v1633 = vadd.f32 %v1597, %v1622
      %v1634 = vadd.f32 %v1598, %v1622
      %v1635 = vadd.f32 %v1599, %v1622
      %v1636 = vmax.f32 %v1624, 0.0
      %v1637 = vmax.f32 %v1625, 0.0
      %v1638 = vmax.f32 %v1626, 0.0
      %v1639 = vmax.f32 %v1627, 0.0
      %v1640 = vmax.f32 %v1628, 0.0
      %v1641 = vmax.f32 %v1629, 0.0
      %v1642 = vmax.f32 %v1630, 0.0
      %v1643 = vmax.f32 %v1631, 0.0
      %v1644 = vmax.f32 %v1632, 0.0
      %v1645 = vmax.f32 %v1633, 0.0
      %v1646 = vmax.f32 %v1634, 0.0
      %v1647 = vmax.f32 %v1635, 0.0
      %v1648 = vld [vmem:[%s3] sm:$0xf]
      %v1649 = vld [vmem:[%s3 + $0x4] sm:$0xf]
      %v1650 = vld [vmem:[%s3 + $0x8] sm:$0xf]
      %v1651 = vld [vmem:[%s3 + $0xc] sm:$0xf]
      %v1652 = vld [vmem:[%s3 + $0x10] sm:$0xf]
      %v1653 = vld [vmem:[%s3 + $0x14] sm:$0xf]
      %v1654 = vld [vmem:[%s3 + $0x18] sm:$0xf]
      %v1655 = vpack.c.bf16 %v1639, %v1636
      %v1656 = vpack.c.bf16 %v1640, %v1637
      %v1657 = vpack.c.bf16 %v1641, %v1638
      %v1658 = vpack.c.bf16 %v1645, %v1642
      %v1659 = vpack.c.bf16 %v1646, %v1643
      %v1660 = vpack.c.bf16 %v1647, %v1644
      %v1661 = vld [vmem:[%s4] sm:$0xff]
      %v1662 = vld [vmem:[%s4 + $0x8] sm:$0xff]
      %v1663 = vld [vmem:[%s4 + $0x10] sm:$0xff]
      %v1664 = vld [vmem:[%s4 + $0x18] sm:$0xff]
      %v1665 = vld [vmem:[%s4 + $0x20] sm:$0xff]
      %v1666 = vld [vmem:[%s4 + $0x28] sm:$0xff]
      %v1667 = vld [vmem:[%s4 + $0x30] sm:$0xff]
      %1669 = vset.pattern.permute.xlu0 0
      %1670 = vperm.xlu0 %1669, %v1661
      %v1671 = vpop.permute.xlu0 %1670
      %1674 = vset.pattern.permute.xlu0 0
      %1675 = vperm.xlu0 %1674, %v1662
      %v1676 = vpop.permute.xlu0 %1675
      %1679 = vset.pattern.permute.xlu0 0
      %1680 = vperm.xlu0 %1679, %v1663
      %v1681 = vpop.permute.xlu0 %1680
      %1684 = vset.pattern.permute.xlu0 0
      %1685 = vperm.xlu0 %1684, %v1664
      %v1686 = vpop.permute.xlu0 %1685
      %1689 = vset.pattern.permute.xlu0 0
      %1690 = vperm.xlu0 %1689, %v1665
      %v1691 = vpop.permute.xlu0 %1690
      %1694 = vset.pattern.permute.xlu0 0
      %1695 = vperm.xlu0 %1694, %v1666
      %v1696 = vpop.permute.xlu0 %1695
      %1699 = vset.pattern.permute.xlu0 0
      %1700 = vperm.xlu0 %1699, %v1667
      %v1701 = vpop.permute.xlu0 %1700
      %v1710 = vunpack.c.l.b16 %v1648
      %v1711 = vunpack.c.l.b16 %v1649
      %v1712 = vunpack.c.l.b16 %v1650
      %v1713 = vunpack.c.l.b16 %v1651
      %v1714 = vunpack.c.l.b16 %v1652
      %v1715 = vunpack.c.l.b16 %v1653
      %v1716 = vunpack.c.l.b16 %v1654
      %v1717 = vpack.c.b16 %v1711, %v1710
      %v1718 = vpack.c.b16 %v1713, %v1712
      %v1719 = vpack.c.b16 %v1715, %v1714
      %v1720 = vpack.c.b16 %v1716, %v1716
      %vm1721 = vcmask 261120
      %v1723 = vsel %vm1721, %v1717, 0
      %v1726 = vsel %vm1721, %v1718, 0
      %v1729 = vsel %vm1721, %v1719, 0
      %v1732 = vsel %vm1721, %v1720, 0
      %1734 = vmatprep.subr.bf16.mxu0 %v1656
      %1735 = vmatpush1.bf16.msra.mxu0 %v1655
      %1736 = vmatprep.subr.bf16.mxu0 %v1659
      %1737 = vmatpush1.bf16.msra.mxu0 %v1658
      %1738 = vmatprep.subr.bf16.mxu0 0
      %1739 = vmatpush1.bf16.msra.mxu0 0
      %1740 = vmatprep.subr.bf16.mxu0 0
      %1741 = vmatpush1.bf16.msra.mxu0 0
      %1742 = vmatprep.subr.bf16.mxu0 0
      %1743 = vmatpush1.bf16.msra.mxu0 0
      %1744 = vmatprep.subr.bf16.mxu0 0
      %1745 = vmatpush1.bf16.msra.mxu0 0
      %1746 = vmatprep.subr.bf16.mxu0 0
      %1747 = vmatpush1.bf16.msra.mxu0 0
      %1748 = vmatprep.subr.bf16.mxu0 0
      %1749 = vmatpush1.bf16.msra.mxu0 0
      %1750 = vmatprep.subr.bf16.mxu0 0
      %1751 = vmatpush1.bf16.msra.mxu0 0
      %1752 = vmatprep.subr.bf16.mxu0 0
      %1753 = vmatpush1.bf16.msra.mxu0 0
      %1754 = vmatprep.subr.bf16.mxu0 0
      %1755 = vmatpush1.bf16.msra.mxu0 0
      %1756 = vmatprep.subr.bf16.mxu0 0
      %1757 = vmatpush1.bf16.msra.mxu0 0
      %1758 = vmatprep.subr.bf16.mxu0 0
      %1759 = vmatpush1.bf16.msra.mxu0 0
      %1760 = vmatprep.subr.bf16.mxu0 0
      %1761 = vmatpush1.bf16.msra.mxu0 0
      %1762 = vmatprep.subr.bf16.mxu0 0
      %1763 = vmatpush1.bf16.msra.mxu0 0
      %1764 = vmatprep.subr.bf16.mxu0 0
      %1765 = vmatpush1.bf16.msra.mxu0 0
      %1766 = vmatprep.mubr.bf16.mxu0 0
      %1767 = vmatmul.mubr.bf16.gmra.mrb[0].mxu0 %v1723
      %v1768 = vpop.f32.mrb[0].mxu0
      %v1769 = vadd.f32 %v1671, %v1768
      %v1770 = vpop.f32.mrb[0].mxu0
      %v1771 = vadd.f32 %v1671, %v1770
      %v1772 = vpop.f32.mrb[0].mxu0
      %v1773 = vadd.f32 %v1676, %v1772
      %v1774 = vpop.f32.mrb[0].mxu0
      %v1775 = vadd.f32 %v1676, %v1774
      %1776 = vmatprep.mubr.bf16.mxu0 0
      %1777 = vmatmul.mubr.bf16.gmra.mrb[0].mxu0 %v1726
      %v1778 = vpop.f32.mrb[0].mxu0
      %v1779 = vadd.f32 %v1681, %v1778
      %v1780 = vpop.f32.mrb[0].mxu0
      %v1781 = vadd.f32 %v1681, %v1780
      %v1782 = vpop.f32.mrb[0].mxu0
      %v1783 = vadd.f32 %v1686, %v1782
      %v1784 = vpop.f32.mrb[0].mxu0
      %v1785 = vadd.f32 %v1686, %v1784
      %1786 = vmatprep.mubr.bf16.mxu0 0
      %1787 = vmatmul.mubr.bf16.gmra.mrb[0].mxu0 %v1729
      %v1788 = vpop.f32.mrb[0].mxu0
      %v1789 = vadd.f32 %v1691, %v1788
      %v1790 = vpop.f32.mrb[0].mxu0
      %v1791 = vadd.f32 %v1691, %v1790
      %v1792 = vpop.f32.mrb[0].mxu0
      %v1793 = vadd.f32 %v1696, %v1792
      %v1794 = vpop.f32.mrb[0].mxu0
      %v1795 = vadd.f32 %v1696, %v1794
      %1796 = vmatprep.mubr.bf16.mxu0 0
      %1797 = vmatmul.mubr.bf16.gmra.mrb[0].mxu0 %v1732
      %v1798 = vpop.f32.mrb[0].mxu0
      %v1799 = vadd.f32 %v1701, %v1798
      %v1800 = vpop.f32.mrb[0].mxu0
      %v1801 = vadd.f32 %v1701, %v1800
      %v1802 = vpop.f32.mrb[0].mxu0
      %v1803 = vpop.f32.mrb[0].mxu0
      %1804 = vdwg.mxu0
      %1805 = vmatprep.subr.bf16.mxu0 0
      %1806 = vmatpush1.bf16.msra.mxu0 %v1657
      %1807 = vmatprep.subr.bf16.mxu0 0
      %1808 = vmatpush1.bf16.msra.mxu0 %v1660
      %1809 = vmatprep.subr.bf16.mxu0 0
      %1810 = vmatpush1.bf16.msra.mxu0 0
      %1811 = vmatprep.subr.bf16.mxu0 0
      %1812 = vmatpush1.bf16.msra.mxu0 0
      %1813 = vmatprep.subr.bf16.mxu0 0
      %1814 = vmatpush1.bf16.msra.mxu0 0
      %1815 = vmatprep.subr.bf16.mxu0 0
      %1816 = vmatpush1.bf16.msra.mxu0 0
      %1817 = vmatprep.subr.bf16.mxu0 0
      %1818 = vmatpush1.bf16.msra.mxu0 0
      %1819 = vmatprep.subr.bf16.mxu0 0
      %1820 = vmatpush1.bf16.msra.mxu0 0
      %1821 = vmatprep.subr.bf16.mxu0 0
      %1822 = vmatpush1.bf16.msra.mxu0 0
      %1823 = vmatprep.subr.bf16.mxu0 0
      %1824 = vmatpush1.bf16.msra.mxu0 0
      %1825 = vmatprep.subr.bf16.mxu0 0
      %1826 = vmatpush1.bf16.msra.mxu0 0
      %1827 = vmatprep.subr.bf16.mxu0 0
      %1828 = vmatpush1.bf16.msra.mxu0 0
      %1829 = vmatprep.subr.bf16.mxu0 0
      %1830 = vmatpush1.bf16.msra.mxu0 0
      %1831 = vmatprep.subr.bf16.mxu0 0
      %1832 = vmatpush1.bf16.msra.mxu0 0
      %1833 = vmatprep.subr.bf16.mxu0 0
      %1834 = vmatpush1.bf16.msra.mxu0 0
      %1835 = vmatprep.subr.bf16.mxu0 0
      %1836 = vmatpush1.bf16.msra.mxu0 0
      %1837 = vmatprep.mubr.bf16.mxu0 0
      %1838 = vmatmul.mubr.bf16.gmra.mrb[0].mxu0 %v1723
      %v1839 = vpop.f32.mrb[0].mxu0
      %v1840 = vadd.f32 %v1671, %v1839
      %v1841 = vpop.f32.mrb[0].mxu0
      %v1842 = vpop.f32.mrb[0].mxu0
      %v1843 = vadd.f32 %v1676, %v1842
      %v1844 = vpop.f32.mrb[0].mxu0
      %1845 = vmatprep.mubr.bf16.mxu0 0
      %1846 = vmatmul.mubr.bf16.gmra.mrb[0].mxu0 %v1726
      %v1847 = vpop.f32.mrb[0].mxu0
      %v1848 = vadd.f32 %v1681, %v1847
      %v1849 = vpop.f32.mrb[0].mxu0
      %v1850 = vpop.f32.mrb[0].mxu0
      %v1851 = vadd.f32 %v1686, %v1850
      %v1852 = vpop.f32.mrb[0].mxu0
      %1853 = vmatprep.mubr.bf16.mxu0 0
      %1854 = vmatmul.mubr.bf16.gmra.mrb[0].mxu0 %v1729
      %v1855 = vpop.f32.mrb[0].mxu0
      %v1856 = vadd.f32 %v1691, %v1855
      %v1857 = vpop.f32.mrb[0].mxu0
      %v1858 = vpop.f32.mrb[0].mxu0
      %v1859 = vadd.f32 %v1696, %v1858
      %v1860 = vpop.f32.mrb[0].mxu0
      %1861 = vmatprep.mubr.bf16.mxu0 0
      %1862 = vmatmul.mubr.bf16.gmra.mrb[0].mxu0 %v1732
      %v1863 = vpop.f32.mrb[0].mxu0
      %v1864 = vadd.f32 %v1701, %v1863
      %v1865 = vpop.f32.mrb[0].mxu0
      %v1866 = vpop.f32.mrb[0].mxu0
      %v1867 = vpop.f32.mrb[0].mxu0
      %1868 = vdwg.mxu0
      %1869 = vst [vmem:[%s264] sm:$0xff] %v1769
      %1870 = vst [vmem:[%s264 + $0x8] sm:$0xff] %v1771
      %1871 = vst [vmem:[%s264 + $0x10] sm:$0xff] %v1840
      %1872 = vst [vmem:[%s264 + $0x18] sm:$0xff] %v1773
      %1873 = vst [vmem:[%s264 + $0x20] sm:$0xff] %v1775
      %1874 = vst [vmem:[%s264 + $0x28] sm:$0xff] %v1843
      %1875 = vst [vmem:[%s264 + $0x30] sm:$0xff] %v1779
      %1876 = vst [vmem:[%s264 + $0x38] sm:$0xff] %v1781
      %1877 = vst [vmem:[%s264 + $0x40] sm:$0xff] %v1848
      %1878 = vst [vmem:[%s264 + $0x48] sm:$0xff] %v1783
      %1879 = vst [vmem:[%s264 + $0x50] sm:$0xff] %v1785
      %1880 = vst [vmem:[%s264 + $0x58] sm:$0xff] %v1851
      %1881 = vst [vmem:[%s264 + $0x60] sm:$0xf] %v1789
      %1882 = vst [vmem:[%s264 + $0x68] sm:$0xf] %v1791
      %1883 = vst [vmem:[%s264 + $0x70] sm:$0xf] %v1856
      %v1884 = vand.u32 2147483647, %v1793
      %v1885 = vand.u32 2147483647, %v1795
      %v1886 = vand.u32 2147483647, %v1859
      %v1887 = vand.u32 2147483647, %v1799
      %v1888 = vand.u32 2147483647, %v1801
      %v1889 = vand.u32 2147483647, %v1864
      %v1890 = vsub.f32 0.0, %v1884
      %v1891 = vsub.f32 0.0, %v1885
      %v1892 = vsub.f32 0.0, %v1886
      %v1893 = vsub.f32 0.0, %v1887
      %v1894 = vsub.f32 0.0, %v1888
      %v1895 = vsub.f32 0.0, %v1889
      %v1896 = vmul.f32 %v1890, 1.442695
      %v1897 = vpow.pop %v1896
      %v1898 = vmul.f32 %v1891, 1.442695
      %v1899 = vpow.pop %v1898
      %v1900 = vmul.f32 %v1892, 1.442695
      %v1901 = vpow.pop %v1900
      %v1902 = vmul.f32 %v1893, 1.442695
      %v1903 = vpow.pop %v1902
      %v1904 = vmul.f32 %v1894, 1.442695
      %v1905 = vpow.pop %v1904
      %v1906 = vmul.f32 %v1895, 1.442695
      %v1907 = vpow.pop %v1906
      %v1908 = vadd.f32 %v1897, 1.0
      %v1909 = vadd.f32 %v1899, 1.0
      %v1910 = vadd.f32 %v1901, 1.0
      %v1911 = vadd.f32 %v1903, 1.0
      %v1912 = vadd.f32 %v1905, 1.0
      %v1913 = vadd.f32 %v1907, 1.0
      %v1914 = vrcp.pop %v1908
      %v1915 = vmul.f32 1.0, %v1914
      %v1916 = vrcp.pop %v1909
      %v1917 = vmul.f32 1.0, %v1916
      %v1918 = vrcp.pop %v1910
      %v1919 = vmul.f32 1.0, %v1918
      %v1920 = vrcp.pop %v1911
      %v1921 = vmul.f32 1.0, %v1920
      %v1922 = vrcp.pop %v1912
      %v1923 = vmul.f32 1.0, %v1922
      %v1924 = vrcp.pop %v1913
      %v1925 = vmul.f32 1.0, %v1924
      %vm1926 = vcmp.ge.f32.partialorder %v1793, 0.0
      %vm1927 = vcmp.ge.f32.partialorder %v1795, 0.0
      %vm1928 = vcmp.ge.f32.partialorder %v1859, 0.0
      %vm1929 = vcmp.ge.f32.partialorder %v1799, 0.0
      %vm1930 = vcmp.ge.f32.partialorder %v1801, 0.0
      %vm1931 = vcmp.ge.f32.partialorder %v1864, 0.0
      %v1932 = vsub.f32 1.0, %v1915
      %v1933 = vsub.f32 1.0, %v1917
      %v1934 = vsub.f32 1.0, %v1919
      %v1935 = vsub.f32 1.0, %v1921
      %v1936 = vsub.f32 1.0, %v1923
      %v1937 = vsub.f32 1.0, %v1925
      %v1938 = vsel %vm1926, %v1915, %v1932
      %v1939 = vsel %vm1927, %v1917, %v1933
      %v1940 = vsel %vm1928, %v1919, %v1934
      %v1941 = vsel %vm1929, %v1921, %v1935
      %v1942 = vsel %vm1930, %v1923, %v1936
      %v1943 = vsel %vm1931, %v1925, %v1937
      %1944 = vst [vmem:[%s259] sm:$0xff] %v1938
      %1945 = vst [vmem:[%s259 + $0x8] sm:$0xff] %v1939
      %1946 = vst [vmem:[%s259 + $0x10] sm:$0xff] %v1940
      %1947 = vst [vmem:[%s259 + $0x18] sm:$0x1] %v1941
      %1948 = vst [vmem:[%s259 + $0x20] sm:$0x1] %v1942
      %1949 = vst [vmem:[%s259 + $0x28] sm:$0x1] %v1943
      %v1950 = vsub.f32 1.0, %v1938
      %v1951 = vsub.f32 1.0, %v1939
      %v1952 = vsub.f32 1.0, %v1940
      %v1953 = vsub.f32 1.0, %v1941
      %v1954 = vsub.f32 1.0, %v1942
      %v1955 = vsub.f32 1.0, %v1943
      %vm1962 = vcmask 1040384
      %v1963 = vrot.slane %v1950, 7
      %v1964 = vrot.slane %v1951, 7
      %v1965 = vrot.slane %v1952, 7
      %v1966 = vrot.slane %v1953, 7
      %v1967 = vsel %vm1962, %v1963, %v1966
      %v1968 = vrot.slane %v1954, 7
      %v1969 = vsel %vm1962, %v1964, %v1968
      %v1970 = vrot.slane %v1955, 7
      %v1971 = vsel %vm1962, %v1965, %v1970
      %1978 = vst [vmem:[%s259 + $0x18] sm:$0xfe] %v1963
      %1979 = vst [vmem:[%s259 + $0x20] sm:$0xfe] %v1964
      %1980 = vst [vmem:[%s259 + $0x28] sm:$0xfe] %v1965
      %1981 = vst [vmem:[%s259 + $0x30] sm:$0x3] %v1967
      %1982 = vst [vmem:[%s259 + $0x38] sm:$0x3] %v1969
      %1983 = vst [vmem:[%s259 + $0x40] sm:$0x3] %v1971
      %p1984 = scmp.lt.s32.totalorder %s18, 1
      %s1985 = scalar_select %p1984, %s18, 1
      %s1986 = smul.addr %s1985, 9
      %s1987 = smul.addr %s1986, 8
      %s1988 = scalar_lea.vmem %s5, %s1987
      %p1989 = scmp.lt.s32.totalorder %s18, 1
      %s1990 = scalar_select %p1989, %s18, 1
      %s1991 = smul.addr %s1990, 15
      %s1992 = smul.addr %s1991, 8
      %s1993 = scalar_lea.vmem %s6, %s1992
      // Predicated region
      $region41: #{tpu_custom_call.1} parent=39 // pred_check
        %p1994 = pneg %p146
      $region42: #{tpu_custom_call.1} parent=39 // pred_check_branch
        %1996 = sbr.rel (%p1994) target = $region44
      $region43: #{tpu_custom_call.1} parent=39 // pred_region
        _
      $region44: #{tpu_custom_call.1} parent=39 // pred_fallthru
        _
      // Predicated region
      $region45: #{tpu_custom_call.1} parent=39 // pred_check
        %p1997 = pneg %p172
      $region46: #{tpu_custom_call.1} parent=39 // pred_check_branch
        %1999 = sbr.rel (%p1997) target = $region48
      $region47: #{tpu_custom_call.1} parent=39 // pred_region
        _
      $region48: #{tpu_custom_call.1} parent=39 // pred_fallthru
        _
    $region40: #{tpu_custom_call.1} parent=5 // pred_fallthru
      _
    %p2000 = scmp.le.s32.totalorder 2, %s13
    // Predicated region
    $region49: #{tpu_custom_call.1} parent=5 // pred_check
      %p2001 = pneg %p2000
    $region50: #{tpu_custom_call.1} parent=5 // pred_check_branch
      %2003 = sbr.rel (%p2001) target = $region52
    $region51: #{tpu_custom_call.1} parent=5 // pred_region
      %s2004 = ssub.s32 %s13, 2
      // Predicated region
      $region53: #{tpu_custom_call.1} parent=51 // pred_check
        %p2005 = pneg %p152
      $region54: #{tpu_custom_call.1} parent=51 // pred_check_branch
        %2007 = sbr.rel (%p2005) target = $region56
      $region55: #{tpu_custom_call.1} parent=51 // pred_region
        %p2008 = scmp.lt.s32.totalorder %s19, 1
        %s2009 = scalar_select %p2008, %s19, 1
        %s2010 = smul.addr %s2009, 9
        %s2011 = smul.addr %s2010, 8
        %s2012 = scalar_lea.vmem %s5, %s2011
      $region56: #{tpu_custom_call.1} parent=51 // pred_fallthru
        _
      // Predicated region
      $region57: #{tpu_custom_call.1} parent=51 // pred_check
        %p2013 = pneg %p178
      $region58: #{tpu_custom_call.1} parent=51 // pred_check_branch
        %2015 = sbr.rel (%p2013) target = $region60
      $region59: #{tpu_custom_call.1} parent=51 // pred_region
        %p2016 = scmp.lt.s32.totalorder %s19, 1
        %s2017 = scalar_select %p2016, %s19, 1
        %s2018 = smul.addr %s2017, 15
        %s2019 = smul.addr %s2018, 8
        %s2020 = scalar_lea.vmem %s6, %s2019
      $region60: #{tpu_custom_call.1} parent=51 // pred_fallthru
        _
    $region52: #{tpu_custom_call.1} parent=5 // pred_fallthru
      _
  $region6: #{tpu_custom_call.1} parent=0 // loop_footer
    %s17 = sadd.s32 1, %s13
  $region7: #{tpu_custom_call.1} parent=0 // loop_footer_branch
    %12 = sbr.rel target = $region3
  $region8: #{tpu_custom_call.1} parent=0 // loop_exit
    _

</llo_original>
